<compile_context>
chip_gen: v6e
topology: v6e:2x2x1
jax: 0.10.0
libtpu: 0.0.40
codegen_flags: <defaults>
</compile_context>

<pallas_src>
import functools

import jax
import jax.numpy as jnp
from jax.experimental import pallas as pl
from jax.experimental.pallas import tpu as pltpu

_LANE = 128


def _round_up(x, m):
    return ((x + m - 1) // m) * m


# ----------------------------------------------------------------------------
# Generation-aware VMEM budget (v7x only has 64 MiB physical VMEM per core)
# ----------------------------------------------------------------------------
_VMEM_LIMIT_CACHE = None


def _vmem_limit_bytes():
    global _VMEM_LIMIT_CACHE
    if _VMEM_LIMIT_CACHE is None:
        cap = None
        try:
            info = pltpu.get_tpu_info()
            for name in ("vmem_capacity_bytes", "vmem_size_bytes", "vmem_bytes"):
                cap = getattr(info, name, None)
                if cap:
                    break
        except Exception:
            cap = None
        if not cap:
            cap = 64 * 1024 * 1024                  # conservative default
        cap = int(cap)
        if cap >= 100 * 1024 * 1024:                # v5e / v6e: 128 MiB physical
            _VMEM_LIMIT_CACHE = 64 * 1024 * 1024
        else:                                       # v7x: 64 MiB physical
            _VMEM_LIMIT_CACHE = min(48 * 1024 * 1024, cap * 3 // 4)
    return _VMEM_LIMIT_CACHE


def _mosaic_params(**kw):
    return pltpu.CompilerParams(vmem_limit_bytes=_vmem_limit_bytes(), **kw)


def _pick_tile_p(p, k_total, n, itemsize):
    """Pixel (lane) tile: multiple of 128, VMEM-budgeted, used with a cdiv grid.

    Sized so 2 (double buffer) x (K_total + N) x tile x itemsize stays inside
    roughly half the generation-aware scoped-VMEM budget; prefers >= 2 grid
    steps so both v7x TensorCores (megacore) get work; capped at 2048 lanes.
    """
    if p <= _LANE:
        return p                                    # single full-extent block
    budget = _vmem_limit_bytes() // 2
    cap = budget // (2 * max(1, (k_total + n)) * itemsize)
    cap = max(_LANE, (cap // _LANE) * _LANE)
    cap = min(cap, 2048)
    half = _round_up((p + 1) // 2, _LANE)
    return max(_LANE, min(cap, half))


# ----------------------------------------------------------------------------
# Pallas kernels
# ----------------------------------------------------------------------------
def _mm_bias_kernel(w_ref, x_ref, b_ref, o_ref):
    """o[N, Pt] = w[N, K] @ x[K, Pt] + b[N, 1]   (f32 accumulate)."""
    o_ref[...] = (
        jnp.dot(w_ref[...], x_ref[...], preferred_element_type=jnp.float32)
        + b_ref[...]
    )


def _mm_bias2io_kernel(w_ref, xr_ref, xi_ref, b_ref, or_ref, oi_ref):
    """Shared-weight matmul on two streams (real / imag) in one launch."""
    w = w_ref[...]
    b = b_ref[...]
    or_ref[...] = jnp.dot(w, xr_ref[...], preferred_element_type=jnp.float32) + b
    oi_ref[...] = jnp.dot(w, xi_ref[...], preferred_element_type=jnp.float32) + b


def _mm2_bias_kernel(w1_ref, x1_ref, w2_ref, x2_ref, b_ref, o_ref):
    """o = w1 @ x1 + w2 @ x2 + b: 'concat channels then 1x1 conv' without the
    concatenated tensor ever being materialized in HBM."""
    o_ref[...] = (
        jnp.dot(w1_ref[...], x1_ref[...], preferred_element_type=jnp.float32)
        + jnp.dot(w2_ref[...], x2_ref[...], preferred_element_type=jnp.float32)
        + b_ref[...]
    )


def _conv3x3_kernel(x_ref, w_ref, o_ref, *, row_w, out_w):
    """Fused 3x3 / stride-1 conv on ONE zero-padded image (flattened pixels).

    x_ref: [Cin, in_w]   one image's zero-padded pixels, (y, x) row-major over
                         the (H+2, W+2) grid, zero tail up to a 128 multiple.
    w_ref: [Cout, 9*Cin] tap-stacked weights, column order (dy, dx, ci).
    o_ref: [Cout, out_w] output over the padded grid (border rows/cols and the
                         zero tail are garbage; the caller slices them away).

    The nine taps are shifted views of the VMEM-resident input, stacked along
    channels so a SINGLE MXU contraction with K = 9*Cin replaces nine K = Cin
    matmuls.  Because each grid step owns one image, taps can never leak
    across batch-image boundaries.
    # TODO(synk): for large H*W, tile over row blocks with a 1-row halo
    # (pl.BoundedSlice or manual DMA) and turn the +-1 horizontal taps into
    # pltpu.roll lane rotations to bound VMEM to a row tile instead of a map.
    """
    xv = x_ref[...]
    taps = []
    for dy in range(3):
        for dx in range(3):
            off = dy * row_w + dx
            taps.append(xv[:, off:off + out_w])
    patches = jnp.concatenate(taps, axis=0)            # [9*Cin, out_w] in VMEM
    o_ref[...] = jnp.dot(w_ref[...], patches, preferred_element_type=jnp.float32)


# ----------------------------------------------------------------------------
# Pallas wrappers (channel-first "CP" layout: [C, B, H, W] / [C, pixels])
# ----------------------------------------------------------------------------
def matmul_cp(w, x, b=None, *, compute_dtype=jnp.float32):
    """o[N, P] = w[N, K] @ x[K, P] (+ b), pixels on the 128-lane axis."""
    n, k = w.shape
    k2, p = x.shape
    assert k == k2, (w.shape, x.shape)
    w = w.astype(compute_dtype)      # bf16 here halves HBM->VMEM DMA bytes
    x = x.astype(compute_dtype)
    if b is None:
        b = jnp.zeros((n,), jnp.float32)
    b = b.astype(jnp.float32).reshape(n, 1)

    itemsize = jnp.dtype(compute_dtype).itemsize
    tile_p = _pick_tile_p(p, k, n, itemsize)
    grid = (pl.cdiv(p, tile_p),)
    cost = pl.CostEstimate(
        flops=2 * n * k * p, transcendentals=0,
        bytes_accessed=itemsize * (n * k + k * p) + 4 * (n * p + n))
    # NOTE: the weight / bias index maps are grid-invariant so they are DMA'd
    # once.  TODO(synk): pipeline_mode=pl.Buffered(1) on them would also drop
    # the duplicate VMEM buffer once K grows.
    # TODO(synk): if K grows past a comfortable resident block, add a K
    # reduction grid axis ("arbitrary") with a f32 VMEM accumulator.
    # TODO(synk): when N < 8 the output vreg uses only part of the 8 sublanes;
    # padding Cout to 8 (and carrying it downstream) would halve store bytes.
    return pl.pallas_call(
        _mm_bias_kernel,
        out_shape=jax.ShapeDtypeStruct((n, p), jnp.float32),
        grid=grid,
        in_specs=[
            pl.BlockSpec((n, k), lambda i: (0, 0)),       # weights stay resident
            pl.BlockSpec((k, tile_p), lambda i: (0, i)),  # activations: lane tiles
            pl.BlockSpec((n, 1), lambda i: (0, 0)),
        ],
        out_specs=pl.BlockSpec((n, tile_p), lambda i: (0, i)),
        compiler_params=_mosaic_params(dimension_semantics=("parallel",)),
        cost_estimate=cost,
    )(w, x, b)


def matmul_shared2_cp(w, x1, x2, b, *, compute_dtype=jnp.float32):
    """(w@x1+b, w@x2+b) in ONE pallas_call: weight loaded once per tile, no
    real/imag concatenation round trip through HBM."""
    n, k = w.shape
    _, p = x1.shape
    assert x2.shape == x1.shape
    w = w.astype(compute_dtype)
    x1 = x1.astype(compute_dtype)
    x2 = x2.astype(compute_dtype)
    b = b.astype(jnp.float32).reshape(n, 1)
    itemsize = jnp.dtype(compute_dtype).itemsize
    tile_p = _pick_tile_p(p, 2 * k, 2 * n, itemsize)
    grid = (pl.cdiv(p, tile_p),)
    cost = pl.CostEstimate(
        flops=4 * n * k * p, transcendentals=0,
        bytes_accessed=itemsize * (n * k + 2 * k * p) + 4 * (2 * n * p + n))
    return pl.pallas_call(
        _mm_bias2io_kernel,
        out_shape=(jax.ShapeDtypeStruct((n, p), jnp.float32),
                   jax.ShapeDtypeStruct((n, p), jnp.float32)),
        grid=grid,
        in_specs=[
            pl.BlockSpec((n, k), lambda i: (0, 0)),
            pl.BlockSpec((k, tile_p), lambda i: (0, i)),
            pl.BlockSpec((k, tile_p), lambda i: (0, i)),
            pl.BlockSpec((n, 1), lambda i: (0, 0)),
        ],
        out_specs=(pl.BlockSpec((n, tile_p), lambda i: (0, i)),
                   pl.BlockSpec((n, tile_p), lambda i: (0, i))),
        compiler_params=_mosaic_params(dimension_semantics=("parallel",)),
        cost_estimate=cost,
    )(w, x1, x2, b)


def matmul2_cp(w1, x1, w2, x2, b=None, *, compute_dtype=jnp.float32):
    """o = w1 @ x1 + w2 @ x2 (+ b): fused concat+1x1-conv without the concat."""
    n, k1 = w1.shape
    n2, k2 = w2.shape
    assert n == n2
    _, p = x1.shape
    assert x2.shape[1] == p
    w1 = w1.astype(compute_dtype)
    x1 = x1.astype(compute_dtype)
    w2 = w2.astype(compute_dtype)
    x2 = x2.astype(compute_dtype)
    if b is None:
        b = jnp.zeros((n,), jnp.float32)
    b = b.astype(jnp.float32).reshape(n, 1)
    itemsize = jnp.dtype(compute_dtype).itemsize
    tile_p = _pick_tile_p(p, k1 + k2, n, itemsize)
    grid = (pl.cdiv(p, tile_p),)
    cost = pl.CostEstimate(
        flops=2 * n * (k1 + k2) * p, transcendentals=0,
        bytes_accessed=itemsize * (n * (k1 + k2) + (k1 + k2) * p) + 4 * (n * p + n))
    return pl.pallas_call(
        _mm2_bias_kernel,
        out_shape=jax.ShapeDtypeStruct((n, p), jnp.float32),
        grid=grid,
        in_specs=[
            pl.BlockSpec((n, k1), lambda i: (0, 0)),
            pl.BlockSpec((k1, tile_p), lambda i: (0, i)),
            pl.BlockSpec((n, k2), lambda i: (0, 0)),
            pl.BlockSpec((k2, tile_p), lambda i: (0, i)),
            pl.BlockSpec((n, 1), lambda i: (0, 0)),
        ],
        out_specs=pl.BlockSpec((n, tile_p), lambda i: (0, i)),
        compiler_params=_mosaic_params(dimension_semantics=("parallel",)),
        cost_estimate=cost,
    )(w1, x1, w2, x2, b)


def _conv3x3_fused_cp(x, w, *, compute_dtype=jnp.float32):
    """3x3 / stride 1 / pad 1 / no-bias conv, gridded one image per step."""
    cin, b, h, wd = x.shape
    cout = w.shape[0]
    hp, wp = h + 2, wd + 2
    npix = hp * wp
    out_w = _round_up(npix, _LANE)                       # lane-dense output block
    in_w = _round_up(out_w + 2 * wp + 2, _LANE)          # room for the max tap
    # zero-pad spatially, flatten each image, zero-tail to the block widths
    xp = jnp.pad(x, ((0, 0), (0, 0), (1, 1), (1, 1))).reshape(cin, b, npix)
    xp = jnp.pad(xp, ((0, 0), (0, 0), (0, in_w - npix)))
    xp = xp.reshape(cin, b * in_w).astype(compute_dtype)
    # weight: [Cout, Cin, 3, 3] -> [Cout, (dy, dx, ci)] to match the tap stack
    wt = jnp.transpose(w, (0, 2, 3, 1)).reshape(cout, 9 * cin).astype(compute_dtype)
    itemsize = jnp.dtype(compute_dtype).itemsize
    cost = pl.CostEstimate(
        flops=2 * 9 * cout * cin * b * out_w, transcendentals=0,
        bytes_accessed=itemsize * (cin * b * in_w + 9 * cout * cin)
        + 4 * cout * b * out_w)
    out = pl.pallas_call(
        functools.partial(_conv3x3_kernel, row_w=wp, out_w=out_w),
        out_shape=jax.ShapeDtypeStruct((cout, b * out_w), jnp.float32),
        grid=(b,),
        in_specs=[
            pl.BlockSpec((cin, in_w), lambda i: (0, i)),
            pl.BlockSpec((cout, 9 * cin), lambda i: (0, 0)),
        ],
        out_specs=pl.BlockSpec((cout, out_w), lambda i: (0, i)),
        compiler_params=_mosaic_params(dimension_semantics=("parallel",)),
        cost_estimate=cost,
    )(xp, wt)
    out = out.reshape(cout, b, out_w)[:, :, :npix].reshape(cout, b, hp, wp)
    return out[:, :, :h, :wd]


def _conv_tapstack_cp(x, w, *, stride, pad, compute_dtype=jnp.float32):
    """Generic KxK conv (no bias) via JAX-side tap stacking (no NCHW<->NHWC
    transposes), feeding the lane-dense Pallas matmul.  Used for 4x4 stride-2.

    # TODO(synk): still materializes a kh*kw-tapped operand in HBM (16x the
    # already-downsampled input); fuse like the 3x3 path if dim/H/W grow.
    """
    cin, b, h, wd = x.shape
    cout, _, kh, kw = w.shape
    xp = jnp.pad(x, ((0, 0), (0, 0), (pad, pad), (pad, pad)))
    ho = (h + 2 * pad - kh) // stride + 1
    wo = (wd + 2 * pad - kw) // stride + 1
    taps = []
    for i in range(kh):
        for j in range(kw):
            taps.append(xp[:, :, i:i + stride * (ho - 1) + 1:stride,
                               j:j + stride * (wo - 1) + 1:stride])
    patches = jnp.stack(taps, axis=1).reshape(cin * kh * kw, b * ho * wo)
    out = matmul_cp(w.reshape(cout, cin * kh * kw), patches,
                    compute_dtype=compute_dtype)
    return out.reshape(cout, b, ho, wo)


_USE_FUSED_3X3 = None


def _fused_conv3x3_supported():
    """Probe once (eagerly) that the fused kernel lowers on this TPU generation;
    otherwise fall back LOUDLY to the tap-stacked path."""
    global _USE_FUSED_3X3
    if _USE_FUSED_3X3 is None:
        try:
            with jax.ensure_compile_time_eval():
                px = jnp.zeros((2, 1, 8, 8), jnp.float32)
                pw = jnp.zeros((2, 2, 3, 3), jnp.float32)
                jax.block_until_ready(_conv3x3_fused_cp(px, pw))
            _USE_FUSED_3X3 = True
        except Exception as e:  # pragma: no cover - conservative fallback
            print("WARNING: fused 3x3 Pallas conv unavailable "
                  f"({type(e).__name__}: {e}); using tap-stacked fallback.")
            _USE_FUSED_3X3 = False
    return _USE_FUSED_3X3


def conv3x3_cp(x, w, *, compute_dtype=jnp.float32):
    if _fused_conv3x3_supported():
        return _conv3x3_fused_cp(x, w, compute_dtype=compute_dtype)
    return _conv_tapstack_cp(x, w, stride=1, pad=1, compute_dtype=compute_dtype)


def conv_transpose2x2_s2_cp(x, w, b, *, compute_dtype=jnp.float32):
    """ConvTranspose2d(stride=2, kernel=2, pad=0).  w: [Cin, Cout, 2, 2]."""
    cin, bb, h, wd = x.shape
    cout = w.shape[1]
    wm = jnp.transpose(w, (1, 2, 3, 0)).reshape(cout * 4, cin)  # rows = (co,dy,dx)
    bm = jnp.repeat(b, 4)
    out = matmul_cp(wm, x.reshape(cin, bb * h * wd), bm,
                    compute_dtype=compute_dtype)                # [Cout*4, P]
    # TODO(synk): this pixel shuffle is an XLA transpose (one HBM round trip of
    # the upsampled map); scattering the interleaved layout straight from the
    # kernel's out_specs would make it free.
    out = (out.reshape(cout, 2, 2, bb, h, wd)
              .transpose(0, 3, 4, 1, 5, 2)
              .reshape(cout, bb, 2 * h, 2 * wd))
    return out


def fuse_concat_conv1x1_cp(x_a, x_b, w, b=None, *, compute_dtype=jnp.float32):
    """conv1x1(concat([x_a, x_b], channels), w) without the HBM concat."""
    ca = x_a.shape[0]
    cout = w.shape[0]
    wm = w.reshape(cout, -1)
    sh = x_a.shape[1:]
    assert x_b.shape[1:] == sh
    out = matmul2_cp(wm[:, :ca], x_a.reshape(ca, -1),
                     wm[:, ca:], x_b.reshape(x_b.shape[0], -1),
                     b, compute_dtype=compute_dtype)
    return out.reshape(cout, *sh)


def fftdeblur_cp(x, w1, b1, w2, b2, *, compute_dtype=jnp.float32):
    """FFTDeblur: rfft2 -> fused 1x1 channel mix on real & imag -> irfft2.

    The two chained bias-carrying 1x1 convs are fused algebraically
    (W = W2@W1, b = W2@b1 + b2; exact up to f32 rounding, no nonlinearity in
    between) and real/imag go through ONE pallas_call as two tiled
    inputs/outputs (no concat round trip through HBM).
    """
    c, bb, h, wd = x.shape
    # TODO(synk): rfft2/irfft2 have no Pallas TPU primitive; they stay in
    # jnp.fft.  Only the per-frequency channel mixing runs in Pallas.
    y = jnp.fft.rfft2(x)                                   # [C, B, H, Wf] complex64
    wf_len = y.shape[-1]
    p = bb * h * wf_len
    w1m = w1.reshape(c, c)
    w2m = w2.reshape(w2.shape[0], c)
    wfused = w2m @ w1m
    bfused = w2m @ b1 + b2
    yr, yi = matmul_shared2_cp(wfused, y.real.reshape(c, p), y.imag.reshape(c, p),
                               bfused, compute_dtype=compute_dtype)
    cout = wfused.shape[0]
    yr = yr.reshape(cout, bb, h, wf_len)
    yi = yi.reshape(cout, bb, h, wf_len)
    return jnp.fft.irfft2(jax.lax.complex(yr, yi), s=(h, wd))


# ----------------------------------------------------------------------------
# FFM forward (NCHW at the module boundary)
# ----------------------------------------------------------------------------
def ffm_forward(x, p, *, compute_dtype=jnp.float32):
    xc = jnp.transpose(x, (1, 0, 2, 3))                    # NCHW -> [C, B, H, W]
    fea = conv3x3_cp(xc, p["embedding_w"], compute_dtype=compute_dtype)
    en1 = fftdeblur_cp(fea, *p["fca1"], compute_dtype=compute_dtype)
    en2 = _conv_tapstack_cp(en1, p["downsize1_w"], stride=2, pad=1,
                            compute_dtype=compute_dtype)
    en2 = fftdeblur_cp(en2, *p["fca2"], compute_dtype=compute_dtype)
    en3 = _conv_tapstack_cp(en2, p["downsize2_w"], stride=2, pad=1,
                            compute_dtype=compute_dtype)
    neck = fftdeblur_cp(en3, *p["fca3"], compute_dtype=compute_dtype)

    dn2_temp = conv_transpose2x2_s2_cp(neck, p["up2_w"], p["up2_b"],
                                       compute_dtype=compute_dtype)
    # concat([en2, up]) + 1x1 conv  ==  W_en @ en2 + W_up @ up   (one kernel)
    dn2 = fuse_concat_conv1x1_cp(en2, dn2_temp, p["upconv2_w"],
                                 compute_dtype=compute_dtype)
    dn1_temp = conv_transpose2x2_s2_cp(dn2, p["up1_w"], p["up1_b"],
                                       compute_dtype=compute_dtype)
    dn1 = fuse_concat_conv1x1_cp(en1, dn1_temp, p["upconv1_w"],
                                 compute_dtype=compute_dtype)
    out = conv3x3_cp(dn1, p["mapping_w"], compute_dtype=compute_dtype) + xc
    return jnp.transpose(out, (1, 0, 2, 3))                # back to NCHW


# ----------------------------------------------------------------------------
# Deterministic parameter construction (synthetic, shapes as in __init__)
# ----------------------------------------------------------------------------
def init_params(key, in_dim, dim):
    keys = iter(jax.random.split(key, 32))

    def w(shape, scale=0.05):
        return scale * jax.random.normal(next(keys), shape, dtype=jnp.float32)

    def fca(c):
        return (w((c, c, 1, 1)), w((c,)), w((c, c, 1, 1)), w((c,)))

    d = dim
    return {
        "embedding_w": w((d, in_dim, 3, 3)),
        "fca1": fca(d),
        "downsize1_w": w((2 * d, d, 4, 4)),
        "fca2": fca(2 * d),
        "downsize2_w": w((4 * d, 2 * d, 4, 4)),
        "fca3": fca(4 * d),
        "up2_w": w((4 * d, 2 * d, 2, 2)),
        "up2_b": w((2 * d,)),
        "upconv2_w": w((2 * d, 4 * d, 1, 1)),
        "up1_w": w((2 * d, d, 2, 2)),
        "up1_b": w((d,)),
        "upconv1_w": w((d, 2 * d, 1, 1)),
        "mapping_w": w((d, d, 3, 3)),
    }


if __name__ == "__main__":
    B, C, H, W = 2, 4, 16, 16          # in_dim = out_dim = dim = 4
    key = jax.random.PRNGKey(0)
    kx, kp = jax.random.split(key)
    x = jax.random.normal(kx, (B, C, H, W), dtype=jnp.float32)
    params = init_params(kp, in_dim=C, dim=C)

    fwd = jax.jit(ffm_forward)
    out = jax.block_until_ready(fwd(x, params))

    assert out.shape == (B, C, H, W), out.shape
    assert out.dtype == jnp.float32
    assert bool(jnp.all(jnp.isfinite(out)))
    print("KERNEL_OK")
</pallas_src>

<mosaic_0001>
module attributes {stable_mosaic.version = 11 : i64} {
  func.func @_mm_bias_kernel(%arg0: i32, %arg1: memref<4x36xf32, #tpu.memory_space<vmem>>, %arg2: memref<36x256xf32, #tpu.memory_space<vmem>>, %arg3: memref<4x1xf32, #tpu.memory_space<vmem>>, %arg4: memref<4x256xf32, #tpu.memory_space<vmem>>) attributes {dimension_semantics = [#tpu.dimension_semantics<parallel>], iteration_bounds = array<i64: 2>, scalar_prefetch = 0 : i64, scratch_operands = 0 : i64, tpu.core_type = #tpu.core_type<tc>, window_params = [{pipeline_mode = #tpu.pipeline_mode<synchronous>, transform_indices = @transform_0, window_bounds = array<i64: 4, 36>}, {transform_indices = @transform_1, window_bounds = array<i64: 36, 256>}, {pipeline_mode = #tpu.pipeline_mode<synchronous>, transform_indices = @transform_2, window_bounds = array<i64: 4, 1>}, {transform_indices = @transform_3, window_bounds = array<i64: 4, 256>}]} {
    %c0 = arith.constant 0 : index
    %c0_0 = arith.constant 0 : index
    %0 = vector.load %arg1[%c0, %c0_0] : memref<4x36xf32, #tpu.memory_space<vmem>>, vector<4x36xf32>
    %c0_1 = arith.constant 0 : index
    %c0_2 = arith.constant 0 : index
    %1 = vector.load %arg2[%c0_1, %c0_2] : memref<36x256xf32, #tpu.memory_space<vmem>>, vector<36x256xf32>
    %cst = arith.constant dense<0.000000e+00> : vector<4x256xf32>
    %2 = tpu.matmul %0, %1, %cst {dimension_numbers = #tpu.dot_dimension_numbers<[1], [0], [0], [1], [0, 0, 1, 1], [], []>} : vector<4x36xf32>, vector<36x256xf32>, vector<4x256xf32> -> vector<4x256xf32>
    %c0_3 = arith.constant 0 : index
    %c0_4 = arith.constant 0 : index
    %3 = vector.load %arg3[%c0_3, %c0_4] : memref<4x1xf32, #tpu.memory_space<vmem>>, vector<4x1xf32>
    %4 = vector.broadcast %3 : vector<4x1xf32> to vector<4x256xf32>
    %5 = arith.addf %2, %4 : vector<4x256xf32>
    %c0_5 = arith.constant 0 : index
    %c0_6 = arith.constant 0 : index
    %6 = vector.load %arg4[%c0_5, %c0_6] : memref<4x256xf32, #tpu.memory_space<vmem>>, vector<4x256xf32>
    tpu.vector_store %arg4[%c0_5, %c0_6], %5 {strides = array<i32>} : memref<4x256xf32, #tpu.memory_space<vmem>>, vector<4x256xf32>,
    return
  }
  func.func @transform_0(%arg0: i32) -> (i32, i32) {
    %c0_i32 = arith.constant 0 : i32
    %c0_i32_0 = arith.constant 0 : i32
    %c0_i32_1 = arith.constant 0 : i32
    return %c0_i32, %c0_i32_0 : i32, i32
  }
  func.func @transform_1(%arg0: i32) -> (i32, i32) {
    %c0_i32 = arith.constant 0 : i32
    %c0_i32_0 = arith.constant 0 : i32
    return %c0_i32, %arg0 : i32, i32
  }
  func.func @transform_2(%arg0: i32) -> (i32, i32) {
    %c0_i32 = arith.constant 0 : i32
    %c0_i32_0 = arith.constant 0 : i32
    %c0_i32_1 = arith.constant 0 : i32
    return %c0_i32, %c0_i32_0 : i32, i32
  }
  func.func @transform_3(%arg0: i32) -> (i32, i32) {
    %c0_i32 = arith.constant 0 : i32
    %c0_i32_0 = arith.constant 0 : i32
    return %c0_i32, %arg0 : i32, i32
  }
}

module attributes {stable_mosaic.version = 11 : i64} {
  func.func @_mm_bias2io_kernel(%arg0: i32, %arg1: memref<4x4xf32, #tpu.memory_space<vmem>>, %arg2: memref<4x256xf32, #tpu.memory_space<vmem>>, %arg3: memref<4x256xf32, #tpu.memory_space<vmem>>, %arg4: memref<4x1xf32, #tpu.memory_space<vmem>>, %arg5: memref<4x256xf32, #tpu.memory_space<vmem>>, %arg6: memref<4x256xf32, #tpu.memory_space<vmem>>) attributes {dimension_semantics = [#tpu.dimension_semantics<parallel>], iteration_bounds = array<i64: 2>, scalar_prefetch = 0 : i64, scratch_operands = 0 : i64, tpu.core_type = #tpu.core_type<tc>, window_params = [{pipeline_mode = #tpu.pipeline_mode<synchronous>, transform_indices = @transform_0, window_bounds = array<i64: 4, 4>}, {transform_indices = @transform_1, window_bounds = array<i64: 4, 256>}, {transform_indices = @transform_2, window_bounds = array<i64: 4, 256>}, {pipeline_mode = #tpu.pipeline_mode<synchronous>, transform_indices = @transform_3, window_bounds = array<i64: 4, 1>}, {transform_indices = @transform_4, window_bounds = array<i64: 4, 256>}, {transform_indices = @transform_5, window_bounds = array<i64: 4, 256>}]} {
    %c0 = arith.constant 0 : index
    %c0_0 = arith.constant 0 : index
    %0 = vector.load %arg1[%c0, %c0_0] : memref<4x4xf32, #tpu.memory_space<vmem>>, vector<4x4xf32>
    %c0_1 = arith.constant 0 : index
    %c0_2 = arith.constant 0 : index
    %1 = vector.load %arg4[%c0_1, %c0_2] : memref<4x1xf32, #tpu.memory_space<vmem>>, vector<4x1xf32>
    %c0_3 = arith.constant 0 : index
    %c0_4 = arith.constant 0 : index
    %2 = vector.load %arg2[%c0_3, %c0_4] : memref<4x256xf32, #tpu.memory_space<vmem>>, vector<4x256xf32>
    %cst = arith.constant dense<0.000000e+00> : vector<4x256xf32>
    %3 = tpu.matmul %0, %2, %cst {dimension_numbers = #tpu.dot_dimension_numbers<[1], [0], [0], [1], [0, 0, 1, 1], [], []>} : vector<4x4xf32>, vector<4x256xf32>, vector<4x256xf32> -> vector<4x256xf32>
    %4 = vector.broadcast %1 : vector<4x1xf32> to vector<4x256xf32>
    %5 = arith.addf %3, %4 : vector<4x256xf32>
    %c0_5 = arith.constant 0 : index
    %c0_6 = arith.constant 0 : index
    %6 = vector.load %arg5[%c0_5, %c0_6] : memref<4x256xf32, #tpu.memory_space<vmem>>, vector<4x256xf32>
    tpu.vector_store %arg5[%c0_5, %c0_6], %5 {strides = array<i32>} : memref<4x256xf32, #tpu.memory_space<vmem>>, vector<4x256xf32>,
    %c0_7 = arith.constant 0 : index
    %c0_8 = arith.constant 0 : index
    %7 = vector.load %arg3[%c0_7, %c0_8] : memref<4x256xf32, #tpu.memory_space<vmem>>, vector<4x256xf32>
    %cst_9 = arith.constant dense<0.000000e+00> : vector<4x256xf32>
    %8 = tpu.matmul %0, %7, %cst_9 {dimension_numbers = #tpu.dot_dimension_numbers<[1], [0], [0], [1], [0, 0, 1, 1], [], []>} : vector<4x4xf32>, vector<4x256xf32>, vector<4x256xf32> -> vector<4x256xf32>
    %9 = vector.broadcast %1 : vector<4x1xf32> to vector<4x256xf32>
    %10 = arith.addf %8, %9 : vector<4x256xf32>
    %c0_10 = arith.constant 0 : index
    %c0_11 = arith.constant 0 : index
    %11 = vector.load %arg6[%c0_10, %c0_11] : memref<4x256xf32, #tpu.memory_space<vmem>>, vector<4x256xf32>
    tpu.vector_store %arg6[%c0_10, %c0_11], %10 {strides = array<i32>} : memref<4x256xf32, #tpu.memory_space<vmem>>, vector<4x256xf32>,
    return
  }
  func.func @transform_0(%arg0: i32) -> (i32, i32) {
    %c0_i32 = arith.constant 0 : i32
    %c0_i32_0 = arith.constant 0 : i32
    %c0_i32_1 = arith.constant 0 : i32
    return %c0_i32, %c0_i32_0 : i32, i32
  }
  func.func @transform_1(%arg0: i32) -> (i32, i32) {
    %c0_i32 = arith.constant 0 : i32
    %c0_i32_0 = arith.constant 0 : i32
    return %c0_i32, %arg0 : i32, i32
  }
  func.func @transform_2(%arg0: i32) -> (i32, i32) {
    %c0_i32 = arith.constant 0 : i32
    %c0_i32_0 = arith.constant 0 : i32
    return %c0_i32, %arg0 : i32, i32
  }
  func.func @transform_3(%arg0: i32) -> (i32, i32) {
    %c0_i32 = arith.constant 0 : i32
    %c0_i32_0 = arith.constant 0 : i32
    %c0_i32_1 = arith.constant 0 : i32
    return %c0_i32, %c0_i32_0 : i32, i32
  }
  func.func @transform_4(%arg0: i32) -> (i32, i32) {
    %c0_i32 = arith.constant 0 : i32
    %c0_i32_0 = arith.constant 0 : i32
    return %c0_i32, %arg0 : i32, i32
  }
  func.func @transform_5(%arg0: i32) -> (i32, i32) {
    %c0_i32 = arith.constant 0 : i32
    %c0_i32_0 = arith.constant 0 : i32
    return %c0_i32, %arg0 : i32, i32
  }
}

module attributes {stable_mosaic.version = 11 : i64} {
  func.func @_mm_bias_kernel(%arg0: i32, %arg1: memref<8x64xf32, #tpu.memory_space<vmem>>, %arg2: memref<64x128xf32, #tpu.memory_space<vmem>>, %arg3: memref<8x1xf32, #tpu.memory_space<vmem>>, %arg4: memref<8x128xf32, #tpu.memory_space<vmem>>) attributes {dimension_semantics = [#tpu.dimension_semantics<parallel>], iteration_bounds = array<i64: 1>, scalar_prefetch = 0 : i64, scratch_operands = 0 : i64, tpu.core_type = #tpu.core_type<tc>, window_params = [{pipeline_mode = #tpu.pipeline_mode<synchronous>, transform_indices = @transform_0, window_bounds = array<i64: 8, 64>}, {transform_indices = @transform_1, window_bounds = array<i64: 64, 128>}, {pipeline_mode = #tpu.pipeline_mode<synchronous>, transform_indices = @transform_2, window_bounds = array<i64: 8, 1>}, {transform_indices = @transform_3, window_bounds = array<i64: 8, 128>}]} {
    %c0 = arith.constant 0 : index
    %c0_0 = arith.constant 0 : index
    %0 = vector.load %arg1[%c0, %c0_0] : memref<8x64xf32, #tpu.memory_space<vmem>>, vector<8x64xf32>
    %c0_1 = arith.constant 0 : index
    %c0_2 = arith.constant 0 : index
    %1 = vector.load %arg2[%c0_1, %c0_2] : memref<64x128xf32, #tpu.memory_space<vmem>>, vector<64x128xf32>
    %cst = arith.constant dense<0.000000e+00> : vector<8x128xf32>
    %2 = tpu.matmul %0, %1, %cst {dimension_numbers = #tpu.dot_dimension_numbers<[1], [0], [0], [1], [0, 0, 1, 1], [], []>} : vector<8x64xf32>, vector<64x128xf32>, vector<8x128xf32> -> vector<8x128xf32>
    %c0_3 = arith.constant 0 : index
    %c0_4 = arith.constant 0 : index
    %3 = vector.load %arg3[%c0_3, %c0_4] : memref<8x1xf32, #tpu.memory_space<vmem>>, vector<8x1xf32>
    %4 = vector.broadcast %3 : vector<8x1xf32> to vector<8x128xf32>
    %5 = arith.addf %2, %4 : vector<8x128xf32>
    %c0_5 = arith.constant 0 : index
    %c0_6 = arith.constant 0 : index
    %6 = vector.load %arg4[%c0_5, %c0_6] : memref<8x128xf32, #tpu.memory_space<vmem>>, vector<8x128xf32>
    tpu.vector_store %arg4[%c0_5, %c0_6], %5 {strides = array<i32>} : memref<8x128xf32, #tpu.memory_space<vmem>>, vector<8x128xf32>,
    return
  }
  func.func @transform_0(%arg0: i32) -> (i32, i32) {
    %c0_i32 = arith.constant 0 : i32
    %c0_i32_0 = arith.constant 0 : i32
    %c0_i32_1 = arith.constant 0 : i32
    return %c0_i32, %c0_i32_0 : i32, i32
  }
  func.func @transform_1(%arg0: i32) -> (i32, i32) {
    %c0_i32 = arith.constant 0 : i32
    %c0_i32_0 = arith.constant 0 : i32
    return %c0_i32, %arg0 : i32, i32
  }
  func.func @transform_2(%arg0: i32) -> (i32, i32) {
    %c0_i32 = arith.constant 0 : i32
    %c0_i32_0 = arith.constant 0 : i32
    %c0_i32_1 = arith.constant 0 : i32
    return %c0_i32, %c0_i32_0 : i32, i32
  }
  func.func @transform_3(%arg0: i32) -> (i32, i32) {
    %c0_i32 = arith.constant 0 : i32
    %c0_i32_0 = arith.constant 0 : i32
    return %c0_i32, %arg0 : i32, i32
  }
}

module attributes {stable_mosaic.version = 11 : i64} {
  func.func @_mm_bias2io_kernel(%arg0: i32, %arg1: memref<8x8xf32, #tpu.memory_space<vmem>>, %arg2: memref<8x80xf32, #tpu.memory_space<vmem>>, %arg3: memref<8x80xf32, #tpu.memory_space<vmem>>, %arg4: memref<8x1xf32, #tpu.memory_space<vmem>>, %arg5: memref<8x80xf32, #tpu.memory_space<vmem>>, %arg6: memref<8x80xf32, #tpu.memory_space<vmem>>) attributes {dimension_semantics = [#tpu.dimension_semantics<parallel>], iteration_bounds = array<i64: 1>, scalar_prefetch = 0 : i64, scratch_operands = 0 : i64, tpu.core_type = #tpu.core_type<tc>, window_params = [{pipeline_mode = #tpu.pipeline_mode<synchronous>, transform_indices = @transform_0, window_bounds = array<i64: 8, 8>}, {transform_indices = @transform_1, window_bounds = array<i64: 8, 80>}, {transform_indices = @transform_2, window_bounds = array<i64: 8, 80>}, {pipeline_mode = #tpu.pipeline_mode<synchronous>, transform_indices = @transform_3, window_bounds = array<i64: 8, 1>}, {transform_indices = @transform_4, window_bounds = array<i64: 8, 80>}, {transform_indices = @transform_5, window_bounds = array<i64: 8, 80>}]} {
    %c0 = arith.constant 0 : index
    %c0_0 = arith.constant 0 : index
    %0 = vector.load %arg1[%c0, %c0_0] : memref<8x8xf32, #tpu.memory_space<vmem>>, vector<8x8xf32>
    %c0_1 = arith.constant 0 : index
    %c0_2 = arith.constant 0 : index
    %1 = vector.load %arg4[%c0_1, %c0_2] : memref<8x1xf32, #tpu.memory_space<vmem>>, vector<8x1xf32>
    %c0_3 = arith.constant 0 : index
    %c0_4 = arith.constant 0 : index
    %2 = vector.load %arg2[%c0_3, %c0_4] : memref<8x80xf32, #tpu.memory_space<vmem>>, vector<8x80xf32>
    %cst = arith.constant dense<0.000000e+00> : vector<8x80xf32>
    %3 = tpu.matmul %0, %2, %cst {dimension_numbers = #tpu.dot_dimension_numbers<[1], [0], [0], [1], [0, 0, 1, 1], [], []>} : vector<8x8xf32>, vector<8x80xf32>, vector<8x80xf32> -> vector<8x80xf32>
    %4 = vector.broadcast %1 : vector<8x1xf32> to vector<8x80xf32>
    %5 = arith.addf %3, %4 : vector<8x80xf32>
    %c0_5 = arith.constant 0 : index
    %c0_6 = arith.constant 0 : index
    %6 = vector.load %arg5[%c0_5, %c0_6] : memref<8x80xf32, #tpu.memory_space<vmem>>, vector<8x80xf32>
    tpu.vector_store %arg5[%c0_5, %c0_6], %5 {strides = array<i32>} : memref<8x80xf32, #tpu.memory_space<vmem>>, vector<8x80xf32>,
    %c0_7 = arith.constant 0 : index
    %c0_8 = arith.constant 0 : index
    %7 = vector.load %arg3[%c0_7, %c0_8] : memref<8x80xf32, #tpu.memory_space<vmem>>, vector<8x80xf32>
    %cst_9 = arith.constant dense<0.000000e+00> : vector<8x80xf32>
    %8 = tpu.matmul %0, %7, %cst_9 {dimension_numbers = #tpu.dot_dimension_numbers<[1], [0], [0], [1], [0, 0, 1, 1], [], []>} : vector<8x8xf32>, vector<8x80xf32>, vector<8x80xf32> -> vector<8x80xf32>
    %9 = vector.broadcast %1 : vector<8x1xf32> to vector<8x80xf32>
    %10 = arith.addf %8, %9 : vector<8x80xf32>
    %c0_10 = arith.constant 0 : index
    %c0_11 = arith.constant 0 : index
    %11 = vector.load %arg6[%c0_10, %c0_11] : memref<8x80xf32, #tpu.memory_space<vmem>>, vector<8x80xf32>
    tpu.vector_store %arg6[%c0_10, %c0_11], %10 {strides = array<i32>} : memref<8x80xf32, #tpu.memory_space<vmem>>, vector<8x80xf32>,
    return
  }
  func.func @transform_0(%arg0: i32) -> (i32, i32) {
    %c0_i32 = arith.constant 0 : i32
    %c0_i32_0 = arith.constant 0 : i32
    %c0_i32_1 = arith.constant 0 : i32
    return %c0_i32, %c0_i32_0 : i32, i32
  }
  func.func @transform_1(%arg0: i32) -> (i32, i32) {
    %c0_i32 = arith.constant 0 : i32
    %c0_i32_0 = arith.constant 0 : i32
    return %c0_i32, %arg0 : i32, i32
  }
  func.func @transform_2(%arg0: i32) -> (i32, i32) {
    %c0_i32 = arith.constant 0 : i32
    %c0_i32_0 = arith.constant 0 : i32
    return %c0_i32, %arg0 : i32, i32
  }
  func.func @transform_3(%arg0: i32) -> (i32, i32) {
    %c0_i32 = arith.constant 0 : i32
    %c0_i32_0 = arith.constant 0 : i32
    %c0_i32_1 = arith.constant 0 : i32
    return %c0_i32, %c0_i32_0 : i32, i32
  }
  func.func @transform_4(%arg0: i32) -> (i32, i32) {
    %c0_i32 = arith.constant 0 : i32
    %c0_i32_0 = arith.constant 0 : i32
    return %c0_i32, %arg0 : i32, i32
  }
  func.func @transform_5(%arg0: i32) -> (i32, i32) {
    %c0_i32 = arith.constant 0 : i32
    %c0_i32_0 = arith.constant 0 : i32
    return %c0_i32, %arg0 : i32, i32
  }
}

module attributes {stable_mosaic.version = 11 : i64} {
  func.func @_mm_bias_kernel(%arg0: i32, %arg1: memref<16x128xf32, #tpu.memory_space<vmem>>, %arg2: memref<128x32xf32, #tpu.memory_space<vmem>>, %arg3: memref<16x1xf32, #tpu.memory_space<vmem>>, %arg4: memref<16x32xf32, #tpu.memory_space<vmem>>) attributes {dimension_semantics = [#tpu.dimension_semantics<parallel>], iteration_bounds = array<i64: 1>, scalar_prefetch = 0 : i64, scratch_operands = 0 : i64, tpu.core_type = #tpu.core_type<tc>, window_params = [{pipeline_mode = #tpu.pipeline_mode<synchronous>, transform_indices = @transform_0, window_bounds = array<i64: 16, 128>}, {transform_indices = @transform_1, window_bounds = array<i64: 128, 32>}, {pipeline_mode = #tpu.pipeline_mode<synchronous>, transform_indices = @transform_2, window_bounds = array<i64: 16, 1>}, {transform_indices = @transform_3, window_bounds = array<i64: 16, 32>}]} {
    %c0 = arith.constant 0 : index
    %c0_0 = arith.constant 0 : index
    %0 = vector.load %arg1[%c0, %c0_0] : memref<16x128xf32, #tpu.memory_space<vmem>>, vector<16x128xf32>
    %c0_1 = arith.constant 0 : index
    %c0_2 = arith.constant 0 : index
    %1 = vector.load %arg2[%c0_1, %c0_2] : memref<128x32xf32, #tpu.memory_space<vmem>>, vector<128x32xf32>
    %cst = arith.constant dense<0.000000e+00> : vector<16x32xf32>
    %2 = tpu.matmul %0, %1, %cst {dimension_numbers = #tpu.dot_dimension_numbers<[1], [0], [0], [1], [0, 0, 1, 1], [], []>} : vector<16x128xf32>, vector<128x32xf32>, vector<16x32xf32> -> vector<16x32xf32>
    %c0_3 = arith.constant 0 : index
    %c0_4 = arith.constant 0 : index
    %3 = vector.load %arg3[%c0_3, %c0_4] : memref<16x1xf32, #tpu.memory_space<vmem>>, vector<16x1xf32>
    %4 = vector.broadcast %3 : vector<16x1xf32> to vector<16x32xf32>
    %5 = arith.addf %2, %4 : vector<16x32xf32>
    %c0_5 = arith.constant 0 : index
    %c0_6 = arith.constant 0 : index
    %6 = vector.load %arg4[%c0_5, %c0_6] : memref<16x32xf32, #tpu.memory_space<vmem>>, vector<16x32xf32>
    tpu.vector_store %arg4[%c0_5, %c0_6], %5 {strides = array<i32>} : memref<16x32xf32, #tpu.memory_space<vmem>>, vector<16x32xf32>,
    return
  }
  func.func @transform_0(%arg0: i32) -> (i32, i32) {
    %c0_i32 = arith.constant 0 : i32
    %c0_i32_0 = arith.constant 0 : i32
    %c0_i32_1 = arith.constant 0 : i32
    return %c0_i32, %c0_i32_0 : i32, i32
  }
  func.func @transform_1(%arg0: i32) -> (i32, i32) {
    %c0_i32 = arith.constant 0 : i32
    %c0_i32_0 = arith.constant 0 : i32
    return %c0_i32, %arg0 : i32, i32
  }
  func.func @transform_2(%arg0: i32) -> (i32, i32) {
    %c0_i32 = arith.constant 0 : i32
    %c0_i32_0 = arith.constant 0 : i32
    %c0_i32_1 = arith.constant 0 : i32
    return %c0_i32, %c0_i32_0 : i32, i32
  }
  func.func @transform_3(%arg0: i32) -> (i32, i32) {
    %c0_i32 = arith.constant 0 : i32
    %c0_i32_0 = arith.constant 0 : i32
    return %c0_i32, %arg0 : i32, i32
  }
}

module attributes {stable_mosaic.version = 11 : i64} {
  func.func @_mm_bias2io_kernel(%arg0: i32, %arg1: memref<16x16xf32, #tpu.memory_space<vmem>>, %arg2: memref<16x24xf32, #tpu.memory_space<vmem>>, %arg3: memref<16x24xf32, #tpu.memory_space<vmem>>, %arg4: memref<16x1xf32, #tpu.memory_space<vmem>>, %arg5: memref<16x24xf32, #tpu.memory_space<vmem>>, %arg6: memref<16x24xf32, #tpu.memory_space<vmem>>) attributes {dimension_semantics = [#tpu.dimension_semantics<parallel>], iteration_bounds = array<i64: 1>, scalar_prefetch = 0 : i64, scratch_operands = 0 : i64, tpu.core_type = #tpu.core_type<tc>, window_params = [{pipeline_mode = #tpu.pipeline_mode<synchronous>, transform_indices = @transform_0, window_bounds = array<i64: 16, 16>}, {transform_indices = @transform_1, window_bounds = array<i64: 16, 24>}, {transform_indices = @transform_2, window_bounds = array<i64: 16, 24>}, {pipeline_mode = #tpu.pipeline_mode<synchronous>, transform_indices = @transform_3, window_bounds = array<i64: 16, 1>}, {transform_indices = @transform_4, window_bounds = array<i64: 16, 24>}, {transform_indices = @transform_5, window_bounds = array<i64: 16, 24>}]} {
    %c0 = arith.constant 0 : index
    %c0_0 = arith.constant 0 : index
    %0 = vector.load %arg1[%c0, %c0_0] : memref<16x16xf32, #tpu.memory_space<vmem>>, vector<16x16xf32>
    %c0_1 = arith.constant 0 : index
    %c0_2 = arith.constant 0 : index
    %1 = vector.load %arg4[%c0_1, %c0_2] : memref<16x1xf32, #tpu.memory_space<vmem>>, vector<16x1xf32>
    %c0_3 = arith.constant 0 : index
    %c0_4 = arith.constant 0 : index
    %2 = vector.load %arg2[%c0_3, %c0_4] : memref<16x24xf32, #tpu.memory_space<vmem>>, vector<16x24xf32>
    %cst = arith.constant dense<0.000000e+00> : vector<16x24xf32>
    %3 = tpu.matmul %0, %2, %cst {dimension_numbers = #tpu.dot_dimension_numbers<[1], [0], [0], [1], [0, 0, 1, 1], [], []>} : vector<16x16xf32>, vector<16x24xf32>, vector<16x24xf32> -> vector<16x24xf32>
    %4 = vector.broadcast %1 : vector<16x1xf32> to vector<16x24xf32>
    %5 = arith.addf %3, %4 : vector<16x24xf32>
    %c0_5 = arith.constant 0 : index
    %c0_6 = arith.constant 0 : index
    %6 = vector.load %arg5[%c0_5, %c0_6] : memref<16x24xf32, #tpu.memory_space<vmem>>, vector<16x24xf32>
    tpu.vector_store %arg5[%c0_5, %c0_6], %5 {strides = array<i32>} : memref<16x24xf32, #tpu.memory_space<vmem>>, vector<16x24xf32>,
    %c0_7 = arith.constant 0 : index
    %c0_8 = arith.constant 0 : index
    %7 = vector.load %arg3[%c0_7, %c0_8] : memref<16x24xf32, #tpu.memory_space<vmem>>, vector<16x24xf32>
    %cst_9 = arith.constant dense<0.000000e+00> : vector<16x24xf32>
    %8 = tpu.matmul %0, %7, %cst_9 {dimension_numbers = #tpu.dot_dimension_numbers<[1], [0], [0], [1], [0, 0, 1, 1], [], []>} : vector<16x16xf32>, vector<16x24xf32>, vector<16x24xf32> -> vector<16x24xf32>
    %9 = vector.broadcast %1 : vector<16x1xf32> to vector<16x24xf32>
    %10 = arith.addf %8, %9 : vector<16x24xf32>
    %c0_10 = arith.constant 0 : index
    %c0_11 = arith.constant 0 : index
    %11 = vector.load %arg6[%c0_10, %c0_11] : memref<16x24xf32, #tpu.memory_space<vmem>>, vector<16x24xf32>
    tpu.vector_store %arg6[%c0_10, %c0_11], %10 {strides = array<i32>} : memref<16x24xf32, #tpu.memory_space<vmem>>, vector<16x24xf32>,
    return
  }
  func.func @transform_0(%arg0: i32) -> (i32, i32) {
    %c0_i32 = arith.constant 0 : i32
    %c0_i32_0 = arith.constant 0 : i32
    %c0_i32_1 = arith.constant 0 : i32
    return %c0_i32, %c0_i32_0 : i32, i32
  }
  func.func @transform_1(%arg0: i32) -> (i32, i32) {
    %c0_i32 = arith.constant 0 : i32
    %c0_i32_0 = arith.constant 0 : i32
    return %c0_i32, %arg0 : i32, i32
  }
  func.func @transform_2(%arg0: i32) -> (i32, i32) {
    %c0_i32 = arith.constant 0 : i32
    %c0_i32_0 = arith.constant 0 : i32
    return %c0_i32, %arg0 : i32, i32
  }
  func.func @transform_3(%arg0: i32) -> (i32, i32) {
    %c0_i32 = arith.constant 0 : i32
    %c0_i32_0 = arith.constant 0 : i32
    %c0_i32_1 = arith.constant 0 : i32
    return %c0_i32, %c0_i32_0 : i32, i32
  }
  func.func @transform_4(%arg0: i32) -> (i32, i32) {
    %c0_i32 = arith.constant 0 : i32
    %c0_i32_0 = arith.constant 0 : i32
    return %c0_i32, %arg0 : i32, i32
  }
  func.func @transform_5(%arg0: i32) -> (i32, i32) {
    %c0_i32 = arith.constant 0 : i32
    %c0_i32_0 = arith.constant 0 : i32
    return %c0_i32, %arg0 : i32, i32
  }
}

module attributes {stable_mosaic.version = 11 : i64} {
  func.func @_mm_bias_kernel(%arg0: i32, %arg1: memref<32x16xf32, #tpu.memory_space<vmem>>, %arg2: memref<16x32xf32, #tpu.memory_space<vmem>>, %arg3: memref<32x1xf32, #tpu.memory_space<vmem>>, %arg4: memref<32x32xf32, #tpu.memory_space<vmem>>) attributes {dimension_semantics = [#tpu.dimension_semantics<parallel>], iteration_bounds = array<i64: 1>, scalar_prefetch = 0 : i64, scratch_operands = 0 : i64, tpu.core_type = #tpu.core_type<tc>, window_params = [{pipeline_mode = #tpu.pipeline_mode<synchronous>, transform_indices = @transform_0, window_bounds = array<i64: 32, 16>}, {transform_indices = @transform_1, window_bounds = array<i64: 16, 32>}, {pipeline_mode = #tpu.pipeline_mode<synchronous>, transform_indices = @transform_2, window_bounds = array<i64: 32, 1>}, {transform_indices = @transform_3, window_bounds = array<i64: 32, 32>}]} {
    %c0 = arith.constant 0 : index
    %c0_0 = arith.constant 0 : index
    %0 = vector.load %arg1[%c0, %c0_0] : memref<32x16xf32, #tpu.memory_space<vmem>>, vector<32x16xf32>
    %c0_1 = arith.constant 0 : index
    %c0_2 = arith.constant 0 : index
    %1 = vector.load %arg2[%c0_1, %c0_2] : memref<16x32xf32, #tpu.memory_space<vmem>>, vector<16x32xf32>
    %cst = arith.constant dense<0.000000e+00> : vector<32x32xf32>
    %2 = tpu.matmul %0, %1, %cst {dimension_numbers = #tpu.dot_dimension_numbers<[1], [0], [0], [1], [0, 0, 1, 1], [], []>} : vector<32x16xf32>, vector<16x32xf32>, vector<32x32xf32> -> vector<32x32xf32>
    %c0_3 = arith.constant 0 : index
    %c0_4 = arith.constant 0 : index
    %3 = vector.load %arg3[%c0_3, %c0_4] : memref<32x1xf32, #tpu.memory_space<vmem>>, vector<32x1xf32>
    %4 = vector.broadcast %3 : vector<32x1xf32> to vector<32x32xf32>
    %5 = arith.addf %2, %4 : vector<32x32xf32>
    %c0_5 = arith.constant 0 : index
    %c0_6 = arith.constant 0 : index
    %6 = vector.load %arg4[%c0_5, %c0_6] : memref<32x32xf32, #tpu.memory_space<vmem>>, vector<32x32xf32>
    tpu.vector_store %arg4[%c0_5, %c0_6], %5 {strides = array<i32>} : memref<32x32xf32, #tpu.memory_space<vmem>>, vector<32x32xf32>,
    return
  }
  func.func @transform_0(%arg0: i32) -> (i32, i32) {
    %c0_i32 = arith.constant 0 : i32
    %c0_i32_0 = arith.constant 0 : i32
    %c0_i32_1 = arith.constant 0 : i32
    return %c0_i32, %c0_i32_0 : i32, i32
  }
  func.func @transform_1(%arg0: i32) -> (i32, i32) {
    %c0_i32 = arith.constant 0 : i32
    %c0_i32_0 = arith.constant 0 : i32
    return %c0_i32, %arg0 : i32, i32
  }
  func.func @transform_2(%arg0: i32) -> (i32, i32) {
    %c0_i32 = arith.constant 0 : i32
    %c0_i32_0 = arith.constant 0 : i32
    %c0_i32_1 = arith.constant 0 : i32
    return %c0_i32, %c0_i32_0 : i32, i32
  }
  func.func @transform_3(%arg0: i32) -> (i32, i32) {
    %c0_i32 = arith.constant 0 : i32
    %c0_i32_0 = arith.constant 0 : i32
    return %c0_i32, %arg0 : i32, i32
  }
}

module attributes {stable_mosaic.version = 11 : i64} {
  func.func @_mm2_bias_kernel(%arg0: i32, %arg1: memref<8x8xf32, #tpu.memory_space<vmem>>, %arg2: memref<8x128xf32, #tpu.memory_space<vmem>>, %arg3: memref<8x8xf32, #tpu.memory_space<vmem>>, %arg4: memref<8x128xf32, #tpu.memory_space<vmem>>, %arg5: memref<8x1xf32, #tpu.memory_space<vmem>>, %arg6: memref<8x128xf32, #tpu.memory_space<vmem>>) attributes {dimension_semantics = [#tpu.dimension_semantics<parallel>], iteration_bounds = array<i64: 1>, scalar_prefetch = 0 : i64, scratch_operands = 0 : i64, tpu.core_type = #tpu.core_type<tc>, window_params = [{pipeline_mode = #tpu.pipeline_mode<synchronous>, transform_indices = @transform_0, window_bounds = array<i64: 8, 8>}, {transform_indices = @transform_1, window_bounds = array<i64: 8, 128>}, {pipeline_mode = #tpu.pipeline_mode<synchronous>, transform_indices = @transform_2, window_bounds = array<i64: 8, 8>}, {transform_indices = @transform_3, window_bounds = array<i64: 8, 128>}, {pipeline_mode = #tpu.pipeline_mode<synchronous>, transform_indices = @transform_4, window_bounds = array<i64: 8, 1>}, {transform_indices = @transform_5, window_bounds = array<i64: 8, 128>}]} {
    %c0 = arith.constant 0 : index
    %c0_0 = arith.constant 0 : index
    %0 = vector.load %arg1[%c0, %c0_0] : memref<8x8xf32, #tpu.memory_space<vmem>>, vector<8x8xf32>
    %c0_1 = arith.constant 0 : index
    %c0_2 = arith.constant 0 : index
    %1 = vector.load %arg2[%c0_1, %c0_2] : memref<8x128xf32, #tpu.memory_space<vmem>>, vector<8x128xf32>
    %cst = arith.constant dense<0.000000e+00> : vector<8x128xf32>
    %2 = tpu.matmul %0, %1, %cst {dimension_numbers = #tpu.dot_dimension_numbers<[1], [0], [0], [1], [0, 0, 1, 1], [], []>} : vector<8x8xf32>, vector<8x128xf32>, vector<8x128xf32> -> vector<8x128xf32>
    %c0_3 = arith.constant 0 : index
    %c0_4 = arith.constant 0 : index
    %3 = vector.load %arg3[%c0_3, %c0_4] : memref<8x8xf32, #tpu.memory_space<vmem>>, vector<8x8xf32>
    %c0_5 = arith.constant 0 : index
    %c0_6 = arith.constant 0 : index
    %4 = vector.load %arg4[%c0_5, %c0_6] : memref<8x128xf32, #tpu.memory_space<vmem>>, vector<8x128xf32>
    %cst_7 = arith.constant dense<0.000000e+00> : vector<8x128xf32>
    %5 = tpu.matmul %3, %4, %cst_7 {dimension_numbers = #tpu.dot_dimension_numbers<[1], [0], [0], [1], [0, 0, 1, 1], [], []>} : vector<8x8xf32>, vector<8x128xf32>, vector<8x128xf32> -> vector<8x128xf32>
    %6 = arith.addf %2, %5 : vector<8x128xf32>
    %c0_8 = arith.constant 0 : index
    %c0_9 = arith.constant 0 : index
    %7 = vector.load %arg5[%c0_8, %c0_9] : memref<8x1xf32, #tpu.memory_space<vmem>>, vector<8x1xf32>
    %8 = vector.broadcast %7 : vector<8x1xf32> to vector<8x128xf32>
    %9 = arith.addf %6, %8 : vector<8x128xf32>
    %c0_10 = arith.constant 0 : index
    %c0_11 = arith.constant 0 : index
    %10 = vector.load %arg6[%c0_10, %c0_11] : memref<8x128xf32, #tpu.memory_space<vmem>>, vector<8x128xf32>
    tpu.vector_store %arg6[%c0_10, %c0_11], %9 {strides = array<i32>} : memref<8x128xf32, #tpu.memory_space<vmem>>, vector<8x128xf32>,
    return
  }
  func.func @transform_0(%arg0: i32) -> (i32, i32) {
    %c0_i32 = arith.constant 0 : i32
    %c0_i32_0 = arith.constant 0 : i32
    %c0_i32_1 = arith.constant 0 : i32
    return %c0_i32, %c0_i32_0 : i32, i32
  }
  func.func @transform_1(%arg0: i32) -> (i32, i32) {
    %c0_i32 = arith.constant 0 : i32
    %c0_i32_0 = arith.constant 0 : i32
    return %c0_i32, %arg0 : i32, i32
  }
  func.func @transform_2(%arg0: i32) -> (i32, i32) {
    %c0_i32 = arith.constant 0 : i32
    %c0_i32_0 = arith.constant 0 : i32
    %c0_i32_1 = arith.constant 0 : i32
    return %c0_i32, %c0_i32_0 : i32, i32
  }
  func.func @transform_3(%arg0: i32) -> (i32, i32) {
    %c0_i32 = arith.constant 0 : i32
    %c0_i32_0 = arith.constant 0 : i32
    return %c0_i32, %arg0 : i32, i32
  }
  func.func @transform_4(%arg0: i32) -> (i32, i32) {
    %c0_i32 = arith.constant 0 : i32
    %c0_i32_0 = arith.constant 0 : i32
    %c0_i32_1 = arith.constant 0 : i32
    return %c0_i32, %c0_i32_0 : i32, i32
  }
  func.func @transform_5(%arg0: i32) -> (i32, i32) {
    %c0_i32 = arith.constant 0 : i32
    %c0_i32_0 = arith.constant 0 : i32
    return %c0_i32, %arg0 : i32, i32
  }
}

module attributes {stable_mosaic.version = 11 : i64} {
  func.func @_mm_bias_kernel(%arg0: i32, %arg1: memref<16x8xf32, #tpu.memory_space<vmem>>, %arg2: memref<8x128xf32, #tpu.memory_space<vmem>>, %arg3: memref<16x1xf32, #tpu.memory_space<vmem>>, %arg4: memref<16x128xf32, #tpu.memory_space<vmem>>) attributes {dimension_semantics = [#tpu.dimension_semantics<parallel>], iteration_bounds = array<i64: 1>, scalar_prefetch = 0 : i64, scratch_operands = 0 : i64, tpu.core_type = #tpu.core_type<tc>, window_params = [{pipeline_mode = #tpu.pipeline_mode<synchronous>, transform_indices = @transform_0, window_bounds = array<i64: 16, 8>}, {transform_indices = @transform_1, window_bounds = array<i64: 8, 128>}, {pipeline_mode = #tpu.pipeline_mode<synchronous>, transform_indices = @transform_2, window_bounds = array<i64: 16, 1>}, {transform_indices = @transform_3, window_bounds = array<i64: 16, 128>}]} {
    %c0 = arith.constant 0 : index
    %c0_0 = arith.constant 0 : index
    %0 = vector.load %arg1[%c0, %c0_0] : memref<16x8xf32, #tpu.memory_space<vmem>>, vector<16x8xf32>
    %c0_1 = arith.constant 0 : index
    %c0_2 = arith.constant 0 : index
    %1 = vector.load %arg2[%c0_1, %c0_2] : memref<8x128xf32, #tpu.memory_space<vmem>>, vector<8x128xf32>
    %cst = arith.constant dense<0.000000e+00> : vector<16x128xf32>
    %2 = tpu.matmul %0, %1, %cst {dimension_numbers = #tpu.dot_dimension_numbers<[1], [0], [0], [1], [0, 0, 1, 1], [], []>} : vector<16x8xf32>, vector<8x128xf32>, vector<16x128xf32> -> vector<16x128xf32>
    %c0_3 = arith.constant 0 : index
    %c0_4 = arith.constant 0 : index
    %3 = vector.load %arg3[%c0_3, %c0_4] : memref<16x1xf32, #tpu.memory_space<vmem>>, vector<16x1xf32>
    %4 = vector.broadcast %3 : vector<16x1xf32> to vector<16x128xf32>
    %5 = arith.addf %2, %4 : vector<16x128xf32>
    %c0_5 = arith.constant 0 : index
    %c0_6 = arith.constant 0 : index
    %6 = vector.load %arg4[%c0_5, %c0_6] : memref<16x128xf32, #tpu.memory_space<vmem>>, vector<16x128xf32>
    tpu.vector_store %arg4[%c0_5, %c0_6], %5 {strides = array<i32>} : memref<16x128xf32, #tpu.memory_space<vmem>>, vector<16x128xf32>,
    return
  }
  func.func @transform_0(%arg0: i32) -> (i32, i32) {
    %c0_i32 = arith.constant 0 : i32
    %c0_i32_0 = arith.constant 0 : i32
    %c0_i32_1 = arith.constant 0 : i32
    return %c0_i32, %c0_i32_0 : i32, i32
  }
  func.func @transform_1(%arg0: i32) -> (i32, i32) {
    %c0_i32 = arith.constant 0 : i32
    %c0_i32_0 = arith.constant 0 : i32
    return %c0_i32, %arg0 : i32, i32
  }
  func.func @transform_2(%arg0: i32) -> (i32, i32) {
    %c0_i32 = arith.constant 0 : i32
    %c0_i32_0 = arith.constant 0 : i32
    %c0_i32_1 = arith.constant 0 : i32
    return %c0_i32, %c0_i32_0 : i32, i32
  }
  func.func @transform_3(%arg0: i32) -> (i32, i32) {
    %c0_i32 = arith.constant 0 : i32
    %c0_i32_0 = arith.constant 0 : i32
    return %c0_i32, %arg0 : i32, i32
  }
}

module attributes {stable_mosaic.version = 11 : i64} {
  func.func @_mm2_bias_kernel(%arg0: i32, %arg1: memref<4x4xf32, #tpu.memory_space<vmem>>, %arg2: memref<4x256xf32, #tpu.memory_space<vmem>>, %arg3: memref<4x4xf32, #tpu.memory_space<vmem>>, %arg4: memref<4x256xf32, #tpu.memory_space<vmem>>, %arg5: memref<4x1xf32, #tpu.memory_space<vmem>>, %arg6: memref<4x256xf32, #tpu.memory_space<vmem>>) attributes {dimension_semantics = [#tpu.dimension_semantics<parallel>], iteration_bounds = array<i64: 2>, scalar_prefetch = 0 : i64, scratch_operands = 0 : i64, tpu.core_type = #tpu.core_type<tc>, window_params = [{pipeline_mode = #tpu.pipeline_mode<synchronous>, transform_indices = @transform_0, window_bounds = array<i64: 4, 4>}, {transform_indices = @transform_1, window_bounds = array<i64: 4, 256>}, {pipeline_mode = #tpu.pipeline_mode<synchronous>, transform_indices = @transform_2, window_bounds = array<i64: 4, 4>}, {transform_indices = @transform_3, window_bounds = array<i64: 4, 256>}, {pipeline_mode = #tpu.pipeline_mode<synchronous>, transform_indices = @transform_4, window_bounds = array<i64: 4, 1>}, {transform_indices = @transform_5, window_bounds = array<i64: 4, 256>}]} {
    %c0 = arith.constant 0 : index
    %c0_0 = arith.constant 0 : index
    %0 = vector.load %arg1[%c0, %c0_0] : memref<4x4xf32, #tpu.memory_space<vmem>>, vector<4x4xf32>
    %c0_1 = arith.constant 0 : index
    %c0_2 = arith.constant 0 : index
    %1 = vector.load %arg2[%c0_1, %c0_2] : memref<4x256xf32, #tpu.memory_space<vmem>>, vector<4x256xf32>
    %cst = arith.constant dense<0.000000e+00> : vector<4x256xf32>
    %2 = tpu.matmul %0, %1, %cst {dimension_numbers = #tpu.dot_dimension_numbers<[1], [0], [0], [1], [0, 0, 1, 1], [], []>} : vector<4x4xf32>, vector<4x256xf32>, vector<4x256xf32> -> vector<4x256xf32>
    %c0_3 = arith.constant 0 : index
    %c0_4 = arith.constant 0 : index
    %3 = vector.load %arg3[%c0_3, %c0_4] : memref<4x4xf32, #tpu.memory_space<vmem>>, vector<4x4xf32>
    %c0_5 = arith.constant 0 : index
    %c0_6 = arith.constant 0 : index
    %4 = vector.load %arg4[%c0_5, %c0_6] : memref<4x256xf32, #tpu.memory_space<vmem>>, vector<4x256xf32>
    %cst_7 = arith.constant dense<0.000000e+00> : vector<4x256xf32>
    %5 = tpu.matmul %3, %4, %cst_7 {dimension_numbers = #tpu.dot_dimension_numbers<[1], [0], [0], [1], [0, 0, 1, 1], [], []>} : vector<4x4xf32>, vector<4x256xf32>, vector<4x256xf32> -> vector<4x256xf32>
    %6 = arith.addf %2, %5 : vector<4x256xf32>
    %c0_8 = arith.constant 0 : index
    %c0_9 = arith.constant 0 : index
    %7 = vector.load %arg5[%c0_8, %c0_9] : memref<4x1xf32, #tpu.memory_space<vmem>>, vector<4x1xf32>
    %8 = vector.broadcast %7 : vector<4x1xf32> to vector<4x256xf32>
    %9 = arith.addf %6, %8 : vector<4x256xf32>
    %c0_10 = arith.constant 0 : index
    %c0_11 = arith.constant 0 : index
    %10 = vector.load %arg6[%c0_10, %c0_11] : memref<4x256xf32, #tpu.memory_space<vmem>>, vector<4x256xf32>
    tpu.vector_store %arg6[%c0_10, %c0_11], %9 {strides = array<i32>} : memref<4x256xf32, #tpu.memory_space<vmem>>, vector<4x256xf32>,
    return
  }
  func.func @transform_0(%arg0: i32) -> (i32, i32) {
    %c0_i32 = arith.constant 0 : i32
    %c0_i32_0 = arith.constant 0 : i32
    %c0_i32_1 = arith.constant 0 : i32
    return %c0_i32, %c0_i32_0 : i32, i32
  }
  func.func @transform_1(%arg0: i32) -> (i32, i32) {
    %c0_i32 = arith.constant 0 : i32
    %c0_i32_0 = arith.constant 0 : i32
    return %c0_i32, %arg0 : i32, i32
  }
  func.func @transform_2(%arg0: i32) -> (i32, i32) {
    %c0_i32 = arith.constant 0 : i32
    %c0_i32_0 = arith.constant 0 : i32
    %c0_i32_1 = arith.constant 0 : i32
    return %c0_i32, %c0_i32_0 : i32, i32
  }
  func.func @transform_3(%arg0: i32) -> (i32, i32) {
    %c0_i32 = arith.constant 0 : i32
    %c0_i32_0 = arith.constant 0 : i32
    return %c0_i32, %arg0 : i32, i32
  }
  func.func @transform_4(%arg0: i32) -> (i32, i32) {
    %c0_i32 = arith.constant 0 : i32
    %c0_i32_0 = arith.constant 0 : i32
    %c0_i32_1 = arith.constant 0 : i32
    return %c0_i32, %c0_i32_0 : i32, i32
  }
  func.func @transform_5(%arg0: i32) -> (i32, i32) {
    %c0_i32 = arith.constant 0 : i32
    %c0_i32_0 = arith.constant 0 : i32
    return %c0_i32, %arg0 : i32, i32
  }
}

</mosaic_0001>

<llo_original>
// kernel: ffm_forward.11
$region0: #{ffm_forward.11}
  #allocation0 [shape = 'u32[]', space=smem, size = 0x4, offset = 0x4, fixed_abs, tag = 'smem constant byte address 0x4 - core index']
  #allocation1 [shape = 'u32[144,128]{1,0:T(1,128)}', space=vmem, size = 0x12000, scoped, tag = 'internal scratch']
  %s0 = inlined_call_operand.vmem [shape: f32[4,36], index: 0, kind: input, shape index: {}]
  %s1 = inlined_call_operand.vmem [shape: f32[36,512], index: 1, kind: input, shape index: {}]
  %s2 = inlined_call_operand.vmem [shape: f32[4,1], index: 2, kind: input, shape index: {}]
  %s3 = inlined_call_operand.vmem [shape: f32[4,512], index: 3, kind: output, shape index: {}]
  %s4 = sld [smem:[#allocation0]]
  $region68: #{ffm_forward.11} parent=0
    _
  %s6 = ssub.s32 1, %s4
  %s7 = scalar_select 0, %s6, %s4
  $region1: #{ffm_forward.11} parent=0
    #allocation2 [shape = 'u8[81920]{0}', space=vmem, size = 0x14000, scoped, tag = 'input window, operand 1']
    loop: start=0, step=1, limit=4
    $region2: #{ffm_forward.11} parent=1 // loop_pre_header
      _
    $region3: #{ffm_forward.11} parent=1 // loop_header
      %s9 = sphi 0, %s13
      %p10 = scmp.ge.s32.totalorder %s9, 4
      %s17 = sphi 0, %s17
      %s19 = sphi 0, %s17
      %s20 = sphi 0, %s19
      %s34 = sphi 0, %s20
      %s40 = sphi 0, %s42
      %s43 = sphi 0, %s40
      %s44 = sphi 0, %s43
      %s60 = sphi 0, %s44
      %s64 = sphi 0, %s64
      %s66 = sphi 0, %s64
      %s67 = sphi 0, %s66
      %s81 = sphi 0, %s67
      %s87 = sphi 0, %s89
      %s90 = sphi 0, %s87
      %s91 = sphi 0, %s90
      %s107 = sphi 0, %s91
    $region4: #{ffm_forward.11} parent=1 // loop_header_branch
      %12 = sbr.rel (%p10) target = $region8
    $region5: #{ffm_forward.11} parent=1 // loop_body
      %s14 = ssub.s32 %s9, 1
      %s15 = ssub.s32 %s9, 2
      %s16 = sadd.s32 %s9, 1
      %s18 = sadd.s32 %s17, 1
      %p21 = scmp.eq.s32.totalorder %s9, 1
      %p22 = scmp.ne.s32.totalorder %s17, %s19
      %p23 = scmp.eq.s32.totalorder %s9, 0
      %p24 = por %p22, %p23
      %p25 = scmp.ne.s32.totalorder %s17, %s19
      %p26 = scmp.eq.s32.totalorder %s14, 1
      %p27 = por %p25, %p26
      %p28 = scmp.ne.s32.totalorder %s19, %s20
      %p29 = scmp.eq.s32.totalorder %s14, 0
      %p30 = por %p28, %p29
      %p31 = scmp.ne.s32.totalorder %s19, %s20
      %p32 = scmp.eq.s32.totalorder %s15, 1
      %p33 = por %p31, %p32
      %p35 = scmp.ne.s32.totalorder %s20, %s34
      %p36 = scmp.eq.s32.totalorder %s15, 0
      %p37 = por %p35, %p36
      %s38 = ssub.s32 %s9, %s16
      %p39 = scmp.eq.s32.totalorder %s38, 0
      %s41 = sadd.s32 %s40, 1
      %s42 = scalar_select %p39, %s40, %s41
      %p45 = pneg %p39
      %p46 = scmp.eq.s32.totalorder %s9, 1
      %p47 = por %p45, %p46
      %p48 = scmp.ne.s32.totalorder %s40, %s43
      %p49 = scmp.eq.s32.totalorder %s9, 0
      %p50 = por %p48, %p49
      %p51 = scmp.ne.s32.totalorder %s40, %s43
      %p52 = scmp.eq.s32.totalorder %s14, 1
      %p53 = por %p51, %p52
      %p54 = scmp.ne.s32.totalorder %s43, %s44
      %p55 = scmp.eq.s32.totalorder %s14, 0
      %p56 = por %p54, %p55
      %p57 = scmp.ne.s32.totalorder %s43, %s44
      %p58 = scmp.eq.s32.totalorder %s15, 1
      %p59 = por %p57, %p58
      %p61 = scmp.ne.s32.totalorder %s44, %s60
      %p62 = scmp.eq.s32.totalorder %s15, 0
      %p63 = por %p61, %p62
      %s65 = sadd.s32 %s64, 1
      %p68 = scmp.eq.s32.totalorder %s9, 1
      %p69 = scmp.ne.s32.totalorder %s64, %s66
      %p70 = scmp.eq.s32.totalorder %s9, 0
      %p71 = por %p69, %p70
      %p72 = scmp.ne.s32.totalorder %s64, %s66
      %p73 = scmp.eq.s32.totalorder %s14, 1
      %p74 = por %p72, %p73
      %p75 = scmp.ne.s32.totalorder %s66, %s67
      %p76 = scmp.eq.s32.totalorder %s14, 0
      %p77 = por %p75, %p76
      %p78 = scmp.ne.s32.totalorder %s66, %s67
      %p79 = scmp.eq.s32.totalorder %s15, 1
      %p80 = por %p78, %p79
      %p82 = scmp.ne.s32.totalorder %s67, %s81
      %p83 = scmp.eq.s32.totalorder %s15, 0
      %p84 = por %p82, %p83
      %s85 = ssub.s32 %s9, %s16
      %p86 = scmp.eq.s32.totalorder %s85, 0
      %s88 = sadd.s32 %s87, 1
      %s89 = scalar_select %p86, %s87, %s88
      %p92 = pneg %p86
      %p93 = scmp.eq.s32.totalorder %s9, 1
      %p94 = por %p92, %p93
      %p95 = scmp.ne.s32.totalorder %s87, %s90
      %p96 = scmp.eq.s32.totalorder %s9, 0
      %p97 = por %p95, %p96
      %p98 = scmp.ne.s32.totalorder %s87, %s90
      %p99 = scmp.eq.s32.totalorder %s14, 1
      %p100 = por %p98, %p99
      %p101 = scmp.ne.s32.totalorder %s90, %s91
      %p102 = scmp.eq.s32.totalorder %s14, 0
      %p103 = por %p101, %p102
      %p104 = scmp.ne.s32.totalorder %s90, %s91
      %p105 = scmp.eq.s32.totalorder %s15, 1
      %p106 = por %p104, %p105
      %p108 = scmp.ne.s32.totalorder %s91, %s107
      %p109 = scmp.eq.s32.totalorder %s15, 0
      %p110 = por %p108, %p109
      %p111 = scmp.le.s32.totalorder 1, %s9
      %p112 = scmp.lt.s32.totalorder %s9, 3
      %p113 = pnand %p111, %p112
      %p114 = pneg %p113
      // Predicated region
      $region9: #{ffm_forward.11} parent=5 // pred_check
        _
      $region10: #{ffm_forward.11} parent=5 // pred_check_branch
        %116 = sbr.rel (%p113) target = $region12
      $region11: #{ffm_forward.11} parent=5 // pred_region
        %s117 = ssub.s32 %s9, 1
        // Predicated region
        $region13: #{ffm_forward.11} parent=11 // pred_check
          %p118 = pneg %p30
        $region14: #{ffm_forward.11} parent=11 // pred_check_branch
          %120 = sbr.rel (%p118) target = $region16
        $region15: #{ffm_forward.11} parent=11 // pred_region
          _
        $region16: #{ffm_forward.11} parent=11 // pred_fallthru
          _
        // Predicated region
        $region17: #{ffm_forward.11} parent=11 // pred_check
          %p121 = pneg %p77
        $region18: #{ffm_forward.11} parent=11 // pred_check_branch
          %123 = sbr.rel (%p121) target = $region20
        $region19: #{ffm_forward.11} parent=11 // pred_region
          _
        $region20: #{ffm_forward.11} parent=11 // pred_fallthru
          _
      $region12: #{ffm_forward.11} parent=5 // pred_fallthru
        _
      %p124 = scmp.lt.s32.totalorder %s9, 2
      // Predicated region
      $region21: #{ffm_forward.11} parent=5 // pred_check
        %p125 = pneg %p124
      $region22: #{ffm_forward.11} parent=5 // pred_check_branch
        %127 = sbr.rel (%p125) target = $region24
      $region23: #{ffm_forward.11} parent=5 // pred_region
        // Predicated region
        $region25: #{ffm_forward.11} parent=23 // pred_check
          %p128 = pneg %p50
        $region26: #{ffm_forward.11} parent=23 // pred_check_branch
          %130 = sbr.rel (%p128) target = $region28
        $region27: #{ffm_forward.11} parent=23 // pred_region
          %s131 = sand.u32 %s40, 1
          %s132 = sand.u32 %s40, 1
          %s133 = smul.addr %s132, 80
          %s134 = scalar_lea.vmem [#allocation2], %s133
          %s135 = smul.u32 2, %s9
          %s136 = smul.addr %s135, 8
          %s137 = scalar_lea.vmem %s1, %s136
          // Predicated region
          $region29: #{ffm_forward.11} parent=27 // pred_check
            _
          $region30: #{ffm_forward.11} parent=27 // pred_check_branch
            %139 = sbr.rel (0) target = $region32
          $region31: #{ffm_forward.11} parent=27 // pred_region
            // Predicated region
            $region33: #{ffm_forward.11} parent=31 // pred_check
              _
            $region34: #{ffm_forward.11} parent=31 // pred_check_branch
              %141 = sbr.rel (0) target = $region36
            $region35: #{ffm_forward.11} parent=31 // pred_region
              loop: start=0, step=1, limit=1
              $region37: #{ffm_forward.11} parent=35 // loop_pre_header
                _
              $region38: #{ffm_forward.11} parent=35 // loop_header
                %s143 = sphi 0, %s147
                %p144 = scmp.ge.s32.totalorder %s143, 1
                %s148 = sphi %s137, %s137
                %s149 = sphi %s134, %s134
              $region39: #{ffm_forward.11} parent=35 // loop_header_branch
                %146 = sbr.rel (%p144) target = $region43
              $region40: #{ffm_forward.11} parent=35 // loop_body
                %v150 = vld [vmem:[%s148] sm:$0xff]
                %151 = vst [vmem:[%s149] sm:$0xff] %v150
                %v152 = vld [vmem:[%s148 + $0x8] sm:$0xff]
                %153 = vst [vmem:[%s149 + $0x8] sm:$0xff] %v152
                %v154 = vld [vmem:[%s148 + $0x20] sm:$0xff]
                %155 = vst [vmem:[%s149 + $0x10] sm:$0xff] %v154
                %v156 = vld [vmem:[%s148 + $0x28] sm:$0xff]
                %157 = vst [vmem:[%s149 + $0x18] sm:$0xff] %v156
                %v158 = vld [vmem:[%s148 + $0x40] sm:$0xff]
                %159 = vst [vmem:[%s149 + $0x20] sm:$0xff] %v158
                %v160 = vld [vmem:[%s148 + $0x48] sm:$0xff]
                %161 = vst [vmem:[%s149 + $0x28] sm:$0xff] %v160
                %v162 = vld [vmem:[%s148 + $0x60] sm:$0xff]
                %163 = vst [vmem:[%s149 + $0x30] sm:$0xff] %v162
                %v164 = vld [vmem:[%s148 + $0x68] sm:$0xff]
                %165 = vst [vmem:[%s149 + $0x38] sm:$0xff] %v164
                %v166 = vld [vmem:[%s148 + $0x80] sm:$0xff]
                %167 = vst [vmem:[%s149 + $0x40] sm:$0xff] %v166
                %v168 = vld [vmem:[%s148 + $0x88] sm:$0xff]
                %169 = vst [vmem:[%s149 + $0x48] sm:$0xff] %v168
              $region41: #{ffm_forward.11} parent=35 // loop_footer
                %s147 = sadd.s32 1, %s143
              $region42: #{ffm_forward.11} parent=35 // loop_footer_branch
                %142 = sbr.rel target = $region38
              $region43: #{ffm_forward.11} parent=35 // loop_exit
                _
            $region36: #{ffm_forward.11} parent=31 // pred_fallthru
              _
            // Predicated region
            $region44: #{ffm_forward.11} parent=31 // pred_check
              _
            $region45: #{ffm_forward.11} parent=31 // pred_check_branch
              %171 = sbr.rel target = $region47
            $region46: #{ffm_forward.11} parent=31 // pred_region
              _
            $region47: #{ffm_forward.11} parent=31 // pred_fallthru
              _
          $region32: #{ffm_forward.11} parent=27 // pred_fallthru
            _
          %172 = vnop
        $region28: #{ffm_forward.11} parent=23 // pred_fallthru
          _
      $region24: #{ffm_forward.11} parent=5 // pred_fallthru
        _
      %p173 = scmp.le.s32.totalorder 1, %s9
      %p174 = scmp.lt.s32.totalorder %s9, 3
      %p175 = pnand %p173, %p174
      %p176 = pneg %p175
      // Predicated region
      $region48: #{ffm_forward.11} parent=5 // pred_check
        _
      $region49: #{ffm_forward.11} parent=5 // pred_check_branch
        %178 = sbr.rel (%p175) target = $region51
      $region50: #{ffm_forward.11} parent=5 // pred_region
        %s179 = ssub.s32 %s9, 1
        %s180 = sand.u32 %s43, 1
        %s181 = sand.u32 %s43, 1
        %s182 = smul.addr %s181, 80
        %s183 = scalar_lea.vmem [#allocation2], %s182
        // Predicated region
        $region52: #{ffm_forward.11} parent=50 // pred_check
          %p184 = pneg %p56
        $region53: #{ffm_forward.11} parent=50 // pred_check_branch
          %186 = sbr.rel (%p184) target = $region55
        $region54: #{ffm_forward.11} parent=50 // pred_region
          _
        $region55: #{ffm_forward.11} parent=50 // pred_fallthru
          _
        %p187 = pneg %p30
        %p188 = pneg %p27
        %s189 = sand.u32 %s43, 1
        %s190 = sand.u32 %s43, 1
        %s191 = smul.addr %s190, 80
        %s192 = scalar_lea.vmem [#allocation2], %s191
        %p193 = pneg %p56
        %p194 = pneg %p53
        %p195 = pneg %p77
        %p196 = pneg %p74
        %p197 = pneg %p103
        %p198 = pneg %p100
        %s199 = smul.u32 2, %s14
        %p200 = scmp.lt.s32.totalorder %s199, 3
        %s201 = scalar_select %p200, %s199, 3
        %s202 = smul.addr %s201, 4
        %s203 = scalar_lea.vmem %s3, %s202
        %s204 = smul.u32 2, %s14
        %s205 = smul.u32 2, %s14
        %p206 = scmp.lt.s32.totalorder %s205, 3
        %s207 = scalar_select %p206, %s205, 3
        %s208 = smul.addr %s207, 4
        %s209 = scalar_lea.vmem %s3, %s208
        %s210 = smul.u32 2, %s14
        %v211 = vld [vmem:[%s0] sm:$0xf]
        %v212 = vld [vmem:[%s183] sm:$0xff]
        %v213 = vld [vmem:[%s183 + $0x8] sm:$0xff]
        %v214 = vld [vmem:[%s183 + $0x10] sm:$0xff]
        %v215 = vld [vmem:[%s183 + $0x18] sm:$0xff]
        %v216 = vld [vmem:[%s183 + $0x20] sm:$0xff]
        %v217 = vld [vmem:[%s183 + $0x28] sm:$0xff]
        %v218 = vld [vmem:[%s183 + $0x30] sm:$0xff]
        %v219 = vld [vmem:[%s183 + $0x38] sm:$0xff]
        %v220 = vld [vmem:[%s183 + $0x40] sm:$0xf]
        %v221 = vld [vmem:[%s183 + $0x48] sm:$0xf]
        %v222 = vld [vmem:[%s2] sm:$0xf]
        %224 = vset.pattern.permute.xlu0 0
        %225 = vperm.xlu0 %224, %v222
        %v226 = vpop.permute.xlu0 %225
        %vm228 = vcmask 293888
        %v230 = vsel %vm228, %v211, 0
        %vm232 = vcmask 1043456
        %v234 = vsel %vm232, %v220, 0
        %v237 = vsel %vm232, %v221, 0
        %239 = vmatprep.subr.mxu0 0.0
        %240 = vmatpush1.msra.mxu0 0.0
        %241 = vmatprep.subr.mxu0 0.0
        %242 = vmatpush1.msra.mxu0 0.0
        %243 = vmatprep.subr.mxu0 0.0
        %244 = vmatpush1.msra.mxu0 0.0
        %245 = vmatprep.subr.mxu0 0.0
        %246 = vmatpush1.msra.mxu0 0.0
        %247 = vmatprep.subr.mxu0 0.0
        %248 = vmatpush1.msra.mxu0 0.0
        %249 = vmatprep.subr.mxu0 0.0
        %250 = vmatpush1.msra.mxu0 0.0
        %251 = vmatprep.subr.mxu0 0.0
        %252 = vmatpush1.msra.mxu0 0.0
        %253 = vmatprep.subr.mxu0 0.0
        %254 = vmatpush1.msra.mxu0 0.0
        %255 = vmatprep.subr.mxu0 0.0
        %256 = vmatpush1.msra.mxu0 0.0
        %257 = vmatprep.subr.mxu0 0.0
        %258 = vmatpush1.msra.mxu0 0.0
        %259 = vmatprep.subr.mxu0 0.0
        %260 = vmatpush1.msra.mxu0 0.0
        %261 = vmatprep.subr.mxu0 %v237
        %262 = vmatpush1.msra.mxu0 %v234
        %263 = vmatprep.subr.mxu0 %v219
        %264 = vmatpush1.msra.mxu0 %v218
        %265 = vmatprep.subr.mxu0 %v217
        %266 = vmatpush1.msra.mxu0 %v216
        %267 = vmatprep.subr.mxu0 %v215
        %268 = vmatpush1.msra.mxu0 %v214
        %269 = vmatprep.subr.mxu0 %v213
        %270 = vmatpush1.msra.mxu0 %v212
        %271 = vmatprep.subr.mxu0 0.0
        %272 = vmatpush2.msra.mxu0 0.0
        %273 = vmatprep.subr.mxu0 0.0
        %274 = vmatpush2.msra.mxu0 0.0
        %275 = vmatprep.subr.mxu0 0.0
        %276 = vmatpush2.msra.mxu0 0.0
        %277 = vmatprep.subr.mxu0 0.0
        %278 = vmatpush2.msra.mxu0 0.0
        %279 = vmatprep.subr.mxu0 0.0
        %280 = vmatpush2.msra.mxu0 0.0
        %281 = vmatprep.subr.mxu0 0.0
        %282 = vmatpush2.msra.mxu0 0.0
        %283 = vmatprep.subr.mxu0 0.0
        %284 = vmatpush2.msra.mxu0 0.0
        %285 = vmatprep.subr.mxu0 0.0
        %286 = vmatpush2.msra.mxu0 0.0
        %287 = vmatprep.subr.mxu0 0.0
        %288 = vmatpush2.msra.mxu0 0.0
        %289 = vmatprep.subr.mxu0 0.0
        %290 = vmatpush2.msra.mxu0 0.0
        %291 = vmatprep.subr.mxu0 0.0
        %292 = vmatpush2.msra.mxu0 0.0
        %293 = vmatprep.subr.mxu0 0.0
        %294 = vmatpush2.msra.mxu0 0.0
        %295 = vmatprep.subr.mxu0 0.0
        %296 = vmatpush2.msra.mxu0 0.0
        %297 = vmatprep.subr.mxu0 0.0
        %298 = vmatpush2.msra.mxu0 0.0
        %299 = vmatprep.subr.mxu0 0.0
        %300 = vmatpush2.msra.mxu0 0.0
        %301 = vmatprep.subr.mxu0 0.0
        %302 = vmatpush2.msra.mxu0 0.0
        %303 = vmatprep.mubr.f32.mxu0 0.0
        %304 = vmatmul.mubr.f32.gmra.mxu0 %v230
        %v305 = vpop.f32.mrf.mxu0
        %v306 = vadd.f32 %v226, %v305
        %v307 = vpop.f32.mrf.mxu0
        %v308 = vadd.f32 %v226, %v307
        %309 = vdwg.mxu0
        %v312 = vcombine.low %v306, %v308
        %314 = vst [vmem:[%s209] sm:$0xff] %v312
        %s315 = smul.u32 2, %s14
        %p316 = scmp.lt.s32.totalorder %s315, 3
        %s317 = scalar_select %p316, %s315, 3
        %s318 = smul.addr %s317, 4
        %s319 = scalar_lea.vmem %s3, %s318
        // Predicated region
        $region56: #{ffm_forward.11} parent=50 // pred_check
          %p320 = pneg %p100
        $region57: #{ffm_forward.11} parent=50 // pred_check_branch
          %322 = sbr.rel (%p320) target = $region59
        $region58: #{ffm_forward.11} parent=50 // pred_region
          %s323 = smul.u32 2, %s14
        $region59: #{ffm_forward.11} parent=50 // pred_fallthru
          _
      $region51: #{ffm_forward.11} parent=5 // pred_fallthru
        _
      %p324 = scmp.le.s32.totalorder 2, %s9
      // Predicated region
      $region60: #{ffm_forward.11} parent=5 // pred_check
        %p325 = pneg %p324
      $region61: #{ffm_forward.11} parent=5 // pred_check_branch
        %327 = sbr.rel (%p325) target = $region63
      $region62: #{ffm_forward.11} parent=5 // pred_region
        %s328 = ssub.s32 %s9, 2
        // Predicated region
        $region64: #{ffm_forward.11} parent=62 // pred_check
          %p329 = pneg %p106
        $region65: #{ffm_forward.11} parent=62 // pred_check_branch
          %331 = sbr.rel (%p329) target = $region67
        $region66: #{ffm_forward.11} parent=62 // pred_region
          %s332 = smul.u32 2, %s15
          %p333 = scmp.lt.s32.totalorder %s332, 3
          %s334 = scalar_select %p333, %s332, 3
          %s335 = smul.addr %s334, 4
          %s336 = scalar_lea.vmem %s3, %s335
        $region67: #{ffm_forward.11} parent=62 // pred_fallthru
          _
      $region63: #{ffm_forward.11} parent=5 // pred_fallthru
        _
    $region6: #{ffm_forward.11} parent=1 // loop_footer
      %s13 = sadd.s32 1, %s9
    $region7: #{ffm_forward.11} parent=1 // loop_footer_branch
      %8 = sbr.rel target = $region3
    $region8: #{ffm_forward.11} parent=1 // loop_exit
      _

// kernel: ffm_forward.12
$region0: #{ffm_forward.12}
  #allocation0 [shape = 'u32[]', space=smem, size = 0x4, offset = 0x4, fixed_abs, tag = 'smem constant byte address 0x4 - core index']
  #allocation1 [shape = 'u32[144,128]{1,0:T(1,128)}', space=vmem, size = 0x12000, scoped, tag = 'internal scratch']
  %s0 = inlined_call_operand.vmem [shape: f32[4,4], index: 0, kind: input, shape index: {}]
  %s1 = inlined_call_operand.vmem [shape: f32[4,288], index: 1, kind: input, shape index: {}]
  %s2 = inlined_call_operand.vmem [shape: f32[4,288], index: 2, kind: input, shape index: {}]
  %s3 = inlined_call_operand.vmem [shape: f32[4,1], index: 3, kind: input, shape index: {}]
  %s4 = inlined_call_operand.vmem [shape: f32[4,288], index: 4, kind: output, shape index: {0}]
  %s5 = inlined_call_operand.vmem [shape: f32[4,288], index: 5, kind: output, shape index: {1}]
  %6 = xla_tuple %s4, %s5
  %s7 = sld [smem:[#allocation0]]
  $region181: #{ffm_forward.12} parent=0
    _
  %s9 = ssub.s32 1, %s7
  %s10 = scalar_select 0, %s9, %s7
  $region1: #{ffm_forward.12} parent=0
    #allocation2 [shape = 'u8[8192]{0}', space=vmem, size = 0x2000, scoped, tag = 'output window, operand 0']
    #allocation3 [shape = 'u8[8192]{0}', space=vmem, size = 0x2000, scoped, tag = 'output window, operand 1']
    loop: start=0, step=1, limit=4
    $region2: #{ffm_forward.12} parent=1 // loop_pre_header
      _
    $region3: #{ffm_forward.12} parent=1 // loop_header
      %s12 = sphi 0, %s16
      %p13 = scmp.ge.s32.totalorder %s12, 4
      %s20 = sphi 0, %s20
      %s22 = sphi 0, %s20
      %s23 = sphi 0, %s22
      %s37 = sphi 0, %s23
      %s43 = sphi 0, %s45
      %s46 = sphi 0, %s43
      %s47 = sphi 0, %s46
      %s63 = sphi 0, %s47
      %s69 = sphi 0, %s71
      %s72 = sphi 0, %s69
      %s73 = sphi 0, %s72
      %s89 = sphi 0, %s73
      %s93 = sphi 0, %s93
      %s95 = sphi 0, %s93
      %s96 = sphi 0, %s95
      %s110 = sphi 0, %s96
      %s116 = sphi 0, %s118
      %s119 = sphi 0, %s116
      %s120 = sphi 0, %s119
      %s136 = sphi 0, %s120
      %s142 = sphi 0, %s144
      %s145 = sphi 0, %s142
      %s146 = sphi 0, %s145
      %s162 = sphi 0, %s146
    $region4: #{ffm_forward.12} parent=1 // loop_header_branch
      %15 = sbr.rel (%p13) target = $region8
    $region5: #{ffm_forward.12} parent=1 // loop_body
      %s17 = ssub.s32 %s12, 1
      %s18 = ssub.s32 %s12, 2
      %s19 = sadd.s32 %s12, 1
      %s21 = sadd.s32 %s20, 1
      %p24 = scmp.eq.s32.totalorder %s12, 1
      %p25 = scmp.ne.s32.totalorder %s20, %s22
      %p26 = scmp.eq.s32.totalorder %s12, 0
      %p27 = por %p25, %p26
      %p28 = scmp.ne.s32.totalorder %s20, %s22
      %p29 = scmp.eq.s32.totalorder %s17, 1
      %p30 = por %p28, %p29
      %p31 = scmp.ne.s32.totalorder %s22, %s23
      %p32 = scmp.eq.s32.totalorder %s17, 0
      %p33 = por %p31, %p32
      %p34 = scmp.ne.s32.totalorder %s22, %s23
      %p35 = scmp.eq.s32.totalorder %s18, 1
      %p36 = por %p34, %p35
      %p38 = scmp.ne.s32.totalorder %s23, %s37
      %p39 = scmp.eq.s32.totalorder %s18, 0
      %p40 = por %p38, %p39
      %s41 = ssub.s32 %s12, %s19
      %p42 = scmp.eq.s32.totalorder %s41, 0
      %s44 = sadd.s32 %s43, 1
      %s45 = scalar_select %p42, %s43, %s44
      %p48 = pneg %p42
      %p49 = scmp.eq.s32.totalorder %s12, 1
      %p50 = por %p48, %p49
      %p51 = scmp.ne.s32.totalorder %s43, %s46
      %p52 = scmp.eq.s32.totalorder %s12, 0
      %p53 = por %p51, %p52
      %p54 = scmp.ne.s32.totalorder %s43, %s46
      %p55 = scmp.eq.s32.totalorder %s17, 1
      %p56 = por %p54, %p55
      %p57 = scmp.ne.s32.totalorder %s46, %s47
      %p58 = scmp.eq.s32.totalorder %s17, 0
      %p59 = por %p57, %p58
      %p60 = scmp.ne.s32.totalorder %s46, %s47
      %p61 = scmp.eq.s32.totalorder %s18, 1
      %p62 = por %p60, %p61
      %p64 = scmp.ne.s32.totalorder %s47, %s63
      %p65 = scmp.eq.s32.totalorder %s18, 0
      %p66 = por %p64, %p65
      %s67 = ssub.s32 %s12, %s19
      %p68 = scmp.eq.s32.totalorder %s67, 0
      %s70 = sadd.s32 %s69, 1
      %s71 = scalar_select %p68, %s69, %s70
      %p74 = pneg %p68
      %p75 = scmp.eq.s32.totalorder %s12, 1
      %p76 = por %p74, %p75
      %p77 = scmp.ne.s32.totalorder %s69, %s72
      %p78 = scmp.eq.s32.totalorder %s12, 0
      %p79 = por %p77, %p78
      %p80 = scmp.ne.s32.totalorder %s69, %s72
      %p81 = scmp.eq.s32.totalorder %s17, 1
      %p82 = por %p80, %p81
      %p83 = scmp.ne.s32.totalorder %s72, %s73
      %p84 = scmp.eq.s32.totalorder %s17, 0
      %p85 = por %p83, %p84
      %p86 = scmp.ne.s32.totalorder %s72, %s73
      %p87 = scmp.eq.s32.totalorder %s18, 1
      %p88 = por %p86, %p87
      %p90 = scmp.ne.s32.totalorder %s73, %s89
      %p91 = scmp.eq.s32.totalorder %s18, 0
      %p92 = por %p90, %p91
      %s94 = sadd.s32 %s93, 1
      %p97 = scmp.eq.s32.totalorder %s12, 1
      %p98 = scmp.ne.s32.totalorder %s93, %s95
      %p99 = scmp.eq.s32.totalorder %s12, 0
      %p100 = por %p98, %p99
      %p101 = scmp.ne.s32.totalorder %s93, %s95
      %p102 = scmp.eq.s32.totalorder %s17, 1
      %p103 = por %p101, %p102
      %p104 = scmp.ne.s32.totalorder %s95, %s96
      %p105 = scmp.eq.s32.totalorder %s17, 0
      %p106 = por %p104, %p105
      %p107 = scmp.ne.s32.totalorder %s95, %s96
      %p108 = scmp.eq.s32.totalorder %s18, 1
      %p109 = por %p107, %p108
      %p111 = scmp.ne.s32.totalorder %s96, %s110
      %p112 = scmp.eq.s32.totalorder %s18, 0
      %p113 = por %p111, %p112
      %s114 = ssub.s32 %s12, %s19
      %p115 = scmp.eq.s32.totalorder %s114, 0
      %s117 = sadd.s32 %s116, 1
      %s118 = scalar_select %p115, %s116, %s117
      %p121 = pneg %p115
      %p122 = scmp.eq.s32.totalorder %s12, 1
      %p123 = por %p121, %p122
      %p124 = scmp.ne.s32.totalorder %s116, %s119
      %p125 = scmp.eq.s32.totalorder %s12, 0
      %p126 = por %p124, %p125
      %p127 = scmp.ne.s32.totalorder %s116, %s119
      %p128 = scmp.eq.s32.totalorder %s17, 1
      %p129 = por %p127, %p128
      %p130 = scmp.ne.s32.totalorder %s119, %s120
      %p131 = scmp.eq.s32.totalorder %s17, 0
      %p132 = por %p130, %p131
      %p133 = scmp.ne.s32.totalorder %s119, %s120
      %p134 = scmp.eq.s32.totalorder %s18, 1
      %p135 = por %p133, %p134
      %p137 = scmp.ne.s32.totalorder %s120, %s136
      %p138 = scmp.eq.s32.totalorder %s18, 0
      %p139 = por %p137, %p138
      %s140 = ssub.s32 %s12, %s19
      %p141 = scmp.eq.s32.totalorder %s140, 0
      %s143 = sadd.s32 %s142, 1
      %s144 = scalar_select %p141, %s142, %s143
      %p147 = pneg %p141
      %p148 = scmp.eq.s32.totalorder %s12, 1
      %p149 = por %p147, %p148
      %p150 = scmp.ne.s32.totalorder %s142, %s145
      %p151 = scmp.eq.s32.totalorder %s12, 0
      %p152 = por %p150, %p151
      %p153 = scmp.ne.s32.totalorder %s142, %s145
      %p154 = scmp.eq.s32.totalorder %s17, 1
      %p155 = por %p153, %p154
      %p156 = scmp.ne.s32.totalorder %s145, %s146
      %p157 = scmp.eq.s32.totalorder %s17, 0
      %p158 = por %p156, %p157
      %p159 = scmp.ne.s32.totalorder %s145, %s146
      %p160 = scmp.eq.s32.totalorder %s18, 1
      %p161 = por %p159, %p160
      %p163 = scmp.ne.s32.totalorder %s146, %s162
      %p164 = scmp.eq.s32.totalorder %s18, 0
      %p165 = por %p163, %p164
      %p166 = scmp.le.s32.totalorder 1, %s12
      %p167 = scmp.lt.s32.totalorder %s12, 3
      %p168 = pnand %p166, %p167
      %p169 = pneg %p168
      // Predicated region
      $region9: #{ffm_forward.12} parent=5 // pred_check
        _
      $region10: #{ffm_forward.12} parent=5 // pred_check_branch
        %171 = sbr.rel (%p168) target = $region12
      $region11: #{ffm_forward.12} parent=5 // pred_region
        %s172 = ssub.s32 %s12, 1
        // Predicated region
        $region13: #{ffm_forward.12} parent=11 // pred_check
          %p173 = pneg %p33
        $region14: #{ffm_forward.12} parent=11 // pred_check_branch
          %175 = sbr.rel (%p173) target = $region16
        $region15: #{ffm_forward.12} parent=11 // pred_region
          _
        $region16: #{ffm_forward.12} parent=11 // pred_fallthru
          _
        // Predicated region
        $region17: #{ffm_forward.12} parent=11 // pred_check
          %p176 = pneg %p106
        $region18: #{ffm_forward.12} parent=11 // pred_check_branch
          %178 = sbr.rel (%p176) target = $region20
        $region19: #{ffm_forward.12} parent=11 // pred_region
          _
        $region20: #{ffm_forward.12} parent=11 // pred_fallthru
          _
      $region12: #{ffm_forward.12} parent=5 // pred_fallthru
        _
      %p179 = scmp.lt.s32.totalorder %s12, 2
      // Predicated region
      $region21: #{ffm_forward.12} parent=5 // pred_check
        %p180 = pneg %p179
      $region22: #{ffm_forward.12} parent=5 // pred_check_branch
        %182 = sbr.rel (%p180) target = $region24
      $region23: #{ffm_forward.12} parent=5 // pred_region
        // Predicated region
        $region25: #{ffm_forward.12} parent=23 // pred_check
          %p183 = pneg %p53
        $region26: #{ffm_forward.12} parent=23 // pred_check_branch
          %185 = sbr.rel (%p183) target = $region28
        $region27: #{ffm_forward.12} parent=23 // pred_region
          %s186 = smul.u32 2, %s12
          %s187 = ssub.s32 3, %s186
          %p188 = scmp.lt.s32.totalorder %s187, 2
          %s189 = scalar_select %p188, %s187, 2
          %s190 = smul.u32 64, %s189
          %p191 = scmp.lt.s32.totalorder %s186, 2
          %s192 = scalar_select %p191, %s186, 2
          %s193 = smul.addr %s192, 4
          %s194 = scalar_lea.vmem %s1, %s193
          %s195 = smul.u32 2, %s12
          %s196 = ssub.s32 3, %s195
          %p197 = scmp.lt.s32.totalorder %s196, 2
          %s198 = scalar_select %p197, %s196, 2
          %s199 = smul.u32 64, %s198
        $region28: #{ffm_forward.12} parent=23 // pred_fallthru
          _
        // Predicated region
        $region29: #{ffm_forward.12} parent=23 // pred_check
          %p200 = pneg %p79
        $region30: #{ffm_forward.12} parent=23 // pred_check_branch
          %202 = sbr.rel (%p200) target = $region32
        $region31: #{ffm_forward.12} parent=23 // pred_region
          %s203 = smul.u32 2, %s12
          %s204 = ssub.s32 3, %s203
          %p205 = scmp.lt.s32.totalorder %s204, 2
          %s206 = scalar_select %p205, %s204, 2
          %s207 = smul.u32 64, %s206
          %p208 = scmp.lt.s32.totalorder %s203, 2
          %s209 = scalar_select %p208, %s203, 2
          %s210 = smul.addr %s209, 4
          %s211 = scalar_lea.vmem %s2, %s210
          %s212 = smul.u32 2, %s12
          %s213 = ssub.s32 3, %s212
          %p214 = scmp.lt.s32.totalorder %s213, 2
          %s215 = scalar_select %p214, %s213, 2
          %s216 = smul.u32 64, %s215
        $region32: #{ffm_forward.12} parent=23 // pred_fallthru
          _
      $region24: #{ffm_forward.12} parent=5 // pred_fallthru
        _
      %p217 = scmp.le.s32.totalorder 1, %s12
      %p218 = scmp.lt.s32.totalorder %s12, 3
      %p219 = pnand %p217, %p218
      %p220 = pneg %p219
      // Predicated region
      $region33: #{ffm_forward.12} parent=5 // pred_check
        _
      $region34: #{ffm_forward.12} parent=5 // pred_check_branch
        %222 = sbr.rel (%p219) target = $region36
      $region35: #{ffm_forward.12} parent=5 // pred_region
        %s223 = ssub.s32 %s12, 1
        %p224 = pneg %p33
        %p225 = pneg %p30
        %s226 = smul.u32 2, %s17
        %s227 = ssub.s32 3, %s226
        %p228 = scmp.lt.s32.totalorder %s227, 2
        %s229 = scalar_select %p228, %s227, 2
        %s230 = smul.u32 64, %s229
        %p231 = scmp.lt.s32.totalorder %s226, 2
        %s232 = scalar_select %p231, %s226, 2
        %s233 = smul.addr %s232, 4
        %s234 = scalar_lea.vmem %s1, %s233
        %p235 = pneg %p59
        %p236 = pneg %p56
        %s237 = smul.u32 2, %s17
        %s238 = ssub.s32 3, %s237
        %p239 = scmp.lt.s32.totalorder %s238, 2
        %s240 = scalar_select %p239, %s238, 2
        %s241 = smul.u32 64, %s240
        %p242 = scmp.lt.s32.totalorder %s237, 2
        %s243 = scalar_select %p242, %s237, 2
        %s244 = smul.addr %s243, 4
        %s245 = scalar_lea.vmem %s2, %s244
        %p246 = pneg %p85
        %p247 = pneg %p82
        %p248 = pneg %p106
        %p249 = pneg %p103
        %p250 = pneg %p132
        %p251 = pneg %p129
        %s252 = sand.u32 %s119, 1
        %s253 = sand.u32 %s119, 1
        %s254 = smul.addr %s253, 8
        %s255 = scalar_lea.vmem [#allocation2], %s254
        %p256 = pneg %p158
        %p257 = pneg %p155
        %s258 = sand.u32 %s145, 1
        %s259 = sand.u32 %s145, 1
        %s260 = smul.addr %s259, 8
        %s261 = scalar_lea.vmem [#allocation3], %s260
        %s262 = smul.u32 2, %s17
        %s263 = ssub.s32 3, %s262
        %p264 = scmp.lt.s32.totalorder %s263, 2
        %s265 = scalar_select %p264, %s263, 2
        %s266 = smul.u32 64, %s265
        %p267 = scmp.lt.s32.totalorder %s262, 2
        %s268 = scalar_select %p267, %s262, 2
        %s269 = smul.addr %s268, 4
        %s270 = scalar_lea.vmem %s1, %s269
        %s271 = smul.u32 2, %s17
        %s272 = ssub.s32 3, %s271
        %p273 = scmp.lt.s32.totalorder %s272, 2
        %s274 = scalar_select %p273, %s272, 2
        %s275 = smul.u32 64, %s274
        %s276 = smul.u32 2, %s17
        %s277 = ssub.s32 3, %s276
        %p278 = scmp.lt.s32.totalorder %s277, 2
        %s279 = scalar_select %p278, %s277, 2
        %s280 = smul.u32 64, %s279
        %p281 = scmp.lt.s32.totalorder %s276, 2
        %s282 = scalar_select %p281, %s276, 2
        %s283 = smul.addr %s282, 4
        %s284 = scalar_lea.vmem %s2, %s283
        %s285 = smul.u32 2, %s17
        %s286 = ssub.s32 3, %s285
        %p287 = scmp.lt.s32.totalorder %s286, 2
        %s288 = scalar_select %p287, %s286, 2
        %s289 = smul.u32 64, %s288
        %s290 = smul.u32 2, %s17
        %s291 = ssub.s32 3, %s290
        %p292 = scmp.lt.s32.totalorder %s291, 2
        %s293 = scalar_select %p292, %s291, 2
        %s294 = smul.u32 64, %s293
        %s295 = smul.u32 2, %s17
        %s296 = ssub.s32 3, %s295
        %p297 = scmp.lt.s32.totalorder %s296, 2
        %s298 = scalar_select %p297, %s296, 2
        %s299 = smul.u32 64, %s298
        %v300 = vld [vmem:[%s0] sm:$0xf]
        %v301 = vld [vmem:[%s3] sm:$0xf]
        %v302 = vld [vmem:[%s270] sm:$0xff]
        %304 = vset.pattern.permute.xlu0 0
        %305 = vperm.xlu0 %304, %v301
        %v306 = vpop.permute.xlu0 %305
        %v309 = vcombine.high %v302, %v302
        %vm310 = vcmask 31744
        %v312 = vsel %vm310, %v300, 0
        %vm314 = vcmask 1043456
        %v315 = vsel %vm314, %v302, 0
        %v317 = vsel %vm314, %v309, 0
        %319 = vmatprep.subr.mxu0 0.0
        %320 = vmatpush1.msra.mxu0 0.0
        %321 = vmatprep.subr.mxu0 0.0
        %322 = vmatpush1.msra.mxu0 0.0
        %323 = vmatprep.subr.mxu0 0.0
        %324 = vmatpush1.msra.mxu0 0.0
        %325 = vmatprep.subr.mxu0 0.0
        %326 = vmatpush1.msra.mxu0 0.0
        %327 = vmatprep.subr.mxu0 0.0
        %328 = vmatpush1.msra.mxu0 0.0
        %329 = vmatprep.subr.mxu0 0.0
        %330 = vmatpush1.msra.mxu0 0.0
        %331 = vmatprep.subr.mxu0 0.0
        %332 = vmatpush1.msra.mxu0 0.0
        %333 = vmatprep.subr.mxu0 0.0
        %334 = vmatpush1.msra.mxu0 0.0
        %335 = vmatprep.subr.mxu0 0.0
        %336 = vmatpush1.msra.mxu0 0.0
        %337 = vmatprep.subr.mxu0 0.0
        %338 = vmatpush1.msra.mxu0 0.0
        %339 = vmatprep.subr.mxu0 0.0
        %340 = vmatpush1.msra.mxu0 0.0
        %341 = vmatprep.subr.mxu0 0.0
        %342 = vmatpush1.msra.mxu0 0.0
        %343 = vmatprep.subr.mxu0 0.0
        %344 = vmatpush1.msra.mxu0 0.0
        %345 = vmatprep.subr.mxu0 0.0
        %346 = vmatpush1.msra.mxu0 0.0
        %347 = vmatprep.subr.mxu0 0.0
        %348 = vmatpush1.msra.mxu0 0.0
        %349 = vmatprep.subr.mxu0 %v317
        %350 = vmatpush1.msra.mxu0 %v315
        %351 = vmatprep.subr.mxu0 0.0
        %352 = vmatpush2.msra.mxu0 0.0
        %353 = vmatprep.subr.mxu0 0.0
        %354 = vmatpush2.msra.mxu0 0.0
        %355 = vmatprep.subr.mxu0 0.0
        %356 = vmatpush2.msra.mxu0 0.0
        %357 = vmatprep.subr.mxu0 0.0
        %358 = vmatpush2.msra.mxu0 0.0
        %359 = vmatprep.subr.mxu0 0.0
        %360 = vmatpush2.msra.mxu0 0.0
        %361 = vmatprep.subr.mxu0 0.0
        %362 = vmatpush2.msra.mxu0 0.0
        %363 = vmatprep.subr.mxu0 0.0
        %364 = vmatpush2.msra.mxu0 0.0
        %365 = vmatprep.subr.mxu0 0.0
        %366 = vmatpush2.msra.mxu0 0.0
        %367 = vmatprep.subr.mxu0 0.0
        %368 = vmatpush2.msra.mxu0 0.0
        %369 = vmatprep.subr.mxu0 0.0
        %370 = vmatpush2.msra.mxu0 0.0
        %371 = vmatprep.subr.mxu0 0.0
        %372 = vmatpush2.msra.mxu0 0.0
        %373 = vmatprep.subr.mxu0 0.0
        %374 = vmatpush2.msra.mxu0 0.0
        %375 = vmatprep.subr.mxu0 0.0
        %376 = vmatpush2.msra.mxu0 0.0
        %377 = vmatprep.subr.mxu0 0.0
        %378 = vmatpush2.msra.mxu0 0.0
        %379 = vmatprep.subr.mxu0 0.0
        %380 = vmatpush2.msra.mxu0 0.0
        %381 = vmatprep.subr.mxu0 0.0
        %382 = vmatpush2.msra.mxu0 0.0
        %383 = vmatprep.mubr.f32.mxu0 0.0
        %384 = vmatmul.mubr.f32.gmra.mxu0 %v312
        %v385 = vpop.f32.mrf.mxu0
        %v386 = vadd.f32 %v306, %v385
        %v387 = vpop.f32.mrf.mxu0
        %v388 = vadd.f32 %v306, %v387
        %389 = vdwg.mxu0
        %v392 = vcombine.low %v386, %v388
        %394 = vst [vmem:[%s255] sm:$0xff] %v392
        %v395 = vld [vmem:[%s284] sm:$0xff]
        %v397 = vcombine.high %v395, %v395
        %v398 = vsel %vm314, %v395, 0
        %v400 = vsel %vm314, %v397, 0
        %402 = vmatprep.subr.mxu0 0.0
        %403 = vmatpush1.msra.mxu0 0.0
        %404 = vmatprep.subr.mxu0 0.0
        %405 = vmatpush1.msra.mxu0 0.0
        %406 = vmatprep.subr.mxu0 0.0
        %407 = vmatpush1.msra.mxu0 0.0
        %408 = vmatprep.subr.mxu0 0.0
        %409 = vmatpush1.msra.mxu0 0.0
        %410 = vmatprep.subr.mxu0 0.0
        %411 = vmatpush1.msra.mxu0 0.0
        %412 = vmatprep.subr.mxu0 0.0
        %413 = vmatpush1.msra.mxu0 0.0
        %414 = vmatprep.subr.mxu0 0.0
        %415 = vmatpush1.msra.mxu0 0.0
        %416 = vmatprep.subr.mxu0 0.0
        %417 = vmatpush1.msra.mxu0 0.0
        %418 = vmatprep.subr.mxu0 0.0
        %419 = vmatpush1.msra.mxu0 0.0
        %420 = vmatprep.subr.mxu0 0.0
        %421 = vmatpush1.msra.mxu0 0.0
        %422 = vmatprep.subr.mxu0 0.0
        %423 = vmatpush1.msra.mxu0 0.0
        %424 = vmatprep.subr.mxu0 0.0
        %425 = vmatpush1.msra.mxu0 0.0
        %426 = vmatprep.subr.mxu0 0.0
        %427 = vmatpush1.msra.mxu0 0.0
        %428 = vmatprep.subr.mxu0 0.0
        %429 = vmatpush1.msra.mxu0 0.0
        %430 = vmatprep.subr.mxu0 0.0
        %431 = vmatpush1.msra.mxu0 0.0
        %432 = vmatprep.subr.mxu0 %v400
        %433 = vmatpush1.msra.mxu0 %v398
        %434 = vmatprep.subr.mxu0 0.0
        %435 = vmatpush2.msra.mxu0 0.0
        %436 = vmatprep.subr.mxu0 0.0
        %437 = vmatpush2.msra.mxu0 0.0
        %438 = vmatprep.subr.mxu0 0.0
        %439 = vmatpush2.msra.mxu0 0.0
        %440 = vmatprep.subr.mxu0 0.0
        %441 = vmatpush2.msra.mxu0 0.0
        %442 = vmatprep.subr.mxu0 0.0
        %443 = vmatpush2.msra.mxu0 0.0
        %444 = vmatprep.subr.mxu0 0.0
        %445 = vmatpush2.msra.mxu0 0.0
        %446 = vmatprep.subr.mxu0 0.0
        %447 = vmatpush2.msra.mxu0 0.0
        %448 = vmatprep.subr.mxu0 0.0
        %449 = vmatpush2.msra.mxu0 0.0
        %450 = vmatprep.subr.mxu0 0.0
        %451 = vmatpush2.msra.mxu0 0.0
        %452 = vmatprep.subr.mxu0 0.0
        %453 = vmatpush2.msra.mxu0 0.0
        %454 = vmatprep.subr.mxu0 0.0
        %455 = vmatpush2.msra.mxu0 0.0
        %456 = vmatprep.subr.mxu0 0.0
        %457 = vmatpush2.msra.mxu0 0.0
        %458 = vmatprep.subr.mxu0 0.0
        %459 = vmatpush2.msra.mxu0 0.0
        %460 = vmatprep.subr.mxu0 0.0
        %461 = vmatpush2.msra.mxu0 0.0
        %462 = vmatprep.subr.mxu0 0.0
        %463 = vmatpush2.msra.mxu0 0.0
        %464 = vmatprep.subr.mxu0 0.0
        %465 = vmatpush2.msra.mxu0 0.0
        %466 = vmatprep.mubr.f32.mxu0 0.0
        %467 = vmatmul.mubr.f32.gmra.mxu0 %v312
        %v468 = vpop.f32.mrf.mxu0
        %v469 = vadd.f32 %v306, %v468
        %v470 = vpop.f32.mrf.mxu0
        %v471 = vadd.f32 %v306, %v470
        %472 = vdwg.mxu0
        %v475 = vcombine.low %v469, %v471
        %477 = vst [vmem:[%s261] sm:$0xff] %v475
        %s478 = sand.u32 %s119, 1
        %s479 = sand.u32 %s119, 1
        %s480 = smul.addr %s479, 8
        %s481 = scalar_lea.vmem [#allocation2], %s480
        %s482 = sand.u32 %s145, 1
        %s483 = sand.u32 %s145, 1
        %s484 = smul.addr %s483, 8
        %s485 = scalar_lea.vmem [#allocation3], %s484
        // Predicated region
        $region37: #{ffm_forward.12} parent=35 // pred_check
          %p486 = pneg %p129
        $region38: #{ffm_forward.12} parent=35 // pred_check_branch
          %488 = sbr.rel (%p486) target = $region40
        $region39: #{ffm_forward.12} parent=35 // pred_region
          %s489 = smul.u32 2, %s17
          %s490 = ssub.s32 3, %s489
          %p491 = scmp.lt.s32.totalorder %s490, 2
          %s492 = scalar_select %p491, %s490, 2
          %s493 = smul.u32 64, %s492
          %p494 = scmp.ne.s32.totalorder 0, %s493
          %s495 = smul.addr %s489, 4
          %s496 = scalar_lea.vmem %s4, %s495
          %s497 = smul.u32 %s492, 4
          // Predicated region
          $region41: #{ffm_forward.12} parent=39 // pred_check
            %p498 = pneg %p494
          $region42: #{ffm_forward.12} parent=39 // pred_check_branch
            %500 = sbr.rel (%p498) target = $region44
          $region43: #{ffm_forward.12} parent=39 // pred_region
            %p501 = scmp.lt.u32.totalorder %s497, 8
            %p502 = pneg %p501
            // Predicated region
            $region45: #{ffm_forward.12} parent=43 // pred_check
              _
            $region46: #{ffm_forward.12} parent=43 // pred_check_branch
              %504 = sbr.rel (%p501) target = $region48
            $region47: #{ffm_forward.12} parent=43 // pred_region
              %s520 = sand.u32 %s497, 7
              %p521 = scmp.eq.s32.totalorder %s520, 0
              // Predicated region
              $region60: #{ffm_forward.12} parent=47 // pred_check
                %p522 = pneg %p521
              $region61: #{ffm_forward.12} parent=47 // pred_check_branch
                %524 = sbr.rel (%p522) target = $region63
              $region62: #{ffm_forward.12} parent=47 // pred_region
                %s525 = sshrl.u32 %s497, 3
                %s526 = sshrl.u32 %s525, 6
                // While loop
                $region64: #{ffm_forward.12} parent=62 // loop_pre_header
                  _
                $region65: #{ffm_forward.12} parent=62 // loop_header
                  %s530 = sphi 0, %s532
                  %p531 = scmp.ge.s32.totalorder %s530, %s526
                  %s535 = sphi 0, %s668
                  %s536 = sphi %s481, %s671
                  %s537 = sphi %s496, %s672
                $region66: #{ffm_forward.12} parent=62 // loop_header_branch
                  %534 = sbr.rel (%p531) target = $region70
                $region67: #{ffm_forward.12} parent=62 // loop_body
                  %v538 = vld [vmem:[%s536] sm:$0xff]
                  %539 = vst [vmem:[%s537] sm:$0xff] %v538
                  %v540 = vld [vmem:[%s536 + $0x8] sm:$0xff]
                  %541 = vst [vmem:[%s537 + $0x8] sm:$0xff] %v540
                  %v542 = vld [vmem:[%s536 + $0x10] sm:$0xff]
                  %543 = vst [vmem:[%s537 + $0x10] sm:$0xff] %v542
                  %v544 = vld [vmem:[%s536 + $0x18] sm:$0xff]
                  %545 = vst [vmem:[%s537 + $0x18] sm:$0xff] %v544
                  %v546 = vld [vmem:[%s536 + $0x20] sm:$0xff]
                  %547 = vst [vmem:[%s537 + $0x20] sm:$0xff] %v546
                  %v548 = vld [vmem:[%s536 + $0x28] sm:$0xff]
                  %549 = vst [vmem:[%s537 + $0x28] sm:$0xff] %v548
                  %v550 = vld [vmem:[%s536 + $0x30] sm:$0xff]
                  %551 = vst [vmem:[%s537 + $0x30] sm:$0xff] %v550
                  %v552 = vld [vmem:[%s536 + $0x38] sm:$0xff]
                  %553 = vst [vmem:[%s537 + $0x38] sm:$0xff] %v552
                  %v554 = vld [vmem:[%s536 + $0x40] sm:$0xff]
                  %555 = vst [vmem:[%s537 + $0x40] sm:$0xff] %v554
                  %v556 = vld [vmem:[%s536 + $0x48] sm:$0xff]
                  %557 = vst [vmem:[%s537 + $0x48] sm:$0xff] %v556
                  %v558 = vld [vmem:[%s536 + $0x50] sm:$0xff]
                  %559 = vst [vmem:[%s537 + $0x50] sm:$0xff] %v558
                  %v560 = vld [vmem:[%s536 + $0x58] sm:$0xff]
                  %561 = vst [vmem:[%s537 + $0x58] sm:$0xff] %v560
                  %v562 = vld [vmem:[%s536 + $0x60] sm:$0xff]
                  %563 = vst [vmem:[%s537 + $0x60] sm:$0xff] %v562
                  %v564 = vld [vmem:[%s536 + $0x68] sm:$0xff]
                  %565 = vst [vmem:[%s537 + $0x68] sm:$0xff] %v564
                  %v566 = vld [vmem:[%s536 + $0x70] sm:$0xff]
                  %567 = vst [vmem:[%s537 + $0x70] sm:$0xff] %v566
                  %v568 = vld [vmem:[%s536 + $0x78] sm:$0xff]
                  %569 = vst [vmem:[%s537 + $0x78] sm:$0xff] %v568
                  %v570 = vld [vmem:[%s536 + $0x80] sm:$0xff]
                  %571 = vst [vmem:[%s537 + $0x80] sm:$0xff] %v570
                  %v572 = vld [vmem:[%s536 + $0x88] sm:$0xff]
                  %573 = vst [vmem:[%s537 + $0x88] sm:$0xff] %v572
                  %v574 = vld [vmem:[%s536 + $0x90] sm:$0xff]
                  %575 = vst [vmem:[%s537 + $0x90] sm:$0xff] %v574
                  %v576 = vld [vmem:[%s536 + $0x98] sm:$0xff]
                  %577 = vst [vmem:[%s537 + $0x98] sm:$0xff] %v576
                  %v578 = vld [vmem:[%s536 + $0xa0] sm:$0xff]
                  %579 = vst [vmem:[%s537 + $0xa0] sm:$0xff] %v578
                  %v580 = vld [vmem:[%s536 + $0xa8] sm:$0xff]
                  %581 = vst [vmem:[%s537 + $0xa8] sm:$0xff] %v580
                  %v582 = vld [vmem:[%s536 + $0xb0] sm:$0xff]
                  %583 = vst [vmem:[%s537 + $0xb0] sm:$0xff] %v582
                  %v584 = vld [vmem:[%s536 + $0xb8] sm:$0xff]
                  %585 = vst [vmem:[%s537 + $0xb8] sm:$0xff] %v584
                  %v586 = vld [vmem:[%s536 + $0xc0] sm:$0xff]
                  %587 = vst [vmem:[%s537 + $0xc0] sm:$0xff] %v586
                  %v588 = vld [vmem:[%s536 + $0xc8] sm:$0xff]
                  %589 = vst [vmem:[%s537 + $0xc8] sm:$0xff] %v588
                  %v590 = vld [vmem:[%s536 + $0xd0] sm:$0xff]
                  %591 = vst [vmem:[%s537 + $0xd0] sm:$0xff] %v590
                  %v592 = vld [vmem:[%s536 + $0xd8] sm:$0xff]
                  %593 = vst [vmem:[%s537 + $0xd8] sm:$0xff] %v592
                  %v594 = vld [vmem:[%s536 + $0xe0] sm:$0xff]
                  %595 = vst [vmem:[%s537 + $0xe0] sm:$0xff] %v594
                  %v596 = vld [vmem:[%s536 + $0xe8] sm:$0xff]
                  %597 = vst [vmem:[%s537 + $0xe8] sm:$0xff] %v596
                  %v598 = vld [vmem:[%s536 + $0xf0] sm:$0xff]
                  %599 = vst [vmem:[%s537 + $0xf0] sm:$0xff] %v598
                  %v600 = vld [vmem:[%s536 + $0xf8] sm:$0xff]
                  %601 = vst [vmem:[%s537 + $0xf8] sm:$0xff] %v600
                  %v602 = vld [vmem:[%s536 + $0x100] sm:$0xff]
                  %603 = vst [vmem:[%s537 + $0x100] sm:$0xff] %v602
                  %v604 = vld [vmem:[%s536 + $0x108] sm:$0xff]
                  %605 = vst [vmem:[%s537 + $0x108] sm:$0xff] %v604
                  %v606 = vld [vmem:[%s536 + $0x110] sm:$0xff]
                  %607 = vst [vmem:[%s537 + $0x110] sm:$0xff] %v606
                  %v608 = vld [vmem:[%s536 + $0x118] sm:$0xff]
                  %609 = vst [vmem:[%s537 + $0x118] sm:$0xff] %v608
                  %v610 = vld [vmem:[%s536 + $0x120] sm:$0xff]
                  %611 = vst [vmem:[%s537 + $0x120] sm:$0xff] %v610
                  %v612 = vld [vmem:[%s536 + $0x128] sm:$0xff]
                  %613 = vst [vmem:[%s537 + $0x128] sm:$0xff] %v612
                  %v614 = vld [vmem:[%s536 + $0x130] sm:$0xff]
                  %615 = vst [vmem:[%s537 + $0x130] sm:$0xff] %v614
                  %v616 = vld [vmem:[%s536 + $0x138] sm:$0xff]
                  %617 = vst [vmem:[%s537 + $0x138] sm:$0xff] %v616
                  %v618 = vld [vmem:[%s536 + $0x140] sm:$0xff]
                  %619 = vst [vmem:[%s537 + $0x140] sm:$0xff] %v618
                  %v620 = vld [vmem:[%s536 + $0x148] sm:$0xff]
                  %621 = vst [vmem:[%s537 + $0x148] sm:$0xff] %v620
                  %v622 = vld [vmem:[%s536 + $0x150] sm:$0xff]
                  %623 = vst [vmem:[%s537 + $0x150] sm:$0xff] %v622
                  %v624 = vld [vmem:[%s536 + $0x158] sm:$0xff]
                  %625 = vst [vmem:[%s537 + $0x158] sm:$0xff] %v624
                  %v626 = vld [vmem:[%s536 + $0x160] sm:$0xff]
                  %627 = vst [vmem:[%s537 + $0x160] sm:$0xff] %v626
                  %v628 = vld [vmem:[%s536 + $0x168] sm:$0xff]
                  %629 = vst [vmem:[%s537 + $0x168] sm:$0xff] %v628
                  %v630 = vld [vmem:[%s536 + $0x170] sm:$0xff]
                  %631 = vst [vmem:[%s537 + $0x170] sm:$0xff] %v630
                  %v632 = vld [vmem:[%s536 + $0x178] sm:$0xff]
                  %633 = vst [vmem:[%s537 + $0x178] sm:$0xff] %v632
                  %v634 = vld [vmem:[%s536 + $0x180] sm:$0xff]
                  %635 = vst [vmem:[%s537 + $0x180] sm:$0xff] %v634
                  %v636 = vld [vmem:[%s536 + $0x188] sm:$0xff]
                  %637 = vst [vmem:[%s537 + $0x188] sm:$0xff] %v636
                  %v638 = vld [vmem:[%s536 + $0x190] sm:$0xff]
                  %639 = vst [vmem:[%s537 + $0x190] sm:$0xff] %v638
                  %v640 = vld [vmem:[%s536 + $0x198] sm:$0xff]
                  %641 = vst [vmem:[%s537 + $0x198] sm:$0xff] %v640
                  %v642 = vld [vmem:[%s536 + $0x1a0] sm:$0xff]
                  %643 = vst [vmem:[%s537 + $0x1a0] sm:$0xff] %v642
                  %v644 = vld [vmem:[%s536 + $0x1a8] sm:$0xff]
                  %645 = vst [vmem:[%s537 + $0x1a8] sm:$0xff] %v644
                  %v646 = vld [vmem:[%s536 + $0x1b0] sm:$0xff]
                  %647 = vst [vmem:[%s537 + $0x1b0] sm:$0xff] %v646
                  %v648 = vld [vmem:[%s536 + $0x1b8] sm:$0xff]
                  %649 = vst [vmem:[%s537 + $0x1b8] sm:$0xff] %v648
                  %v650 = vld [vmem:[%s536 + $0x1c0] sm:$0xff]
                  %651 = vst [vmem:[%s537 + $0x1c0] sm:$0xff] %v650
                  %v652 = vld [vmem:[%s536 + $0x1c8] sm:$0xff]
                  %653 = vst [vmem:[%s537 + $0x1c8] sm:$0xff] %v652
                  %v654 = vld [vmem:[%s536 + $0x1d0] sm:$0xff]
                  %655 = vst [vmem:[%s537 + $0x1d0] sm:$0xff] %v654
                  %v656 = vld [vmem:[%s536 + $0x1d8] sm:$0xff]
                  %657 = vst [vmem:[%s537 + $0x1d8] sm:$0xff] %v656
                  %v658 = vld [vmem:[%s536 + $0x1e0] sm:$0xff]
                  %659 = vst [vmem:[%s537 + $0x1e0] sm:$0xff] %v658
                  %v660 = vld [vmem:[%s536 + $0x1e8] sm:$0xff]
                  %661 = vst [vmem:[%s537 + $0x1e8] sm:$0xff] %v660
                  %v662 = vld [vmem:[%s536 + $0x1f0] sm:$0xff]
                  %663 = vst [vmem:[%s537 + $0x1f0] sm:$0xff] %v662
                  %v664 = vld [vmem:[%s536 + $0x1f8] sm:$0xff]
                  %665 = vst [vmem:[%s537 + $0x1f8] sm:$0xff] %v664
                  %s666 = sadd.s32 1, %s535
                  %p667 = scmp.ge.s32.totalorder %s666, %s526
                  %s668 = scalar_select %p667, 0, %s666
                  %s669 = smul.u32 %s668, 512
                  %s670 = smul.u32 %s668, 512
                  %s671 = scalar_lea.vmem %s481, %s669 [#allocation2]
                  %s672 = scalar_lea.vmem %s496, %s670
                $region68: #{ffm_forward.12} parent=62 // loop_footer
                  %s532 = sadd.s32 %s530, 1
                $region69: #{ffm_forward.12} parent=62 // loop_footer_branch
                  %529 = sbr.rel target = $region65
                $region70: #{ffm_forward.12} parent=62 // loop_exit
                  _
                %s673 = sshrl.u32 %s525, 6
                %s674 = sand.u32 %s525, 63
                %s675 = smul.u32 %s673, 64
                %s676 = smul.u32 128, %s675
                %s677 = sshra.s32 %s676, 4
                %s678 = scalar_lea.vmem %s481, %s677 [#allocation2]
                %s679 = smul.u32 128, %s675
                %s680 = sshra.s32 %s679, 4
                %s681 = scalar_lea.vmem %s496, %s680
                // While loop
                $region71: #{ffm_forward.12} parent=62 // loop_pre_header
                  _
                $region72: #{ffm_forward.12} parent=62 // loop_header
                  %s685 = sphi 0, %s687
                  %p686 = scmp.ge.s32.totalorder %s685, %s674
                  %s690 = sphi 0, %s697
                  %s691 = sphi %s678, %s700
                  %s692 = sphi %s681, %s701
                $region73: #{ffm_forward.12} parent=62 // loop_header_branch
                  %689 = sbr.rel (%p686) target = $region77
                $region74: #{ffm_forward.12} parent=62 // loop_body
                  %v693 = vld [vmem:[%s691] sm:$0xff]
                  %694 = vst [vmem:[%s692] sm:$0xff] %v693
                  %s695 = sadd.s32 1, %s690
                  %p696 = scmp.ge.s32.totalorder %s695, %s674
                  %s697 = scalar_select %p696, 0, %s695
                  %s698 = smul.u32 %s697, 8
                  %s699 = smul.u32 %s697, 8
                  %s700 = scalar_lea.vmem %s678, %s698 [#allocation2]
                  %s701 = scalar_lea.vmem %s681, %s699
                $region75: #{ffm_forward.12} parent=62 // loop_footer
                  %s687 = sadd.s32 %s685, 1
                $region76: #{ffm_forward.12} parent=62 // loop_footer_branch
                  %684 = sbr.rel target = $region72
                $region77: #{ffm_forward.12} parent=62 // loop_exit
                  _
              $region63: #{ffm_forward.12} parent=47 // pred_fallthru
                _
              %p702 = pneg %p521
              // Predicated region
              $region78: #{ffm_forward.12} parent=47 // pred_check
                _
              $region79: #{ffm_forward.12} parent=47 // pred_check_branch
                %704 = sbr.rel (%p521) target = $region81
              $region80: #{ffm_forward.12} parent=47 // pred_region
                %s705 = sand.u32 %s497, 7
                %s706 = ssub.s32 %s497, %s705
                %s707 = scalar_lea.vmem %s481, %s706 [#allocation2]
                %s708 = ssub.s32 %s497, %s705
                %s709 = scalar_lea.vmem %s496, %s708
                %s710 = sshrl.u32 %s497, 3
                %s711 = sshrl.u32 %s710, 6
                // While loop
                $region82: #{ffm_forward.12} parent=80 // loop_pre_header
                  _
                $region83: #{ffm_forward.12} parent=80 // loop_header
                  %s715 = sphi 0, %s717
                  %p716 = scmp.ge.s32.totalorder %s715, %s711
                  %s720 = sphi 0, %s853
                  %s721 = sphi %s481, %s856
                  %s722 = sphi %s496, %s857
                $region84: #{ffm_forward.12} parent=80 // loop_header_branch
                  %719 = sbr.rel (%p716) target = $region88
                $region85: #{ffm_forward.12} parent=80 // loop_body
                  %v723 = vld [vmem:[%s721] sm:$0xff]
                  %724 = vst [vmem:[%s722] sm:$0xff] %v723
                  %v725 = vld [vmem:[%s721 + $0x8] sm:$0xff]
                  %726 = vst [vmem:[%s722 + $0x8] sm:$0xff] %v725
                  %v727 = vld [vmem:[%s721 + $0x10] sm:$0xff]
                  %728 = vst [vmem:[%s722 + $0x10] sm:$0xff] %v727
                  %v729 = vld [vmem:[%s721 + $0x18] sm:$0xff]
                  %730 = vst [vmem:[%s722 + $0x18] sm:$0xff] %v729
                  %v731 = vld [vmem:[%s721 + $0x20] sm:$0xff]
                  %732 = vst [vmem:[%s722 + $0x20] sm:$0xff] %v731
                  %v733 = vld [vmem:[%s721 + $0x28] sm:$0xff]
                  %734 = vst [vmem:[%s722 + $0x28] sm:$0xff] %v733
                  %v735 = vld [vmem:[%s721 + $0x30] sm:$0xff]
                  %736 = vst [vmem:[%s722 + $0x30] sm:$0xff] %v735
                  %v737 = vld [vmem:[%s721 + $0x38] sm:$0xff]
                  %738 = vst [vmem:[%s722 + $0x38] sm:$0xff] %v737
                  %v739 = vld [vmem:[%s721 + $0x40] sm:$0xff]
                  %740 = vst [vmem:[%s722 + $0x40] sm:$0xff] %v739
                  %v741 = vld [vmem:[%s721 + $0x48] sm:$0xff]
                  %742 = vst [vmem:[%s722 + $0x48] sm:$0xff] %v741
                  %v743 = vld [vmem:[%s721 + $0x50] sm:$0xff]
                  %744 = vst [vmem:[%s722 + $0x50] sm:$0xff] %v743
                  %v745 = vld [vmem:[%s721 + $0x58] sm:$0xff]
                  %746 = vst [vmem:[%s722 + $0x58] sm:$0xff] %v745
                  %v747 = vld [vmem:[%s721 + $0x60] sm:$0xff]
                  %748 = vst [vmem:[%s722 + $0x60] sm:$0xff] %v747
                  %v749 = vld [vmem:[%s721 + $0x68] sm:$0xff]
                  %750 = vst [vmem:[%s722 + $0x68] sm:$0xff] %v749
                  %v751 = vld [vmem:[%s721 + $0x70] sm:$0xff]
                  %752 = vst [vmem:[%s722 + $0x70] sm:$0xff] %v751
                  %v753 = vld [vmem:[%s721 + $0x78] sm:$0xff]
                  %754 = vst [vmem:[%s722 + $0x78] sm:$0xff] %v753
                  %v755 = vld [vmem:[%s721 + $0x80] sm:$0xff]
                  %756 = vst [vmem:[%s722 + $0x80] sm:$0xff] %v755
                  %v757 = vld [vmem:[%s721 + $0x88] sm:$0xff]
                  %758 = vst [vmem:[%s722 + $0x88] sm:$0xff] %v757
                  %v759 = vld [vmem:[%s721 + $0x90] sm:$0xff]
                  %760 = vst [vmem:[%s722 + $0x90] sm:$0xff] %v759
                  %v761 = vld [vmem:[%s721 + $0x98] sm:$0xff]
                  %762 = vst [vmem:[%s722 + $0x98] sm:$0xff] %v761
                  %v763 = vld [vmem:[%s721 + $0xa0] sm:$0xff]
                  %764 = vst [vmem:[%s722 + $0xa0] sm:$0xff] %v763
                  %v765 = vld [vmem:[%s721 + $0xa8] sm:$0xff]
                  %766 = vst [vmem:[%s722 + $0xa8] sm:$0xff] %v765
                  %v767 = vld [vmem:[%s721 + $0xb0] sm:$0xff]
                  %768 = vst [vmem:[%s722 + $0xb0] sm:$0xff] %v767
                  %v769 = vld [vmem:[%s721 + $0xb8] sm:$0xff]
                  %770 = vst [vmem:[%s722 + $0xb8] sm:$0xff] %v769
                  %v771 = vld [vmem:[%s721 + $0xc0] sm:$0xff]
                  %772 = vst [vmem:[%s722 + $0xc0] sm:$0xff] %v771
                  %v773 = vld [vmem:[%s721 + $0xc8] sm:$0xff]
                  %774 = vst [vmem:[%s722 + $0xc8] sm:$0xff] %v773
                  %v775 = vld [vmem:[%s721 + $0xd0] sm:$0xff]
                  %776 = vst [vmem:[%s722 + $0xd0] sm:$0xff] %v775
                  %v777 = vld [vmem:[%s721 + $0xd8] sm:$0xff]
                  %778 = vst [vmem:[%s722 + $0xd8] sm:$0xff] %v777
                  %v779 = vld [vmem:[%s721 + $0xe0] sm:$0xff]
                  %780 = vst [vmem:[%s722 + $0xe0] sm:$0xff] %v779
                  %v781 = vld [vmem:[%s721 + $0xe8] sm:$0xff]
                  %782 = vst [vmem:[%s722 + $0xe8] sm:$0xff] %v781
                  %v783 = vld [vmem:[%s721 + $0xf0] sm:$0xff]
                  %784 = vst [vmem:[%s722 + $0xf0] sm:$0xff] %v783
                  %v785 = vld [vmem:[%s721 + $0xf8] sm:$0xff]
                  %786 = vst [vmem:[%s722 + $0xf8] sm:$0xff] %v785
                  %v787 = vld [vmem:[%s721 + $0x100] sm:$0xff]
                  %788 = vst [vmem:[%s722 + $0x100] sm:$0xff] %v787
                  %v789 = vld [vmem:[%s721 + $0x108] sm:$0xff]
                  %790 = vst [vmem:[%s722 + $0x108] sm:$0xff] %v789
                  %v791 = vld [vmem:[%s721 + $0x110] sm:$0xff]
                  %792 = vst [vmem:[%s722 + $0x110] sm:$0xff] %v791
                  %v793 = vld [vmem:[%s721 + $0x118] sm:$0xff]
                  %794 = vst [vmem:[%s722 + $0x118] sm:$0xff] %v793
                  %v795 = vld [vmem:[%s721 + $0x120] sm:$0xff]
                  %796 = vst [vmem:[%s722 + $0x120] sm:$0xff] %v795
                  %v797 = vld [vmem:[%s721 + $0x128] sm:$0xff]
                  %798 = vst [vmem:[%s722 + $0x128] sm:$0xff] %v797
                  %v799 = vld [vmem:[%s721 + $0x130] sm:$0xff]
                  %800 = vst [vmem:[%s722 + $0x130] sm:$0xff] %v799
                  %v801 = vld [vmem:[%s721 + $0x138] sm:$0xff]
                  %802 = vst [vmem:[%s722 + $0x138] sm:$0xff] %v801
                  %v803 = vld [vmem:[%s721 + $0x140] sm:$0xff]
                  %804 = vst [vmem:[%s722 + $0x140] sm:$0xff] %v803
                  %v805 = vld [vmem:[%s721 + $0x148] sm:$0xff]
                  %806 = vst [vmem:[%s722 + $0x148] sm:$0xff] %v805
                  %v807 = vld [vmem:[%s721 + $0x150] sm:$0xff]
                  %808 = vst [vmem:[%s722 + $0x150] sm:$0xff] %v807
                  %v809 = vld [vmem:[%s721 + $0x158] sm:$0xff]
                  %810 = vst [vmem:[%s722 + $0x158] sm:$0xff] %v809
                  %v811 = vld [vmem:[%s721 + $0x160] sm:$0xff]
                  %812 = vst [vmem:[%s722 + $0x160] sm:$0xff] %v811
                  %v813 = vld [vmem:[%s721 + $0x168] sm:$0xff]
                  %814 = vst [vmem:[%s722 + $0x168] sm:$0xff] %v813
                  %v815 = vld [vmem:[%s721 + $0x170] sm:$0xff]
                  %816 = vst [vmem:[%s722 + $0x170] sm:$0xff] %v815
                  %v817 = vld [vmem:[%s721 + $0x178] sm:$0xff]
                  %818 = vst [vmem:[%s722 + $0x178] sm:$0xff] %v817
                  %v819 = vld [vmem:[%s721 + $0x180] sm:$0xff]
                  %820 = vst [vmem:[%s722 + $0x180] sm:$0xff] %v819
                  %v821 = vld [vmem:[%s721 + $0x188] sm:$0xff]
                  %822 = vst [vmem:[%s722 + $0x188] sm:$0xff] %v821
                  %v823 = vld [vmem:[%s721 + $0x190] sm:$0xff]
                  %824 = vst [vmem:[%s722 + $0x190] sm:$0xff] %v823
                  %v825 = vld [vmem:[%s721 + $0x198] sm:$0xff]
                  %826 = vst [vmem:[%s722 + $0x198] sm:$0xff] %v825
                  %v827 = vld [vmem:[%s721 + $0x1a0] sm:$0xff]
                  %828 = vst [vmem:[%s722 + $0x1a0] sm:$0xff] %v827
                  %v829 = vld [vmem:[%s721 + $0x1a8] sm:$0xff]
                  %830 = vst [vmem:[%s722 + $0x1a8] sm:$0xff] %v829
                  %v831 = vld [vmem:[%s721 + $0x1b0] sm:$0xff]
                  %832 = vst [vmem:[%s722 + $0x1b0] sm:$0xff] %v831
                  %v833 = vld [vmem:[%s721 + $0x1b8] sm:$0xff]
                  %834 = vst [vmem:[%s722 + $0x1b8] sm:$0xff] %v833
                  %v835 = vld [vmem:[%s721 + $0x1c0] sm:$0xff]
                  %836 = vst [vmem:[%s722 + $0x1c0] sm:$0xff] %v835
                  %v837 = vld [vmem:[%s721 + $0x1c8] sm:$0xff]
                  %838 = vst [vmem:[%s722 + $0x1c8] sm:$0xff] %v837
                  %v839 = vld [vmem:[%s721 + $0x1d0] sm:$0xff]
                  %840 = vst [vmem:[%s722 + $0x1d0] sm:$0xff] %v839
                  %v841 = vld [vmem:[%s721 + $0x1d8] sm:$0xff]
                  %842 = vst [vmem:[%s722 + $0x1d8] sm:$0xff] %v841
                  %v843 = vld [vmem:[%s721 + $0x1e0] sm:$0xff]
                  %844 = vst [vmem:[%s722 + $0x1e0] sm:$0xff] %v843
                  %v845 = vld [vmem:[%s721 + $0x1e8] sm:$0xff]
                  %846 = vst [vmem:[%s722 + $0x1e8] sm:$0xff] %v845
                  %v847 = vld [vmem:[%s721 + $0x1f0] sm:$0xff]
                  %848 = vst [vmem:[%s722 + $0x1f0] sm:$0xff] %v847
                  %v849 = vld [vmem:[%s721 + $0x1f8] sm:$0xff]
                  %850 = vst [vmem:[%s722 + $0x1f8] sm:$0xff] %v849
                  %s851 = sadd.s32 1, %s720
                  %p852 = scmp.ge.s32.totalorder %s851, %s711
                  %s853 = scalar_select %p852, 0, %s851
                  %s854 = smul.u32 %s853, 512
                  %s855 = smul.u32 %s853, 512
                  %s856 = scalar_lea.vmem %s481, %s854 [#allocation2]
                  %s857 = scalar_lea.vmem %s496, %s855
                $region86: #{ffm_forward.12} parent=80 // loop_footer
                  %s717 = sadd.s32 %s715, 1
                $region87: #{ffm_forward.12} parent=80 // loop_footer_branch
                  %714 = sbr.rel target = $region83
                $region88: #{ffm_forward.12} parent=80 // loop_exit
                  _
                %s858 = sshrl.u32 %s710, 6
                %s859 = sand.u32 %s710, 63
                %s860 = smul.u32 %s858, 64
                %s861 = smul.u32 128, %s860
                %s862 = sshra.s32 %s861, 4
                %s863 = scalar_lea.vmem %s481, %s862 [#allocation2]
                %s864 = smul.u32 128, %s860
                %s865 = sshra.s32 %s864, 4
                %s866 = scalar_lea.vmem %s496, %s865
                // While loop
                $region89: #{ffm_forward.12} parent=80 // loop_pre_header
                  _
                $region90: #{ffm_forward.12} parent=80 // loop_header
                  %s870 = sphi 0, %s872
                  %p871 = scmp.ge.s32.totalorder %s870, %s859
                  %s875 = sphi 0, %s882
                  %s876 = sphi %s863, %s885
                  %s877 = sphi %s866, %s886
                $region91: #{ffm_forward.12} parent=80 // loop_header_branch
                  %874 = sbr.rel (%p871) target = $region95
                $region92: #{ffm_forward.12} parent=80 // loop_body
                  %v878 = vld [vmem:[%s876] sm:$0xff]
                  %879 = vst [vmem:[%s877] sm:$0xff] %v878
                  %s880 = sadd.s32 1, %s875
                  %p881 = scmp.ge.s32.totalorder %s880, %s859
                  %s882 = scalar_select %p881, 0, %s880
                  %s883 = smul.u32 %s882, 8
                  %s884 = smul.u32 %s882, 8
                  %s885 = scalar_lea.vmem %s863, %s883 [#allocation2]
                  %s886 = scalar_lea.vmem %s866, %s884
                $region93: #{ffm_forward.12} parent=80 // loop_footer
                  %s872 = sadd.s32 %s870, 1
                $region94: #{ffm_forward.12} parent=80 // loop_footer_branch
                  %869 = sbr.rel target = $region90
                $region95: #{ffm_forward.12} parent=80 // loop_exit
                  _
                %s887 = sshll.u32 1, %s705
                %s888 = ssub.s32 %s887, 1
                loop: start=0, step=1, limit=1
                $region96: #{ffm_forward.12} parent=80 // loop_pre_header
                  _
                $region97: #{ffm_forward.12} parent=80 // loop_header
                  %s890 = sphi 0, %s894
                  %p891 = scmp.ge.s32.totalorder %s890, 1
                  %s895 = sphi %s707, %s707
                  %s896 = sphi %s709, %s709
                $region98: #{ffm_forward.12} parent=80 // loop_header_branch
                  %893 = sbr.rel (%p891) target = $region102
                $region99: #{ffm_forward.12} parent=80 // loop_body
                  %v897 = vld [vmem:[%s895] sm:%s888]
                  %898 = vst [vmem:[%s896] sm:%s888] %v897
                $region100: #{ffm_forward.12} parent=80 // loop_footer
                  %s894 = sadd.s32 1, %s890
                $region101: #{ffm_forward.12} parent=80 // loop_footer_branch
                  %889 = sbr.rel target = $region97
                $region102: #{ffm_forward.12} parent=80 // loop_exit
                  _
              $region81: #{ffm_forward.12} parent=47 // pred_fallthru
                _
            $region48: #{ffm_forward.12} parent=43 // pred_fallthru
              _
            // Predicated region
            $region49: #{ffm_forward.12} parent=43 // pred_check
              %p505 = pneg %p501
            $region50: #{ffm_forward.12} parent=43 // pred_check_branch
              %507 = sbr.rel (%p505) target = $region52
            $region51: #{ffm_forward.12} parent=43 // pred_region
              %s508 = sshll.u32 1, %s497
              %s509 = ssub.s32 %s508, 1
              loop: start=0, step=1, limit=1
              $region53: #{ffm_forward.12} parent=51 // loop_pre_header
                _
              $region54: #{ffm_forward.12} parent=51 // loop_header
                %s511 = sphi 0, %s515
                %p512 = scmp.ge.s32.totalorder %s511, 1
                %s516 = sphi %s481, %s481
                %s517 = sphi %s496, %s496
              $region55: #{ffm_forward.12} parent=51 // loop_header_branch
                %514 = sbr.rel (%p512) target = $region59
              $region56: #{ffm_forward.12} parent=51 // loop_body
                %v518 = vld [vmem:[%s516] sm:%s509]
                %519 = vst [vmem:[%s517] sm:%s509] %v518
              $region57: #{ffm_forward.12} parent=51 // loop_footer
                %s515 = sadd.s32 1, %s511
              $region58: #{ffm_forward.12} parent=51 // loop_footer_branch
                %510 = sbr.rel target = $region54
              $region59: #{ffm_forward.12} parent=51 // loop_exit
                _
            $region52: #{ffm_forward.12} parent=43 // pred_fallthru
              _
          $region44: #{ffm_forward.12} parent=39 // pred_fallthru
            _
          %899 = vnop
        $region40: #{ffm_forward.12} parent=35 // pred_fallthru
          _
        // Predicated region
        $region103: #{ffm_forward.12} parent=35 // pred_check
          %p900 = pneg %p155
        $region104: #{ffm_forward.12} parent=35 // pred_check_branch
          %902 = sbr.rel (%p900) target = $region106
        $region105: #{ffm_forward.12} parent=35 // pred_region
          %s903 = smul.u32 2, %s17
          %s904 = ssub.s32 3, %s903
          %p905 = scmp.lt.s32.totalorder %s904, 2
          %s906 = scalar_select %p905, %s904, 2
          %s907 = smul.u32 64, %s906
          %p908 = scmp.ne.s32.totalorder 0, %s907
          %s909 = smul.addr %s903, 4
          %s910 = scalar_lea.vmem %s5, %s909
          %s911 = smul.u32 %s906, 4
          // Predicated region
          $region107: #{ffm_forward.12} parent=105 // pred_check
            %p912 = pneg %p908
          $region108: #{ffm_forward.12} parent=105 // pred_check_branch
            %914 = sbr.rel (%p912) target = $region110
          $region109: #{ffm_forward.12} parent=105 // pred_region
            %p915 = scmp.lt.u32.totalorder %s911, 8
            %p916 = pneg %p915
            // Predicated region
            $region111: #{ffm_forward.12} parent=109 // pred_check
              _
            $region112: #{ffm_forward.12} parent=109 // pred_check_branch
              %918 = sbr.rel (%p915) target = $region114
            $region113: #{ffm_forward.12} parent=109 // pred_region
              %s934 = sand.u32 %s911, 7
              %p935 = scmp.eq.s32.totalorder %s934, 0
              // Predicated region
              $region126: #{ffm_forward.12} parent=113 // pred_check
                %p936 = pneg %p935
              $region127: #{ffm_forward.12} parent=113 // pred_check_branch
                %938 = sbr.rel (%p936) target = $region129
              $region128: #{ffm_forward.12} parent=113 // pred_region
                %s939 = sshrl.u32 %s911, 3
                %s940 = sshrl.u32 %s939, 6
                // While loop
                $region130: #{ffm_forward.12} parent=128 // loop_pre_header
                  _
                $region131: #{ffm_forward.12} parent=128 // loop_header
                  %s944 = sphi 0, %s946
                  %p945 = scmp.ge.s32.totalorder %s944, %s940
                  %s949 = sphi 0, %s1082
                  %s950 = sphi %s485, %s1085
                  %s951 = sphi %s910, %s1086
                $region132: #{ffm_forward.12} parent=128 // loop_header_branch
                  %948 = sbr.rel (%p945) target = $region136
                $region133: #{ffm_forward.12} parent=128 // loop_body
                  %v952 = vld [vmem:[%s950] sm:$0xff]
                  %953 = vst [vmem:[%s951] sm:$0xff] %v952
                  %v954 = vld [vmem:[%s950 + $0x8] sm:$0xff]
                  %955 = vst [vmem:[%s951 + $0x8] sm:$0xff] %v954
                  %v956 = vld [vmem:[%s950 + $0x10] sm:$0xff]
                  %957 = vst [vmem:[%s951 + $0x10] sm:$0xff] %v956
                  %v958 = vld [vmem:[%s950 + $0x18] sm:$0xff]
                  %959 = vst [vmem:[%s951 + $0x18] sm:$0xff] %v958
                  %v960 = vld [vmem:[%s950 + $0x20] sm:$0xff]
                  %961 = vst [vmem:[%s951 + $0x20] sm:$0xff] %v960
                  %v962 = vld [vmem:[%s950 + $0x28] sm:$0xff]
                  %963 = vst [vmem:[%s951 + $0x28] sm:$0xff] %v962
                  %v964 = vld [vmem:[%s950 + $0x30] sm:$0xff]
                  %965 = vst [vmem:[%s951 + $0x30] sm:$0xff] %v964
                  %v966 = vld [vmem:[%s950 + $0x38] sm:$0xff]
                  %967 = vst [vmem:[%s951 + $0x38] sm:$0xff] %v966
                  %v968 = vld [vmem:[%s950 + $0x40] sm:$0xff]
                  %969 = vst [vmem:[%s951 + $0x40] sm:$0xff] %v968
                  %v970 = vld [vmem:[%s950 + $0x48] sm:$0xff]
                  %971 = vst [vmem:[%s951 + $0x48] sm:$0xff] %v970
                  %v972 = vld [vmem:[%s950 + $0x50] sm:$0xff]
                  %973 = vst [vmem:[%s951 + $0x50] sm:$0xff] %v972
                  %v974 = vld [vmem:[%s950 + $0x58] sm:$0xff]
                  %975 = vst [vmem:[%s951 + $0x58] sm:$0xff] %v974
                  %v976 = vld [vmem:[%s950 + $0x60] sm:$0xff]
                  %977 = vst [vmem:[%s951 + $0x60] sm:$0xff] %v976
                  %v978 = vld [vmem:[%s950 + $0x68] sm:$0xff]
                  %979 = vst [vmem:[%s951 + $0x68] sm:$0xff] %v978
                  %v980 = vld [vmem:[%s950 + $0x70] sm:$0xff]
                  %981 = vst [vmem:[%s951 + $0x70] sm:$0xff] %v980
                  %v982 = vld [vmem:[%s950 + $0x78] sm:$0xff]
                  %983 = vst [vmem:[%s951 + $0x78] sm:$0xff] %v982
                  %v984 = vld [vmem:[%s950 + $0x80] sm:$0xff]
                  %985 = vst [vmem:[%s951 + $0x80] sm:$0xff] %v984
                  %v986 = vld [vmem:[%s950 + $0x88] sm:$0xff]
                  %987 = vst [vmem:[%s951 + $0x88] sm:$0xff] %v986
                  %v988 = vld [vmem:[%s950 + $0x90] sm:$0xff]
                  %989 = vst [vmem:[%s951 + $0x90] sm:$0xff] %v988
                  %v990 = vld [vmem:[%s950 + $0x98] sm:$0xff]
                  %991 = vst [vmem:[%s951 + $0x98] sm:$0xff] %v990
                  %v992 = vld [vmem:[%s950 + $0xa0] sm:$0xff]
                  %993 = vst [vmem:[%s951 + $0xa0] sm:$0xff] %v992
                  %v994 = vld [vmem:[%s950 + $0xa8] sm:$0xff]
                  %995 = vst [vmem:[%s951 + $0xa8] sm:$0xff] %v994
                  %v996 = vld [vmem:[%s950 + $0xb0] sm:$0xff]
                  %997 = vst [vmem:[%s951 + $0xb0] sm:$0xff] %v996
                  %v998 = vld [vmem:[%s950 + $0xb8] sm:$0xff]
                  %999 = vst [vmem:[%s951 + $0xb8] sm:$0xff] %v998
                  %v1000 = vld [vmem:[%s950 + $0xc0] sm:$0xff]
                  %1001 = vst [vmem:[%s951 + $0xc0] sm:$0xff] %v1000
                  %v1002 = vld [vmem:[%s950 + $0xc8] sm:$0xff]
                  %1003 = vst [vmem:[%s951 + $0xc8] sm:$0xff] %v1002
                  %v1004 = vld [vmem:[%s950 + $0xd0] sm:$0xff]
                  %1005 = vst [vmem:[%s951 + $0xd0] sm:$0xff] %v1004
                  %v1006 = vld [vmem:[%s950 + $0xd8] sm:$0xff]
                  %1007 = vst [vmem:[%s951 + $0xd8] sm:$0xff] %v1006
                  %v1008 = vld [vmem:[%s950 + $0xe0] sm:$0xff]
                  %1009 = vst [vmem:[%s951 + $0xe0] sm:$0xff] %v1008
                  %v1010 = vld [vmem:[%s950 + $0xe8] sm:$0xff]
                  %1011 = vst [vmem:[%s951 + $0xe8] sm:$0xff] %v1010
                  %v1012 = vld [vmem:[%s950 + $0xf0] sm:$0xff]
                  %1013 = vst [vmem:[%s951 + $0xf0] sm:$0xff] %v1012
                  %v1014 = vld [vmem:[%s950 + $0xf8] sm:$0xff]
                  %1015 = vst [vmem:[%s951 + $0xf8] sm:$0xff] %v1014
                  %v1016 = vld [vmem:[%s950 + $0x100] sm:$0xff]
                  %1017 = vst [vmem:[%s951 + $0x100] sm:$0xff] %v1016
                  %v1018 = vld [vmem:[%s950 + $0x108] sm:$0xff]
                  %1019 = vst [vmem:[%s951 + $0x108] sm:$0xff] %v1018
                  %v1020 = vld [vmem:[%s950 + $0x110] sm:$0xff]
                  %1021 = vst [vmem:[%s951 + $0x110] sm:$0xff] %v1020
                  %v1022 = vld [vmem:[%s950 + $0x118] sm:$0xff]
                  %1023 = vst [vmem:[%s951 + $0x118] sm:$0xff] %v1022
                  %v1024 = vld [vmem:[%s950 + $0x120] sm:$0xff]
                  %1025 = vst [vmem:[%s951 + $0x120] sm:$0xff] %v1024
                  %v1026 = vld [vmem:[%s950 + $0x128] sm:$0xff]
                  %1027 = vst [vmem:[%s951 + $0x128] sm:$0xff] %v1026
                  %v1028 = vld [vmem:[%s950 + $0x130] sm:$0xff]
                  %1029 = vst [vmem:[%s951 + $0x130] sm:$0xff] %v1028
                  %v1030 = vld [vmem:[%s950 + $0x138] sm:$0xff]
                  %1031 = vst [vmem:[%s951 + $0x138] sm:$0xff] %v1030
                  %v1032 = vld [vmem:[%s950 + $0x140] sm:$0xff]
                  %1033 = vst [vmem:[%s951 + $0x140] sm:$0xff] %v1032
                  %v1034 = vld [vmem:[%s950 + $0x148] sm:$0xff]
                  %1035 = vst [vmem:[%s951 + $0x148] sm:$0xff] %v1034
                  %v1036 = vld [vmem:[%s950 + $0x150] sm:$0xff]
                  %1037 = vst [vmem:[%s951 + $0x150] sm:$0xff] %v1036
                  %v1038 = vld [vmem:[%s950 + $0x158] sm:$0xff]
                  %1039 = vst [vmem:[%s951 + $0x158] sm:$0xff] %v1038
                  %v1040 = vld [vmem:[%s950 + $0x160] sm:$0xff]
                  %1041 = vst [vmem:[%s951 + $0x160] sm:$0xff] %v1040
                  %v1042 = vld [vmem:[%s950 + $0x168] sm:$0xff]
                  %1043 = vst [vmem:[%s951 + $0x168] sm:$0xff] %v1042
                  %v1044 = vld [vmem:[%s950 + $0x170] sm:$0xff]
                  %1045 = vst [vmem:[%s951 + $0x170] sm:$0xff] %v1044
                  %v1046 = vld [vmem:[%s950 + $0x178] sm:$0xff]
                  %1047 = vst [vmem:[%s951 + $0x178] sm:$0xff] %v1046
                  %v1048 = vld [vmem:[%s950 + $0x180] sm:$0xff]
                  %1049 = vst [vmem:[%s951 + $0x180] sm:$0xff] %v1048
                  %v1050 = vld [vmem:[%s950 + $0x188] sm:$0xff]
                  %1051 = vst [vmem:[%s951 + $0x188] sm:$0xff] %v1050
                  %v1052 = vld [vmem:[%s950 + $0x190] sm:$0xff]
                  %1053 = vst [vmem:[%s951 + $0x190] sm:$0xff] %v1052
                  %v1054 = vld [vmem:[%s950 + $0x198] sm:$0xff]
                  %1055 = vst [vmem:[%s951 + $0x198] sm:$0xff] %v1054
                  %v1056 = vld [vmem:[%s950 + $0x1a0] sm:$0xff]
                  %1057 = vst [vmem:[%s951 + $0x1a0] sm:$0xff] %v1056
                  %v1058 = vld [vmem:[%s950 + $0x1a8] sm:$0xff]
                  %1059 = vst [vmem:[%s951 + $0x1a8] sm:$0xff] %v1058
                  %v1060 = vld [vmem:[%s950 + $0x1b0] sm:$0xff]
                  %1061 = vst [vmem:[%s951 + $0x1b0] sm:$0xff] %v1060
                  %v1062 = vld [vmem:[%s950 + $0x1b8] sm:$0xff]
                  %1063 = vst [vmem:[%s951 + $0x1b8] sm:$0xff] %v1062
                  %v1064 = vld [vmem:[%s950 + $0x1c0] sm:$0xff]
                  %1065 = vst [vmem:[%s951 + $0x1c0] sm:$0xff] %v1064
                  %v1066 = vld [vmem:[%s950 + $0x1c8] sm:$0xff]
                  %1067 = vst [vmem:[%s951 + $0x1c8] sm:$0xff] %v1066
                  %v1068 = vld [vmem:[%s950 + $0x1d0] sm:$0xff]
                  %1069 = vst [vmem:[%s951 + $0x1d0] sm:$0xff] %v1068
                  %v1070 = vld [vmem:[%s950 + $0x1d8] sm:$0xff]
                  %1071 = vst [vmem:[%s951 + $0x1d8] sm:$0xff] %v1070
                  %v1072 = vld [vmem:[%s950 + $0x1e0] sm:$0xff]
                  %1073 = vst [vmem:[%s951 + $0x1e0] sm:$0xff] %v1072
                  %v1074 = vld [vmem:[%s950 + $0x1e8] sm:$0xff]
                  %1075 = vst [vmem:[%s951 + $0x1e8] sm:$0xff] %v1074
                  %v1076 = vld [vmem:[%s950 + $0x1f0] sm:$0xff]
                  %1077 = vst [vmem:[%s951 + $0x1f0] sm:$0xff] %v1076
                  %v1078 = vld [vmem:[%s950 + $0x1f8] sm:$0xff]
                  %1079 = vst [vmem:[%s951 + $0x1f8] sm:$0xff] %v1078
                  %s1080 = sadd.s32 1, %s949
                  %p1081 = scmp.ge.s32.totalorder %s1080, %s940
                  %s1082 = scalar_select %p1081, 0, %s1080
                  %s1083 = smul.u32 %s1082, 512
                  %s1084 = smul.u32 %s1082, 512
                  %s1085 = scalar_lea.vmem %s485, %s1083 [#allocation3]
                  %s1086 = scalar_lea.vmem %s910, %s1084
                $region134: #{ffm_forward.12} parent=128 // loop_footer
                  %s946 = sadd.s32 %s944, 1
                $region135: #{ffm_forward.12} parent=128 // loop_footer_branch
                  %943 = sbr.rel target = $region131
                $region136: #{ffm_forward.12} parent=128 // loop_exit
                  _
                %s1087 = sshrl.u32 %s939, 6
                %s1088 = sand.u32 %s939, 63
                %s1089 = smul.u32 %s1087, 64
                %s1090 = smul.u32 128, %s1089
                %s1091 = sshra.s32 %s1090, 4
                %s1092 = scalar_lea.vmem %s485, %s1091 [#allocation3]
                %s1093 = smul.u32 128, %s1089
                %s1094 = sshra.s32 %s1093, 4
                %s1095 = scalar_lea.vmem %s910, %s1094
                // While loop
                $region137: #{ffm_forward.12} parent=128 // loop_pre_header
                  _
                $region138: #{ffm_forward.12} parent=128 // loop_header
                  %s1099 = sphi 0, %s1101
                  %p1100 = scmp.ge.s32.totalorder %s1099, %s1088
                  %s1104 = sphi 0, %s1111
                  %s1105 = sphi %s1092, %s1114
                  %s1106 = sphi %s1095, %s1115
                $region139: #{ffm_forward.12} parent=128 // loop_header_branch
                  %1103 = sbr.rel (%p1100) target = $region143
                $region140: #{ffm_forward.12} parent=128 // loop_body
                  %v1107 = vld [vmem:[%s1105] sm:$0xff]
                  %1108 = vst [vmem:[%s1106] sm:$0xff] %v1107
                  %s1109 = sadd.s32 1, %s1104
                  %p1110 = scmp.ge.s32.totalorder %s1109, %s1088
                  %s1111 = scalar_select %p1110, 0, %s1109
                  %s1112 = smul.u32 %s1111, 8
                  %s1113 = smul.u32 %s1111, 8
                  %s1114 = scalar_lea.vmem %s1092, %s1112 [#allocation3]
                  %s1115 = scalar_lea.vmem %s1095, %s1113
                $region141: #{ffm_forward.12} parent=128 // loop_footer
                  %s1101 = sadd.s32 %s1099, 1
                $region142: #{ffm_forward.12} parent=128 // loop_footer_branch
                  %1098 = sbr.rel target = $region138
                $region143: #{ffm_forward.12} parent=128 // loop_exit
                  _
              $region129: #{ffm_forward.12} parent=113 // pred_fallthru
                _
              %p1116 = pneg %p935
              // Predicated region
              $region144: #{ffm_forward.12} parent=113 // pred_check
                _
              $region145: #{ffm_forward.12} parent=113 // pred_check_branch
                %1118 = sbr.rel (%p935) target = $region147
              $region146: #{ffm_forward.12} parent=113 // pred_region
                %s1119 = sand.u32 %s911, 7
                %s1120 = ssub.s32 %s911, %s1119
                %s1121 = scalar_lea.vmem %s485, %s1120 [#allocation3]
                %s1122 = ssub.s32 %s911, %s1119
                %s1123 = scalar_lea.vmem %s910, %s1122
                %s1124 = sshrl.u32 %s911, 3
                %s1125 = sshrl.u32 %s1124, 6
                // While loop
                $region148: #{ffm_forward.12} parent=146 // loop_pre_header
                  _
                $region149: #{ffm_forward.12} parent=146 // loop_header
                  %s1129 = sphi 0, %s1131
                  %p1130 = scmp.ge.s32.totalorder %s1129, %s1125
                  %s1134 = sphi 0, %s1267
                  %s1135 = sphi %s485, %s1270
                  %s1136 = sphi %s910, %s1271
                $region150: #{ffm_forward.12} parent=146 // loop_header_branch
                  %1133 = sbr.rel (%p1130) target = $region154
                $region151: #{ffm_forward.12} parent=146 // loop_body
                  %v1137 = vld [vmem:[%s1135] sm:$0xff]
                  %1138 = vst [vmem:[%s1136] sm:$0xff] %v1137
                  %v1139 = vld [vmem:[%s1135 + $0x8] sm:$0xff]
                  %1140 = vst [vmem:[%s1136 + $0x8] sm:$0xff] %v1139
                  %v1141 = vld [vmem:[%s1135 + $0x10] sm:$0xff]
                  %1142 = vst [vmem:[%s1136 + $0x10] sm:$0xff] %v1141
                  %v1143 = vld [vmem:[%s1135 + $0x18] sm:$0xff]
                  %1144 = vst [vmem:[%s1136 + $0x18] sm:$0xff] %v1143
                  %v1145 = vld [vmem:[%s1135 + $0x20] sm:$0xff]
                  %1146 = vst [vmem:[%s1136 + $0x20] sm:$0xff] %v1145
                  %v1147 = vld [vmem:[%s1135 + $0x28] sm:$0xff]
                  %1148 = vst [vmem:[%s1136 + $0x28] sm:$0xff] %v1147
                  %v1149 = vld [vmem:[%s1135 + $0x30] sm:$0xff]
                  %1150 = vst [vmem:[%s1136 + $0x30] sm:$0xff] %v1149
                  %v1151 = vld [vmem:[%s1135 + $0x38] sm:$0xff]
                  %1152 = vst [vmem:[%s1136 + $0x38] sm:$0xff] %v1151
                  %v1153 = vld [vmem:[%s1135 + $0x40] sm:$0xff]
                  %1154 = vst [vmem:[%s1136 + $0x40] sm:$0xff] %v1153
                  %v1155 = vld [vmem:[%s1135 + $0x48] sm:$0xff]
                  %1156 = vst [vmem:[%s1136 + $0x48] sm:$0xff] %v1155
                  %v1157 = vld [vmem:[%s1135 + $0x50] sm:$0xff]
                  %1158 = vst [vmem:[%s1136 + $0x50] sm:$0xff] %v1157
                  %v1159 = vld [vmem:[%s1135 + $0x58] sm:$0xff]
                  %1160 = vst [vmem:[%s1136 + $0x58] sm:$0xff] %v1159
                  %v1161 = vld [vmem:[%s1135 + $0x60] sm:$0xff]
                  %1162 = vst [vmem:[%s1136 + $0x60] sm:$0xff] %v1161
                  %v1163 = vld [vmem:[%s1135 + $0x68] sm:$0xff]
                  %1164 = vst [vmem:[%s1136 + $0x68] sm:$0xff] %v1163
                  %v1165 = vld [vmem:[%s1135 + $0x70] sm:$0xff]
                  %1166 = vst [vmem:[%s1136 + $0x70] sm:$0xff] %v1165
                  %v1167 = vld [vmem:[%s1135 + $0x78] sm:$0xff]
                  %1168 = vst [vmem:[%s1136 + $0x78] sm:$0xff] %v1167
                  %v1169 = vld [vmem:[%s1135 + $0x80] sm:$0xff]
                  %1170 = vst [vmem:[%s1136 + $0x80] sm:$0xff] %v1169
                  %v1171 = vld [vmem:[%s1135 + $0x88] sm:$0xff]
                  %1172 = vst [vmem:[%s1136 + $0x88] sm:$0xff] %v1171
                  %v1173 = vld [vmem:[%s1135 + $0x90] sm:$0xff]
                  %1174 = vst [vmem:[%s1136 + $0x90] sm:$0xff] %v1173
                  %v1175 = vld [vmem:[%s1135 + $0x98] sm:$0xff]
                  %1176 = vst [vmem:[%s1136 + $0x98] sm:$0xff] %v1175
                  %v1177 = vld [vmem:[%s1135 + $0xa0] sm:$0xff]
                  %1178 = vst [vmem:[%s1136 + $0xa0] sm:$0xff] %v1177
                  %v1179 = vld [vmem:[%s1135 + $0xa8] sm:$0xff]
                  %1180 = vst [vmem:[%s1136 + $0xa8] sm:$0xff] %v1179
                  %v1181 = vld [vmem:[%s1135 + $0xb0] sm:$0xff]
                  %1182 = vst [vmem:[%s1136 + $0xb0] sm:$0xff] %v1181
                  %v1183 = vld [vmem:[%s1135 + $0xb8] sm:$0xff]
                  %1184 = vst [vmem:[%s1136 + $0xb8] sm:$0xff] %v1183
                  %v1185 = vld [vmem:[%s1135 + $0xc0] sm:$0xff]
                  %1186 = vst [vmem:[%s1136 + $0xc0] sm:$0xff] %v1185
                  %v1187 = vld [vmem:[%s1135 + $0xc8] sm:$0xff]
                  %1188 = vst [vmem:[%s1136 + $0xc8] sm:$0xff] %v1187
                  %v1189 = vld [vmem:[%s1135 + $0xd0] sm:$0xff]
                  %1190 = vst [vmem:[%s1136 + $0xd0] sm:$0xff] %v1189
                  %v1191 = vld [vmem:[%s1135 + $0xd8] sm:$0xff]
                  %1192 = vst [vmem:[%s1136 + $0xd8] sm:$0xff] %v1191
                  %v1193 = vld [vmem:[%s1135 + $0xe0] sm:$0xff]
                  %1194 = vst [vmem:[%s1136 + $0xe0] sm:$0xff] %v1193
                  %v1195 = vld [vmem:[%s1135 + $0xe8] sm:$0xff]
                  %1196 = vst [vmem:[%s1136 + $0xe8] sm:$0xff] %v1195
                  %v1197 = vld [vmem:[%s1135 + $0xf0] sm:$0xff]
                  %1198 = vst [vmem:[%s1136 + $0xf0] sm:$0xff] %v1197
                  %v1199 = vld [vmem:[%s1135 + $0xf8] sm:$0xff]
                  %1200 = vst [vmem:[%s1136 + $0xf8] sm:$0xff] %v1199
                  %v1201 = vld [vmem:[%s1135 + $0x100] sm:$0xff]
                  %1202 = vst [vmem:[%s1136 + $0x100] sm:$0xff] %v1201
                  %v1203 = vld [vmem:[%s1135 + $0x108] sm:$0xff]
                  %1204 = vst [vmem:[%s1136 + $0x108] sm:$0xff] %v1203
                  %v1205 = vld [vmem:[%s1135 + $0x110] sm:$0xff]
                  %1206 = vst [vmem:[%s1136 + $0x110] sm:$0xff] %v1205
                  %v1207 = vld [vmem:[%s1135 + $0x118] sm:$0xff]
                  %1208 = vst [vmem:[%s1136 + $0x118] sm:$0xff] %v1207
                  %v1209 = vld [vmem:[%s1135 + $0x120] sm:$0xff]
                  %1210 = vst [vmem:[%s1136 + $0x120] sm:$0xff] %v1209
                  %v1211 = vld [vmem:[%s1135 + $0x128] sm:$0xff]
                  %1212 = vst [vmem:[%s1136 + $0x128] sm:$0xff] %v1211
                  %v1213 = vld [vmem:[%s1135 + $0x130] sm:$0xff]
                  %1214 = vst [vmem:[%s1136 + $0x130] sm:$0xff] %v1213
                  %v1215 = vld [vmem:[%s1135 + $0x138] sm:$0xff]
                  %1216 = vst [vmem:[%s1136 + $0x138] sm:$0xff] %v1215
                  %v1217 = vld [vmem:[%s1135 + $0x140] sm:$0xff]
                  %1218 = vst [vmem:[%s1136 + $0x140] sm:$0xff] %v1217
                  %v1219 = vld [vmem:[%s1135 + $0x148] sm:$0xff]
                  %1220 = vst [vmem:[%s1136 + $0x148] sm:$0xff] %v1219
                  %v1221 = vld [vmem:[%s1135 + $0x150] sm:$0xff]
                  %1222 = vst [vmem:[%s1136 + $0x150] sm:$0xff] %v1221
                  %v1223 = vld [vmem:[%s1135 + $0x158] sm:$0xff]
                  %1224 = vst [vmem:[%s1136 + $0x158] sm:$0xff] %v1223
                  %v1225 = vld [vmem:[%s1135 + $0x160] sm:$0xff]
                  %1226 = vst [vmem:[%s1136 + $0x160] sm:$0xff] %v1225
                  %v1227 = vld [vmem:[%s1135 + $0x168] sm:$0xff]
                  %1228 = vst [vmem:[%s1136 + $0x168] sm:$0xff] %v1227
                  %v1229 = vld [vmem:[%s1135 + $0x170] sm:$0xff]
                  %1230 = vst [vmem:[%s1136 + $0x170] sm:$0xff] %v1229
                  %v1231 = vld [vmem:[%s1135 + $0x178] sm:$0xff]
                  %1232 = vst [vmem:[%s1136 + $0x178] sm:$0xff] %v1231
                  %v1233 = vld [vmem:[%s1135 + $0x180] sm:$0xff]
                  %1234 = vst [vmem:[%s1136 + $0x180] sm:$0xff] %v1233
                  %v1235 = vld [vmem:[%s1135 + $0x188] sm:$0xff]
                  %1236 = vst [vmem:[%s1136 + $0x188] sm:$0xff] %v1235
                  %v1237 = vld [vmem:[%s1135 + $0x190] sm:$0xff]
                  %1238 = vst [vmem:[%s1136 + $0x190] sm:$0xff] %v1237
                  %v1239 = vld [vmem:[%s1135 + $0x198] sm:$0xff]
                  %1240 = vst [vmem:[%s1136 + $0x198] sm:$0xff] %v1239
                  %v1241 = vld [vmem:[%s1135 + $0x1a0] sm:$0xff]
                  %1242 = vst [vmem:[%s1136 + $0x1a0] sm:$0xff] %v1241
                  %v1243 = vld [vmem:[%s1135 + $0x1a8] sm:$0xff]
                  %1244 = vst [vmem:[%s1136 + $0x1a8] sm:$0xff] %v1243
                  %v1245 = vld [vmem:[%s1135 + $0x1b0] sm:$0xff]
                  %1246 = vst [vmem:[%s1136 + $0x1b0] sm:$0xff] %v1245
                  %v1247 = vld [vmem:[%s1135 + $0x1b8] sm:$0xff]
                  %1248 = vst [vmem:[%s1136 + $0x1b8] sm:$0xff] %v1247
                  %v1249 = vld [vmem:[%s1135 + $0x1c0] sm:$0xff]
                  %1250 = vst [vmem:[%s1136 + $0x1c0] sm:$0xff] %v1249
                  %v1251 = vld [vmem:[%s1135 + $0x1c8] sm:$0xff]
                  %1252 = vst [vmem:[%s1136 + $0x1c8] sm:$0xff] %v1251
                  %v1253 = vld [vmem:[%s1135 + $0x1d0] sm:$0xff]
                  %1254 = vst [vmem:[%s1136 + $0x1d0] sm:$0xff] %v1253
                  %v1255 = vld [vmem:[%s1135 + $0x1d8] sm:$0xff]
                  %1256 = vst [vmem:[%s1136 + $0x1d8] sm:$0xff] %v1255
                  %v1257 = vld [vmem:[%s1135 + $0x1e0] sm:$0xff]
                  %1258 = vst [vmem:[%s1136 + $0x1e0] sm:$0xff] %v1257
                  %v1259 = vld [vmem:[%s1135 + $0x1e8] sm:$0xff]
                  %1260 = vst [vmem:[%s1136 + $0x1e8] sm:$0xff] %v1259
                  %v1261 = vld [vmem:[%s1135 + $0x1f0] sm:$0xff]
                  %1262 = vst [vmem:[%s1136 + $0x1f0] sm:$0xff] %v1261
                  %v1263 = vld [vmem:[%s1135 + $0x1f8] sm:$0xff]
                  %1264 = vst [vmem:[%s1136 + $0x1f8] sm:$0xff] %v1263
                  %s1265 = sadd.s32 1, %s1134
                  %p1266 = scmp.ge.s32.totalorder %s1265, %s1125
                  %s1267 = scalar_select %p1266, 0, %s1265
                  %s1268 = smul.u32 %s1267, 512
                  %s1269 = smul.u32 %s1267, 512
                  %s1270 = scalar_lea.vmem %s485, %s1268 [#allocation3]
                  %s1271 = scalar_lea.vmem %s910, %s1269
                $region152: #{ffm_forward.12} parent=146 // loop_footer
                  %s1131 = sadd.s32 %s1129, 1
                $region153: #{ffm_forward.12} parent=146 // loop_footer_branch
                  %1128 = sbr.rel target = $region149
                $region154: #{ffm_forward.12} parent=146 // loop_exit
                  _
                %s1272 = sshrl.u32 %s1124, 6
                %s1273 = sand.u32 %s1124, 63
                %s1274 = smul.u32 %s1272, 64
                %s1275 = smul.u32 128, %s1274
                %s1276 = sshra.s32 %s1275, 4
                %s1277 = scalar_lea.vmem %s485, %s1276 [#allocation3]
                %s1278 = smul.u32 128, %s1274
                %s1279 = sshra.s32 %s1278, 4
                %s1280 = scalar_lea.vmem %s910, %s1279
                // While loop
                $region155: #{ffm_forward.12} parent=146 // loop_pre_header
                  _
                $region156: #{ffm_forward.12} parent=146 // loop_header
                  %s1284 = sphi 0, %s1286
                  %p1285 = scmp.ge.s32.totalorder %s1284, %s1273
                  %s1289 = sphi 0, %s1296
                  %s1290 = sphi %s1277, %s1299
                  %s1291 = sphi %s1280, %s1300
                $region157: #{ffm_forward.12} parent=146 // loop_header_branch
                  %1288 = sbr.rel (%p1285) target = $region161
                $region158: #{ffm_forward.12} parent=146 // loop_body
                  %v1292 = vld [vmem:[%s1290] sm:$0xff]
                  %1293 = vst [vmem:[%s1291] sm:$0xff] %v1292
                  %s1294 = sadd.s32 1, %s1289
                  %p1295 = scmp.ge.s32.totalorder %s1294, %s1273
                  %s1296 = scalar_select %p1295, 0, %s1294
                  %s1297 = smul.u32 %s1296, 8
                  %s1298 = smul.u32 %s1296, 8
                  %s1299 = scalar_lea.vmem %s1277, %s1297 [#allocation3]
                  %s1300 = scalar_lea.vmem %s1280, %s1298
                $region159: #{ffm_forward.12} parent=146 // loop_footer
                  %s1286 = sadd.s32 %s1284, 1
                $region160: #{ffm_forward.12} parent=146 // loop_footer_branch
                  %1283 = sbr.rel target = $region156
                $region161: #{ffm_forward.12} parent=146 // loop_exit
                  _
                %s1301 = sshll.u32 1, %s1119
                %s1302 = ssub.s32 %s1301, 1
                loop: start=0, step=1, limit=1
                $region162: #{ffm_forward.12} parent=146 // loop_pre_header
                  _
                $region163: #{ffm_forward.12} parent=146 // loop_header
                  %s1304 = sphi 0, %s1308
                  %p1305 = scmp.ge.s32.totalorder %s1304, 1
                  %s1309 = sphi %s1121, %s1121
                  %s1310 = sphi %s1123, %s1123
                $region164: #{ffm_forward.12} parent=146 // loop_header_branch
                  %1307 = sbr.rel (%p1305) target = $region168
                $region165: #{ffm_forward.12} parent=146 // loop_body
                  %v1311 = vld [vmem:[%s1309] sm:%s1302]
                  %1312 = vst [vmem:[%s1310] sm:%s1302] %v1311
                $region166: #{ffm_forward.12} parent=146 // loop_footer
                  %s1308 = sadd.s32 1, %s1304
                $region167: #{ffm_forward.12} parent=146 // loop_footer_branch
                  %1303 = sbr.rel target = $region163
                $region168: #{ffm_forward.12} parent=146 // loop_exit
                  _
              $region147: #{ffm_forward.12} parent=113 // pred_fallthru
                _
            $region114: #{ffm_forward.12} parent=109 // pred_fallthru
              _
            // Predicated region
            $region115: #{ffm_forward.12} parent=109 // pred_check
              %p919 = pneg %p915
            $region116: #{ffm_forward.12} parent=109 // pred_check_branch
              %921 = sbr.rel (%p919) target = $region118
            $region117: #{ffm_forward.12} parent=109 // pred_region
              %s922 = sshll.u32 1, %s911
              %s923 = ssub.s32 %s922, 1
              loop: start=0, step=1, limit=1
              $region119: #{ffm_forward.12} parent=117 // loop_pre_header
                _
              $region120: #{ffm_forward.12} parent=117 // loop_header
                %s925 = sphi 0, %s929
                %p926 = scmp.ge.s32.totalorder %s925, 1
                %s930 = sphi %s485, %s485
                %s931 = sphi %s910, %s910
              $region121: #{ffm_forward.12} parent=117 // loop_header_branch
                %928 = sbr.rel (%p926) target = $region125
              $region122: #{ffm_forward.12} parent=117 // loop_body
                %v932 = vld [vmem:[%s930] sm:%s923]
                %933 = vst [vmem:[%s931] sm:%s923] %v932
              $region123: #{ffm_forward.12} parent=117 // loop_footer
                %s929 = sadd.s32 1, %s925
              $region124: #{ffm_forward.12} parent=117 // loop_footer_branch
                %924 = sbr.rel target = $region120
              $region125: #{ffm_forward.12} parent=117 // loop_exit
                _
            $region118: #{ffm_forward.12} parent=109 // pred_fallthru
              _
          $region110: #{ffm_forward.12} parent=105 // pred_fallthru
            _
          %1313 = vnop
        $region106: #{ffm_forward.12} parent=35 // pred_fallthru
          _
      $region36: #{ffm_forward.12} parent=5 // pred_fallthru
        _
      %p1314 = scmp.le.s32.totalorder 2, %s12
      // Predicated region
      $region169: #{ffm_forward.12} parent=5 // pred_check
        %p1315 = pneg %p1314
      $region170: #{ffm_forward.12} parent=5 // pred_check_branch
        %1317 = sbr.rel (%p1315) target = $region172
      $region171: #{ffm_forward.12} parent=5 // pred_region
        %s1318 = ssub.s32 %s12, 2
        // Predicated region
        $region173: #{ffm_forward.12} parent=171 // pred_check
          %p1319 = pneg %p135
        $region174: #{ffm_forward.12} parent=171 // pred_check_branch
          %1321 = sbr.rel (%p1319) target = $region176
        $region175: #{ffm_forward.12} parent=171 // pred_region
          %s1322 = sand.u32 %s120, 1
          %s1323 = sand.u32 %s120, 1
          %s1324 = smul.addr %s1323, 8
          %s1325 = scalar_lea.vmem [#allocation2], %s1324
        $region176: #{ffm_forward.12} parent=171 // pred_fallthru
          _
        // Predicated region
        $region177: #{ffm_forward.12} parent=171 // pred_check
          %p1326 = pneg %p161
        $region178: #{ffm_forward.12} parent=171 // pred_check_branch
          %1328 = sbr.rel (%p1326) target = $region180
        $region179: #{ffm_forward.12} parent=171 // pred_region
          %s1329 = sand.u32 %s146, 1
          %s1330 = sand.u32 %s146, 1
          %s1331 = smul.addr %s1330, 8
          %s1332 = scalar_lea.vmem [#allocation3], %s1331
        $region180: #{ffm_forward.12} parent=171 // pred_fallthru
          _
      $region172: #{ffm_forward.12} parent=5 // pred_fallthru
        _
    $region6: #{ffm_forward.12} parent=1 // loop_footer
      %s16 = sadd.s32 1, %s12
    $region7: #{ffm_forward.12} parent=1 // loop_footer_branch
      %11 = sbr.rel target = $region3
    $region8: #{ffm_forward.12} parent=1 // loop_exit
      _

// kernel: reverse.0
$region0: #{reverse.0}
  %s0 = inlined_call_operand.vmem [shape: f32[4,2,16,7], index: 0, kind: input, shape index: {}]
  %s1 = inlined_call_operand.vmem [shape: f32[4,2,16,7], index: 1, kind: output, shape index: {}]
  $region1: #{reverse.0} parent=0
    #allocation0 [shape = 'u8[65536]{0}', space=vmem, size = 0x10000, scoped, tag = 'operand span for operand 0']
    #allocation1 [shape = 'u8[32768]{0}', space=vmem, size = 0x8000, scoped, tag = 'operand span for operand 1']
    %s2 = scalar_lea.vmem [#allocation0], 8
    // Predicated region
    $region2: #{reverse.0} parent=1 // pred_check
      _
    $region3: #{reverse.0} parent=1 // pred_check_branch
      %4 = sbr.rel (0) target = $region5
    $region4: #{reverse.0} parent=1 // pred_region
      // Predicated region
      $region6: #{reverse.0} parent=4 // pred_check
        _
      $region7: #{reverse.0} parent=4 // pred_check_branch
        %6 = sbr.rel (0) target = $region9
      $region8: #{reverse.0} parent=4 // pred_region
        // Predicated region
        $region21: #{reverse.0} parent=8 // pred_check
          _
        $region22: #{reverse.0} parent=8 // pred_check_branch
          %36 = sbr.rel (0) target = $region24
        $region23: #{reverse.0} parent=8 // pred_region
          loop: start=0, step=1, limit=1
          $region25: #{reverse.0} parent=23 // loop_pre_header
            _
          $region26: #{reverse.0} parent=23 // loop_header
            %s38 = sphi 0, %s42
            %p39 = scmp.ge.s32.totalorder %s38, 1
            %s43 = sphi %s0, %s0
            %s44 = sphi %s2, %s2
          $region27: #{reverse.0} parent=23 // loop_header_branch
            %41 = sbr.rel (%p39) target = $region31
          $region28: #{reverse.0} parent=23 // loop_body
            %v45 = vld [vmem:[%s43] sm:$0xff]
            %46 = vst [vmem:[%s44] sm:$0xff] %v45
            %v47 = vld [vmem:[%s43 + $0x8] sm:$0xff]
            %48 = vst [vmem:[%s44 + $0x10] sm:$0xff] %v47
            %v49 = vld [vmem:[%s43 + $0x10] sm:$0xff]
            %50 = vst [vmem:[%s44 + $0x20] sm:$0xff] %v49
            %v51 = vld [vmem:[%s43 + $0x18] sm:$0xff]
            %52 = vst [vmem:[%s44 + $0x30] sm:$0xff] %v51
            %v53 = vld [vmem:[%s43 + $0x20] sm:$0xff]
            %54 = vst [vmem:[%s44 + $0x40] sm:$0xff] %v53
            %v55 = vld [vmem:[%s43 + $0x28] sm:$0xff]
            %56 = vst [vmem:[%s44 + $0x50] sm:$0xff] %v55
            %v57 = vld [vmem:[%s43 + $0x30] sm:$0xff]
            %58 = vst [vmem:[%s44 + $0x60] sm:$0xff] %v57
            %v59 = vld [vmem:[%s43 + $0x38] sm:$0xff]
            %60 = vst [vmem:[%s44 + $0x70] sm:$0xff] %v59
          $region29: #{reverse.0} parent=23 // loop_footer
            %s42 = sadd.s32 1, %s38
          $region30: #{reverse.0} parent=23 // loop_footer_branch
            %37 = sbr.rel target = $region26
          $region31: #{reverse.0} parent=23 // loop_exit
            _
        $region24: #{reverse.0} parent=8 // pred_fallthru
          _
        // Predicated region
        $region32: #{reverse.0} parent=8 // pred_check
          _
        $region33: #{reverse.0} parent=8 // pred_check_branch
          %62 = sbr.rel target = $region35
        $region34: #{reverse.0} parent=8 // pred_region
          _
        $region35: #{reverse.0} parent=8 // pred_fallthru
          _
      $region9: #{reverse.0} parent=4 // pred_fallthru
        _
      // Predicated region
      $region10: #{reverse.0} parent=4 // pred_check
        _
      $region11: #{reverse.0} parent=4 // pred_check_branch
        %8 = sbr.rel target = $region13
      $region12: #{reverse.0} parent=4 // pred_region
        %s10 = ssub.s32 256, 1
        loop: start=0, step=1, limit=1
        $region14: #{reverse.0} parent=12 // loop_pre_header
          _
        $region15: #{reverse.0} parent=12 // loop_header
          %s12 = sphi 0, %s16
          %p13 = scmp.ge.s32.totalorder %s12, 1
          %s17 = sphi %s0, %s0
          %s18 = sphi %s2, %s2
        $region16: #{reverse.0} parent=12 // loop_header_branch
          %15 = sbr.rel (%p13) target = $region20
        $region17: #{reverse.0} parent=12 // loop_body
          %v19 = vld [vmem:[%s17] sm:%s10]
          %20 = vst [vmem:[%s18] sm:%s10] %v19
          %v21 = vld [vmem:[%s17 + $0x8] sm:%s10]
          %22 = vst [vmem:[%s18 + $0x10] sm:%s10] %v21
          %v23 = vld [vmem:[%s17 + $0x10] sm:%s10]
          %24 = vst [vmem:[%s18 + $0x20] sm:%s10] %v23
          %v25 = vld [vmem:[%s17 + $0x18] sm:%s10]
          %26 = vst [vmem:[%s18 + $0x30] sm:%s10] %v25
          %v27 = vld [vmem:[%s17 + $0x20] sm:%s10]
          %28 = vst [vmem:[%s18 + $0x40] sm:%s10] %v27
          %v29 = vld [vmem:[%s17 + $0x28] sm:%s10]
          %30 = vst [vmem:[%s18 + $0x50] sm:%s10] %v29
          %v31 = vld [vmem:[%s17 + $0x30] sm:%s10]
          %32 = vst [vmem:[%s18 + $0x60] sm:%s10] %v31
          %v33 = vld [vmem:[%s17 + $0x38] sm:%s10]
          %34 = vst [vmem:[%s18 + $0x70] sm:%s10] %v33
        $region18: #{reverse.0} parent=12 // loop_footer
          %s16 = sadd.s32 1, %s12
        $region19: #{reverse.0} parent=12 // loop_footer_branch
          %11 = sbr.rel target = $region15
        $region20: #{reverse.0} parent=12 // loop_exit
          _
      $region13: #{reverse.0} parent=4 // pred_fallthru
        _
    $region5: #{reverse.0} parent=1 // pred_fallthru
      _
    %63 = vnop
    %s64 = scalar_lea.vmem [#allocation0], 7
    %v65 = vld [vmem:[%s64] ss:$-1 sm:$0xff]
    %v66 = vrot.slane %v65, 1
    %67 = vst [vmem:[#allocation1] sm:$0xff] %v66
    %s68 = scalar_lea.vmem [#allocation0], 8
    %s69 = scalar_lea.vmem %s68, 7 [#allocation0]
    %v70 = vld [vmem:[%s69] ss:$-1 sm:$0xff]
    %v71 = vrot.slane %v70, 1
    %v72 = vlaneseq
    %v73 = vshrl.u32 %v72, 7
    %vm74 = vcmp.lt.s32.totalorder %v73, 7
    %75 = vst.msk [vmem:[#allocation1] sm:$0xff] %vm74, %v71
    %s76 = scalar_lea.vmem [#allocation1], 8
    %s77 = scalar_lea.vmem [#allocation0], 16
    %s78 = scalar_lea.vmem %s77, 7 [#allocation0]
    %v79 = vld [vmem:[%s78] ss:$-1 sm:$0xff]
    %v80 = vrot.slane %v79, 1
    %81 = vst [vmem:[%s76] sm:$0xff] %v80
    %s82 = scalar_lea.vmem %s77, 8 [#allocation0]
    %s83 = scalar_lea.vmem %s82, 7 [#allocation0]
    %v84 = vld [vmem:[%s83] ss:$-1 sm:$0xff]
    %v85 = vrot.slane %v84, 1
    %v86 = vlaneseq
    %v87 = vshrl.u32 %v86, 7
    %vm88 = vcmp.lt.s32.totalorder %v87, 7
    %89 = vst.msk [vmem:[%s76] sm:$0xff] %vm88, %v85
    %s90 = scalar_lea.vmem [#allocation1], 16
    %s91 = scalar_lea.vmem [#allocation0], 32
    %s92 = scalar_lea.vmem %s91, 7 [#allocation0]
    %v93 = vld [vmem:[%s92] ss:$-1 sm:$0xff]
    %v94 = vrot.slane %v93, 1
    %95 = vst [vmem:[%s90] sm:$0xff] %v94
    %s96 = scalar_lea.vmem %s91, 8 [#allocation0]
    %s97 = scalar_lea.vmem %s96, 7 [#allocation0]
    %v98 = vld [vmem:[%s97] ss:$-1 sm:$0xff]
    %v99 = vrot.slane %v98, 1
    %v100 = vlaneseq
    %v101 = vshrl.u32 %v100, 7
    %vm102 = vcmp.lt.s32.totalorder %v101, 7
    %103 = vst.msk [vmem:[%s90] sm:$0xff] %vm102, %v99
    %s104 = scalar_lea.vmem [#allocation1], 24
    %s105 = scalar_lea.vmem [#allocation0], 48
    %s106 = scalar_lea.vmem %s105, 7 [#allocation0]
    %v107 = vld [vmem:[%s106] ss:$-1 sm:$0xff]
    %v108 = vrot.slane %v107, 1
    %109 = vst [vmem:[%s104] sm:$0xff] %v108
    %s110 = scalar_lea.vmem %s105, 8 [#allocation0]
    %s111 = scalar_lea.vmem %s110, 7 [#allocation0]
    %v112 = vld [vmem:[%s111] ss:$-1 sm:$0xff]
    %v113 = vrot.slane %v112, 1
    %v114 = vlaneseq
    %v115 = vshrl.u32 %v114, 7
    %vm116 = vcmp.lt.s32.totalorder %v115, 7
    %117 = vst.msk [vmem:[%s104] sm:$0xff] %vm116, %v113
    %s118 = scalar_lea.vmem [#allocation1], 32
    %s119 = scalar_lea.vmem [#allocation0], 64
    %s120 = scalar_lea.vmem %s119, 7 [#allocation0]
    %v121 = vld [vmem:[%s120] ss:$-1 sm:$0xff]
    %v122 = vrot.slane %v121, 1
    %123 = vst [vmem:[%s118] sm:$0xff] %v122
    %s124 = scalar_lea.vmem %s119, 8 [#allocation0]
    %s125 = scalar_lea.vmem %s124, 7 [#allocation0]
    %v126 = vld [vmem:[%s125] ss:$-1 sm:$0xff]
    %v127 = vrot.slane %v126, 1
    %v128 = vlaneseq
    %v129 = vshrl.u32 %v128, 7
    %vm130 = vcmp.lt.s32.totalorder %v129, 7
    %131 = vst.msk [vmem:[%s118] sm:$0xff] %vm130, %v127
    %s132 = scalar_lea.vmem [#allocation1], 40
    %s133 = scalar_lea.vmem [#allocation0], 80
    %s134 = scalar_lea.vmem %s133, 7 [#allocation0]
    %v135 = vld [vmem:[%s134] ss:$-1 sm:$0xff]
    %v136 = vrot.slane %v135, 1
    %137 = vst [vmem:[%s132] sm:$0xff] %v136
    %s138 = scalar_lea.vmem %s133, 8 [#allocation0]
    %s139 = scalar_lea.vmem %s138, 7 [#allocation0]
    %v140 = vld [vmem:[%s139] ss:$-1 sm:$0xff]
    %v141 = vrot.slane %v140, 1
    %v142 = vlaneseq
    %v143 = vshrl.u32 %v142, 7
    %vm144 = vcmp.lt.s32.totalorder %v143, 7
    %145 = vst.msk [vmem:[%s132] sm:$0xff] %vm144, %v141
    %s146 = scalar_lea.vmem [#allocation1], 48
    %s147 = scalar_lea.vmem [#allocation0], 96
    %s148 = scalar_lea.vmem %s147, 7 [#allocation0]
    %v149 = vld [vmem:[%s148] ss:$-1 sm:$0xff]
    %v150 = vrot.slane %v149, 1
    %151 = vst [vmem:[%s146] sm:$0xff] %v150
    %s152 = scalar_lea.vmem %s147, 8 [#allocation0]
    %s153 = scalar_lea.vmem %s152, 7 [#allocation0]
    %v154 = vld [vmem:[%s153] ss:$-1 sm:$0xff]
    %v155 = vrot.slane %v154, 1
    %v156 = vlaneseq
    %v157 = vshrl.u32 %v156, 7
    %vm158 = vcmp.lt.s32.totalorder %v157, 7
    %159 = vst.msk [vmem:[%s146] sm:$0xff] %vm158, %v155
    %s160 = scalar_lea.vmem [#allocation1], 56
    %s161 = scalar_lea.vmem [#allocation0], 112
    %s162 = scalar_lea.vmem %s161, 7 [#allocation0]
    %v163 = vld [vmem:[%s162] ss:$-1 sm:$0xff]
    %v164 = vrot.slane %v163, 1
    %165 = vst [vmem:[%s160] sm:$0xff] %v164
    %s166 = scalar_lea.vmem %s161, 8 [#allocation0]
    %s167 = scalar_lea.vmem %s166, 7 [#allocation0]
    %v168 = vld [vmem:[%s167] ss:$-1 sm:$0xff]
    %v169 = vrot.slane %v168, 1
    %v170 = vlaneseq
    %v171 = vshrl.u32 %v170, 7
    %vm172 = vcmp.lt.s32.totalorder %v171, 7
    %173 = vst.msk [vmem:[%s160] sm:$0xff] %vm172, %v169
    // Predicated region
    $region36: #{reverse.0} parent=1 // pred_check
      _
    $region37: #{reverse.0} parent=1 // pred_check_branch
      %175 = sbr.rel (0) target = $region39
    $region38: #{reverse.0} parent=1 // pred_region
      // Predicated region
      $region40: #{reverse.0} parent=38 // pred_check
        _
      $region41: #{reverse.0} parent=38 // pred_check_branch
        %177 = sbr.rel (0) target = $region43
      $region42: #{reverse.0} parent=38 // pred_region
        // Predicated region
        $region55: #{reverse.0} parent=42 // pred_check
          _
        $region56: #{reverse.0} parent=42 // pred_check_branch
          %207 = sbr.rel (0) target = $region58
        $region57: #{reverse.0} parent=42 // pred_region
          loop: start=0, step=1, limit=1
          $region59: #{reverse.0} parent=57 // loop_pre_header
            _
          $region60: #{reverse.0} parent=57 // loop_header
            %s209 = sphi 0, %s213
            %p210 = scmp.ge.s32.totalorder %s209, 1
            %s214 = sphi [#allocation1], [#allocation1]
            %s215 = sphi %s1, %s1
          $region61: #{reverse.0} parent=57 // loop_header_branch
            %212 = sbr.rel (%p210) target = $region65
          $region62: #{reverse.0} parent=57 // loop_body
            %v216 = vld [vmem:[%s214] sm:$0xff]
            %217 = vst [vmem:[%s215] sm:$0xff] %v216
            %v218 = vld [vmem:[%s214 + $0x8] sm:$0xff]
            %219 = vst [vmem:[%s215 + $0x8] sm:$0xff] %v218
            %v220 = vld [vmem:[%s214 + $0x10] sm:$0xff]
            %221 = vst [vmem:[%s215 + $0x10] sm:$0xff] %v220
            %v222 = vld [vmem:[%s214 + $0x18] sm:$0xff]
            %223 = vst [vmem:[%s215 + $0x18] sm:$0xff] %v222
            %v224 = vld [vmem:[%s214 + $0x20] sm:$0xff]
            %225 = vst [vmem:[%s215 + $0x20] sm:$0xff] %v224
            %v226 = vld [vmem:[%s214 + $0x28] sm:$0xff]
            %227 = vst [vmem:[%s215 + $0x28] sm:$0xff] %v226
            %v228 = vld [vmem:[%s214 + $0x30] sm:$0xff]
            %229 = vst [vmem:[%s215 + $0x30] sm:$0xff] %v228
            %v230 = vld [vmem:[%s214 + $0x38] sm:$0xff]
            %231 = vst [vmem:[%s215 + $0x38] sm:$0xff] %v230
          $region63: #{reverse.0} parent=57 // loop_footer
            %s213 = sadd.s32 1, %s209
          $region64: #{reverse.0} parent=57 // loop_footer_branch
            %208 = sbr.rel target = $region60
          $region65: #{reverse.0} parent=57 // loop_exit
            _
        $region58: #{reverse.0} parent=42 // pred_fallthru
          _
        // Predicated region
        $region66: #{reverse.0} parent=42 // pred_check
          _
        $region67: #{reverse.0} parent=42 // pred_check_branch
          %233 = sbr.rel target = $region69
        $region68: #{reverse.0} parent=42 // pred_region
          _
        $region69: #{reverse.0} parent=42 // pred_fallthru
          _
      $region43: #{reverse.0} parent=38 // pred_fallthru
        _
      // Predicated region
      $region44: #{reverse.0} parent=38 // pred_check
        _
      $region45: #{reverse.0} parent=38 // pred_check_branch
        %179 = sbr.rel target = $region47
      $region46: #{reverse.0} parent=38 // pred_region
        %s181 = ssub.s32 256, 1
        loop: start=0, step=1, limit=1
        $region48: #{reverse.0} parent=46 // loop_pre_header
          _
        $region49: #{reverse.0} parent=46 // loop_header
          %s183 = sphi 0, %s187
          %p184 = scmp.ge.s32.totalorder %s183, 1
          %s188 = sphi [#allocation1], [#allocation1]
          %s189 = sphi %s1, %s1
        $region50: #{reverse.0} parent=46 // loop_header_branch
          %186 = sbr.rel (%p184) target = $region54
        $region51: #{reverse.0} parent=46 // loop_body
          %v190 = vld [vmem:[%s188] sm:%s181]
          %191 = vst [vmem:[%s189] sm:%s181] %v190
          %v192 = vld [vmem:[%s188 + $0x8] sm:%s181]
          %193 = vst [vmem:[%s189 + $0x8] sm:%s181] %v192
          %v194 = vld [vmem:[%s188 + $0x10] sm:%s181]
          %195 = vst [vmem:[%s189 + $0x10] sm:%s181] %v194
          %v196 = vld [vmem:[%s188 + $0x18] sm:%s181]
          %197 = vst [vmem:[%s189 + $0x18] sm:%s181] %v196
          %v198 = vld [vmem:[%s188 + $0x20] sm:%s181]
          %199 = vst [vmem:[%s189 + $0x20] sm:%s181] %v198
          %v200 = vld [vmem:[%s188 + $0x28] sm:%s181]
          %201 = vst [vmem:[%s189 + $0x28] sm:%s181] %v200
          %v202 = vld [vmem:[%s188 + $0x30] sm:%s181]
          %203 = vst [vmem:[%s189 + $0x30] sm:%s181] %v202
          %v204 = vld [vmem:[%s188 + $0x38] sm:%s181]
          %205 = vst [vmem:[%s189 + $0x38] sm:%s181] %v204
        $region52: #{reverse.0} parent=46 // loop_footer
          %s187 = sadd.s32 1, %s183
        $region53: #{reverse.0} parent=46 // loop_footer_branch
          %182 = sbr.rel target = $region49
        $region54: #{reverse.0} parent=46 // loop_exit
          _
      $region47: #{reverse.0} parent=38 // pred_fallthru
        _
    $region39: #{reverse.0} parent=1 // pred_fallthru
      _
    %234 = vnop

// kernel: ffm_forward.13
$region0: #{ffm_forward.13}
  #allocation0 [shape = 'u32[]', space=smem, size = 0x4, offset = 0x4, fixed_abs, tag = 'smem constant byte address 0x4 - core index']
  #allocation1 [shape = 'u32[144,128]{1,0:T(1,128)}', space=vmem, size = 0x12000, scoped, tag = 'internal scratch']
  %s0 = inlined_call_operand.vmem [shape: f32[8,64], index: 0, kind: input, shape index: {}]
  %s1 = inlined_call_operand.vmem [shape: f32[64,128], index: 1, kind: input, shape index: {}]
  %s2 = inlined_call_operand.vmem [shape: f32[8,1], index: 2, kind: input, shape index: {}]
  %s3 = inlined_call_operand.vmem [shape: f32[8,128], index: 3, kind: output, shape index: {}]
  %s4 = sld [smem:[#allocation0]]
  $region22: #{ffm_forward.13} parent=0
    _
  %s6 = ssub.s32 1, %s4
  %s7 = scalar_select 0, %s6, %s4
  // Predicated region
  $region2: #{ffm_forward.13} parent=0 // pred_check
    _
  $region3: #{ffm_forward.13} parent=0 // pred_check_branch
    %9 = sbr.rel (0) target = $region5
  $region4: #{ffm_forward.13} parent=0 // pred_region
    _
  $region5: #{ffm_forward.13} parent=0 // pred_fallthru
    _
  // Predicated region
  $region6: #{ffm_forward.13} parent=0 // pred_check
    _
  $region7: #{ffm_forward.13} parent=0 // pred_check_branch
    %11 = sbr.rel (0) target = $region9
  $region8: #{ffm_forward.13} parent=0 // pred_region
    _
  $region9: #{ffm_forward.13} parent=0 // pred_fallthru
    _
  // Predicated region
  $region10: #{ffm_forward.13} parent=0 // pred_check
    _
  $region11: #{ffm_forward.13} parent=0 // pred_check_branch
    %13 = sbr.rel (0) target = $region13
  $region12: #{ffm_forward.13} parent=0 // pred_region
    _
  $region13: #{ffm_forward.13} parent=0 // pred_fallthru
    _
  %v14 = vld [vmem:[%s0] sm:$0xff]
  %v15 = vld [vmem:[%s1] sm:$0xff]
  %v16 = vld [vmem:[%s1 + $0x8] sm:$0xff]
  %v17 = vld [vmem:[%s1 + $0x10] sm:$0xff]
  %v18 = vld [vmem:[%s1 + $0x18] sm:$0xff]
  %v19 = vld [vmem:[%s1 + $0x20] sm:$0xff]
  %v20 = vld [vmem:[%s1 + $0x28] sm:$0xff]
  %v21 = vld [vmem:[%s1 + $0x30] sm:$0xff]
  %v22 = vld [vmem:[%s1 + $0x38] sm:$0xff]
  %v23 = vld [vmem:[%s2] sm:$0xff]
  %25 = vset.pattern.permute.xlu0 0
  %26 = vperm.xlu0 %25, %v23
  %v27 = vpop.permute.xlu0 %26
  %vm29 = vcmask 523264
  %v31 = vsel %vm29, %v14, 0
  %33 = vmatprep.subr.mxu0 0.0
  %34 = vmatpush1.msra.mxu0 0.0
  %35 = vmatprep.subr.mxu0 0.0
  %36 = vmatpush1.msra.mxu0 0.0
  %37 = vmatprep.subr.mxu0 0.0
  %38 = vmatpush1.msra.mxu0 0.0
  %39 = vmatprep.subr.mxu0 0.0
  %40 = vmatpush1.msra.mxu0 0.0
  %41 = vmatprep.subr.mxu0 0.0
  %42 = vmatpush1.msra.mxu0 0.0
  %43 = vmatprep.subr.mxu0 0.0
  %44 = vmatpush1.msra.mxu0 0.0
  %45 = vmatprep.subr.mxu0 0.0
  %46 = vmatpush1.msra.mxu0 0.0
  %47 = vmatprep.subr.mxu0 0.0
  %48 = vmatpush1.msra.mxu0 0.0
  %49 = vmatprep.subr.mxu0 0.0
  %50 = vmatpush1.msra.mxu0 %v22
  %51 = vmatprep.subr.mxu0 0.0
  %52 = vmatpush1.msra.mxu0 %v21
  %53 = vmatprep.subr.mxu0 0.0
  %54 = vmatpush1.msra.mxu0 %v20
  %55 = vmatprep.subr.mxu0 0.0
  %56 = vmatpush1.msra.mxu0 %v19
  %57 = vmatprep.subr.mxu0 0.0
  %58 = vmatpush1.msra.mxu0 %v18
  %59 = vmatprep.subr.mxu0 0.0
  %60 = vmatpush1.msra.mxu0 %v17
  %61 = vmatprep.subr.mxu0 0.0
  %62 = vmatpush1.msra.mxu0 %v16
  %63 = vmatprep.subr.mxu0 0.0
  %64 = vmatpush1.msra.mxu0 %v15
  %65 = vmatprep.subr.mxu0 0.0
  %66 = vmatpush2.msra.mxu0 0.0
  %67 = vmatprep.subr.mxu0 0.0
  %68 = vmatpush2.msra.mxu0 0.0
  %69 = vmatprep.subr.mxu0 0.0
  %70 = vmatpush2.msra.mxu0 0.0
  %71 = vmatprep.subr.mxu0 0.0
  %72 = vmatpush2.msra.mxu0 0.0
  %73 = vmatprep.subr.mxu0 0.0
  %74 = vmatpush2.msra.mxu0 0.0
  %75 = vmatprep.subr.mxu0 0.0
  %76 = vmatpush2.msra.mxu0 0.0
  %77 = vmatprep.subr.mxu0 0.0
  %78 = vmatpush2.msra.mxu0 0.0
  %79 = vmatprep.subr.mxu0 0.0
  %80 = vmatpush2.msra.mxu0 0.0
  %81 = vmatprep.subr.mxu0 0.0
  %82 = vmatpush2.msra.mxu0 0.0
  %83 = vmatprep.subr.mxu0 0.0
  %84 = vmatpush2.msra.mxu0 0.0
  %85 = vmatprep.subr.mxu0 0.0
  %86 = vmatpush2.msra.mxu0 0.0
  %87 = vmatprep.subr.mxu0 0.0
  %88 = vmatpush2.msra.mxu0 0.0
  %89 = vmatprep.subr.mxu0 0.0
  %90 = vmatpush2.msra.mxu0 0.0
  %91 = vmatprep.subr.mxu0 0.0
  %92 = vmatpush2.msra.mxu0 0.0
  %93 = vmatprep.subr.mxu0 0.0
  %94 = vmatpush2.msra.mxu0 0.0
  %95 = vmatprep.subr.mxu0 0.0
  %96 = vmatpush2.msra.mxu0 0.0
  %97 = vmatprep.mubr.f32.mxu0 0.0
  %98 = vmatmul.mubr.f32.gmra.mxu0 %v31
  %v99 = vpop.f32.mrf.mxu0
  %v100 = vadd.f32 %v27, %v99
  %v101 = vpop.f32.mrf.mxu0
  %102 = vdwg.mxu0
  %103 = vst [vmem:[%s3] sm:$0xff] %v100
  // Predicated region
  $region14: #{ffm_forward.13} parent=0 // pred_check
    _
  $region15: #{ffm_forward.13} parent=0 // pred_check_branch
    %105 = sbr.rel (0) target = $region17
  $region16: #{ffm_forward.13} parent=0 // pred_region
    _
  $region17: #{ffm_forward.13} parent=0 // pred_fallthru
    _
  // Predicated region
  $region18: #{ffm_forward.13} parent=0 // pred_check
    _
  $region19: #{ffm_forward.13} parent=0 // pred_check_branch
    %107 = sbr.rel (0) target = $region21
  $region20: #{ffm_forward.13} parent=0 // pred_region
    _
  $region21: #{ffm_forward.13} parent=0 // pred_fallthru
    _

// kernel: reverse.4
$region0: #{reverse.4}
  #allocation0 [shape = 's32[1]{0}', space=sflag, size = 0x4, scoped, tag = 'scoped memory for reverse.4']
  %s0 = inlined_call_operand.vmem [shape: f32[8,2,8,3], index: 0, kind: input, shape index: {}]
  %s1 = inlined_call_operand.vmem [shape: f32[8,2,8,3], index: 1, kind: output, shape index: {}]
  %s2 = scalar_lea.vmem %s0, 16
  %v3 = vld [vmem:[%s2] sm:$0xff]
  %4 = vst [vmem:[%s1] sm:$0xff] %v3
  %s5 = scalar_lea.vmem %s0, 40
  %v6 = vld [vmem:[%s5] sm:$0xff]
  %s7 = scalar_lea.vmem %s1, 24
  %8 = vst [vmem:[%s7] sm:$0xff] %v6
  %s9 = scalar_lea.vmem %s0, 8
  %v10 = vld [vmem:[%s9] sm:$0xff]
  %s11 = scalar_lea.vmem %s1, 8
  %12 = vst [vmem:[%s11] sm:$0xff] %v10
  %s13 = scalar_lea.vmem %s0, 32
  %v14 = vld [vmem:[%s13] sm:$0xff]
  %s15 = scalar_lea.vmem %s1, 32
  %16 = vst [vmem:[%s15] sm:$0xff] %v14
  %v17 = vld [vmem:[%s0] sm:$0xff]
  %s18 = scalar_lea.vmem %s1, 16
  %19 = vst [vmem:[%s18] sm:$0xff] %v17
  %s20 = scalar_lea.vmem %s0, 24
  %v21 = vld [vmem:[%s20] sm:$0xff]
  %s22 = scalar_lea.vmem %s1, 40
  %23 = vst [vmem:[%s22] sm:$0xff] %v21

// kernel: ffm_forward.14
$region0: #{ffm_forward.14}
  #allocation0 [shape = 'u32[]', space=smem, size = 0x4, offset = 0x4, fixed_abs, tag = 'smem constant byte address 0x4 - core index']
  #allocation1 [shape = 'u32[144,128]{1,0:T(1,128)}', space=vmem, size = 0x12000, scoped, tag = 'internal scratch']
  %s0 = inlined_call_operand.vmem [shape: f32[8,8], index: 0, kind: input, shape index: {}]
  %s1 = inlined_call_operand.vmem [shape: f32[8,80], index: 1, kind: input, shape index: {}]
  %s2 = inlined_call_operand.vmem [shape: f32[8,80], index: 2, kind: input, shape index: {}]
  %s3 = inlined_call_operand.vmem [shape: f32[8,1], index: 3, kind: input, shape index: {}]
  %s4 = inlined_call_operand.vmem [shape: f32[8,80], index: 4, kind: output, shape index: {0}]
  %s5 = inlined_call_operand.vmem [shape: f32[8,80], index: 5, kind: output, shape index: {1}]
  %6 = xla_tuple %s4, %s5
  %s7 = sld [smem:[#allocation0]]
  $region34: #{ffm_forward.14} parent=0
    _
  %s9 = ssub.s32 1, %s7
  %s10 = scalar_select 0, %s9, %s7
  // Predicated region
  $region2: #{ffm_forward.14} parent=0 // pred_check
    _
  $region3: #{ffm_forward.14} parent=0 // pred_check_branch
    %12 = sbr.rel (0) target = $region5
  $region4: #{ffm_forward.14} parent=0 // pred_region
    _
  $region5: #{ffm_forward.14} parent=0 // pred_fallthru
    _
  // Predicated region
  $region6: #{ffm_forward.14} parent=0 // pred_check
    _
  $region7: #{ffm_forward.14} parent=0 // pred_check_branch
    %14 = sbr.rel (0) target = $region9
  $region8: #{ffm_forward.14} parent=0 // pred_region
    _
  $region9: #{ffm_forward.14} parent=0 // pred_fallthru
    _
  // Predicated region
  $region10: #{ffm_forward.14} parent=0 // pred_check
    _
  $region11: #{ffm_forward.14} parent=0 // pred_check_branch
    %16 = sbr.rel (0) target = $region13
  $region12: #{ffm_forward.14} parent=0 // pred_region
    _
  $region13: #{ffm_forward.14} parent=0 // pred_fallthru
    _
  // Predicated region
  $region14: #{ffm_forward.14} parent=0 // pred_check
    _
  $region15: #{ffm_forward.14} parent=0 // pred_check_branch
    %18 = sbr.rel (0) target = $region17
  $region16: #{ffm_forward.14} parent=0 // pred_region
    _
  $region17: #{ffm_forward.14} parent=0 // pred_fallthru
    _
  %v19 = vld [vmem:[%s0] sm:$0xff]
  %v20 = vld [vmem:[%s3] sm:$0xff]
  %v21 = vld [vmem:[%s1] sm:$0xff]
  %23 = vset.pattern.permute.xlu0 0
  %24 = vperm.xlu0 %23, %v20
  %v25 = vpop.permute.xlu0 %24
  %vm27 = vcmask 64512
  %v29 = vsel %vm27, %v19, 0
  %31 = vmatprep.subr.mxu0 0.0
  %32 = vmatpush1.msra.mxu0 0.0
  %33 = vmatprep.subr.mxu0 0.0
  %34 = vmatpush1.msra.mxu0 0.0
  %35 = vmatprep.subr.mxu0 0.0
  %36 = vmatpush1.msra.mxu0 0.0
  %37 = vmatprep.subr.mxu0 0.0
  %38 = vmatpush1.msra.mxu0 0.0
  %39 = vmatprep.subr.mxu0 0.0
  %40 = vmatpush1.msra.mxu0 0.0
  %41 = vmatprep.subr.mxu0 0.0
  %42 = vmatpush1.msra.mxu0 0.0
  %43 = vmatprep.subr.mxu0 0.0
  %44 = vmatpush1.msra.mxu0 0.0
  %45 = vmatprep.subr.mxu0 0.0
  %46 = vmatpush1.msra.mxu0 0.0
  %47 = vmatprep.subr.mxu0 0.0
  %48 = vmatpush1.msra.mxu0 0.0
  %49 = vmatprep.subr.mxu0 0.0
  %50 = vmatpush1.msra.mxu0 0.0
  %51 = vmatprep.subr.mxu0 0.0
  %52 = vmatpush1.msra.mxu0 0.0
  %53 = vmatprep.subr.mxu0 0.0
  %54 = vmatpush1.msra.mxu0 0.0
  %55 = vmatprep.subr.mxu0 0.0
  %56 = vmatpush1.msra.mxu0 0.0
  %57 = vmatprep.subr.mxu0 0.0
  %58 = vmatpush1.msra.mxu0 0.0
  %59 = vmatprep.subr.mxu0 0.0
  %60 = vmatpush1.msra.mxu0 0.0
  %61 = vmatprep.subr.mxu0 0.0
  %62 = vmatpush1.msra.mxu0 %v21
  %63 = vmatprep.subr.mxu0 0.0
  %64 = vmatpush2.msra.mxu0 0.0
  %65 = vmatprep.subr.mxu0 0.0
  %66 = vmatpush2.msra.mxu0 0.0
  %67 = vmatprep.subr.mxu0 0.0
  %68 = vmatpush2.msra.mxu0 0.0
  %69 = vmatprep.subr.mxu0 0.0
  %70 = vmatpush2.msra.mxu0 0.0
  %71 = vmatprep.subr.mxu0 0.0
  %72 = vmatpush2.msra.mxu0 0.0
  %73 = vmatprep.subr.mxu0 0.0
  %74 = vmatpush2.msra.mxu0 0.0
  %75 = vmatprep.subr.mxu0 0.0
  %76 = vmatpush2.msra.mxu0 0.0
  %77 = vmatprep.subr.mxu0 0.0
  %78 = vmatpush2.msra.mxu0 0.0
  %79 = vmatprep.subr.mxu0 0.0
  %80 = vmatpush2.msra.mxu0 0.0
  %81 = vmatprep.subr.mxu0 0.0
  %82 = vmatpush2.msra.mxu0 0.0
  %83 = vmatprep.subr.mxu0 0.0
  %84 = vmatpush2.msra.mxu0 0.0
  %85 = vmatprep.subr.mxu0 0.0
  %86 = vmatpush2.msra.mxu0 0.0
  %87 = vmatprep.subr.mxu0 0.0
  %88 = vmatpush2.msra.mxu0 0.0
  %89 = vmatprep.subr.mxu0 0.0
  %90 = vmatpush2.msra.mxu0 0.0
  %91 = vmatprep.subr.mxu0 0.0
  %92 = vmatpush2.msra.mxu0 0.0
  %93 = vmatprep.subr.mxu0 0.0
  %94 = vmatpush2.msra.mxu0 0.0
  %95 = vmatprep.mubr.f32.mxu0 0.0
  %96 = vmatmul.mubr.f32.gmra.mxu0 %v29
  %v97 = vpop.f32.mrf.mxu0
  %v98 = vadd.f32 %v25, %v97
  %v99 = vpop.f32.mrf.mxu0
  %100 = vdwg.mxu0
  %vm101 = vcmask 654336
  %102 = vst.msk [vmem:[%s4] sm:$0xff] %vm101, %v98
  %v103 = vld [vmem:[%s2] sm:$0xff]
  %104 = vmatprep.subr.mxu0 0.0
  %105 = vmatpush1.msra.mxu0 0.0
  %106 = vmatprep.subr.mxu0 0.0
  %107 = vmatpush1.msra.mxu0 0.0
  %108 = vmatprep.subr.mxu0 0.0
  %109 = vmatpush1.msra.mxu0 0.0
  %110 = vmatprep.subr.mxu0 0.0
  %111 = vmatpush1.msra.mxu0 0.0
  %112 = vmatprep.subr.mxu0 0.0
  %113 = vmatpush1.msra.mxu0 0.0
  %114 = vmatprep.subr.mxu0 0.0
  %115 = vmatpush1.msra.mxu0 0.0
  %116 = vmatprep.subr.mxu0 0.0
  %117 = vmatpush1.msra.mxu0 0.0
  %118 = vmatprep.subr.mxu0 0.0
  %119 = vmatpush1.msra.mxu0 0.0
  %120 = vmatprep.subr.mxu0 0.0
  %121 = vmatpush1.msra.mxu0 0.0
  %122 = vmatprep.subr.mxu0 0.0
  %123 = vmatpush1.msra.mxu0 0.0
  %124 = vmatprep.subr.mxu0 0.0
  %125 = vmatpush1.msra.mxu0 0.0
  %126 = vmatprep.subr.mxu0 0.0
  %127 = vmatpush1.msra.mxu0 0.0
  %128 = vmatprep.subr.mxu0 0.0
  %129 = vmatpush1.msra.mxu0 0.0
  %130 = vmatprep.subr.mxu0 0.0
  %131 = vmatpush1.msra.mxu0 0.0
  %132 = vmatprep.subr.mxu0 0.0
  %133 = vmatpush1.msra.mxu0 0.0
  %134 = vmatprep.subr.mxu0 0.0
  %135 = vmatpush1.msra.mxu0 %v103
  %136 = vmatprep.subr.mxu0 0.0
  %137 = vmatpush2.msra.mxu0 0.0
  %138 = vmatprep.subr.mxu0 0.0
  %139 = vmatpush2.msra.mxu0 0.0
  %140 = vmatprep.subr.mxu0 0.0
  %141 = vmatpush2.msra.mxu0 0.0
  %142 = vmatprep.subr.mxu0 0.0
  %143 = vmatpush2.msra.mxu0 0.0
  %144 = vmatprep.subr.mxu0 0.0
  %145 = vmatpush2.msra.mxu0 0.0
  %146 = vmatprep.subr.mxu0 0.0
  %147 = vmatpush2.msra.mxu0 0.0
  %148 = vmatprep.subr.mxu0 0.0
  %149 = vmatpush2.msra.mxu0 0.0
  %150 = vmatprep.subr.mxu0 0.0
  %151 = vmatpush2.msra.mxu0 0.0
  %152 = vmatprep.subr.mxu0 0.0
  %153 = vmatpush2.msra.mxu0 0.0
  %154 = vmatprep.subr.mxu0 0.0
  %155 = vmatpush2.msra.mxu0 0.0
  %156 = vmatprep.subr.mxu0 0.0
  %157 = vmatpush2.msra.mxu0 0.0
  %158 = vmatprep.subr.mxu0 0.0
  %159 = vmatpush2.msra.mxu0 0.0
  %160 = vmatprep.subr.mxu0 0.0
  %161 = vmatpush2.msra.mxu0 0.0
  %162 = vmatprep.subr.mxu0 0.0
  %163 = vmatpush2.msra.mxu0 0.0
  %164 = vmatprep.subr.mxu0 0.0
  %165 = vmatpush2.msra.mxu0 0.0
  %166 = vmatprep.subr.mxu0 0.0
  %167 = vmatpush2.msra.mxu0 0.0
  %168 = vmatprep.mubr.f32.mxu0 0.0
  %169 = vmatmul.mubr.f32.gmra.mxu0 %v29
  %v170 = vpop.f32.mrf.mxu0
  %v171 = vadd.f32 %v25, %v170
  %v172 = vpop.f32.mrf.mxu0
  %173 = vdwg.mxu0
  %174 = vst.msk [vmem:[%s5] sm:$0xff] %vm101, %v171
  // Predicated region
  $region18: #{ffm_forward.14} parent=0 // pred_check
    _
  $region19: #{ffm_forward.14} parent=0 // pred_check_branch
    %176 = sbr.rel (0) target = $region21
  $region20: #{ffm_forward.14} parent=0 // pred_region
    _
  $region21: #{ffm_forward.14} parent=0 // pred_fallthru
    _
  // Predicated region
  $region22: #{ffm_forward.14} parent=0 // pred_check
    _
  $region23: #{ffm_forward.14} parent=0 // pred_check_branch
    %178 = sbr.rel (0) target = $region25
  $region24: #{ffm_forward.14} parent=0 // pred_region
    _
  $region25: #{ffm_forward.14} parent=0 // pred_fallthru
    _
  // Predicated region
  $region26: #{ffm_forward.14} parent=0 // pred_check
    _
  $region27: #{ffm_forward.14} parent=0 // pred_check_branch
    %180 = sbr.rel (0) target = $region29
  $region28: #{ffm_forward.14} parent=0 // pred_region
    _
  $region29: #{ffm_forward.14} parent=0 // pred_fallthru
    _
  // Predicated region
  $region30: #{ffm_forward.14} parent=0 // pred_check
    _
  $region31: #{ffm_forward.14} parent=0 // pred_check_branch
    %182 = sbr.rel (0) target = $region33
  $region32: #{ffm_forward.14} parent=0 // pred_region
    _
  $region33: #{ffm_forward.14} parent=0 // pred_fallthru
    _

// kernel: ffm_forward.15
$region0: #{ffm_forward.15}
  #allocation0 [shape = 'u32[]', space=smem, size = 0x4, offset = 0x4, fixed_abs, tag = 'smem constant byte address 0x4 - core index']
  #allocation1 [shape = 'u32[144,128]{1,0:T(1,128)}', space=vmem, size = 0x12000, scoped, tag = 'internal scratch']
  %s0 = inlined_call_operand.vmem [shape: f32[16,128], index: 0, kind: input, shape index: {}]
  %s1 = inlined_call_operand.vmem [shape: f32[128,32], index: 1, kind: input, shape index: {}]
  %s2 = inlined_call_operand.vmem [shape: f32[16,1], index: 2, kind: input, shape index: {}]
  %s3 = inlined_call_operand.vmem [shape: f32[16,32], index: 3, kind: output, shape index: {}]
  %s4 = sld [smem:[#allocation0]]
  $region22: #{ffm_forward.15} parent=0
    _
  %s6 = ssub.s32 1, %s4
  %s7 = scalar_select 0, %s6, %s4
  // Predicated region
  $region2: #{ffm_forward.15} parent=0 // pred_check
    _
  $region3: #{ffm_forward.15} parent=0 // pred_check_branch
    %9 = sbr.rel (0) target = $region5
  $region4: #{ffm_forward.15} parent=0 // pred_region
    _
  $region5: #{ffm_forward.15} parent=0 // pred_fallthru
    _
  // Predicated region
  $region6: #{ffm_forward.15} parent=0 // pred_check
    _
  $region7: #{ffm_forward.15} parent=0 // pred_check_branch
    %11 = sbr.rel (0) target = $region9
  $region8: #{ffm_forward.15} parent=0 // pred_region
    _
  $region9: #{ffm_forward.15} parent=0 // pred_fallthru
    _
  // Predicated region
  $region10: #{ffm_forward.15} parent=0 // pred_check
    _
  $region11: #{ffm_forward.15} parent=0 // pred_check_branch
    %13 = sbr.rel (0) target = $region13
  $region12: #{ffm_forward.15} parent=0 // pred_region
    _
  $region13: #{ffm_forward.15} parent=0 // pred_fallthru
    _
  %v14 = vld [vmem:[%s0] sm:$0xff]
  %v15 = vld [vmem:[%s0 + $0x8] sm:$0xff]
  %v16 = vld [vmem:[%s1] sm:$0xff]
  %v17 = vld [vmem:[%s1 + $0x8] sm:$0xff]
  %v18 = vld [vmem:[%s1 + $0x10] sm:$0xff]
  %v19 = vld [vmem:[%s1 + $0x18] sm:$0xff]
  %v20 = vld [vmem:[%s1 + $0x20] sm:$0xff]
  %v21 = vld [vmem:[%s1 + $0x28] sm:$0xff]
  %v22 = vld [vmem:[%s1 + $0x30] sm:$0xff]
  %v23 = vld [vmem:[%s1 + $0x38] sm:$0xff]
  %v24 = vld [vmem:[%s1 + $0x40] sm:$0xff]
  %v25 = vld [vmem:[%s1 + $0x48] sm:$0xff]
  %v26 = vld [vmem:[%s1 + $0x50] sm:$0xff]
  %v27 = vld [vmem:[%s1 + $0x58] sm:$0xff]
  %v28 = vld [vmem:[%s1 + $0x60] sm:$0xff]
  %v29 = vld [vmem:[%s1 + $0x68] sm:$0xff]
  %v30 = vld [vmem:[%s1 + $0x70] sm:$0xff]
  %v31 = vld [vmem:[%s1 + $0x78] sm:$0xff]
  %v32 = vld [vmem:[%s2] sm:$0xff]
  %v33 = vld [vmem:[%s2 + $0x8] sm:$0xff]
  %35 = vset.pattern.permute.xlu0 0
  %36 = vperm.xlu0 %35, %v32
  %v37 = vpop.permute.xlu0 %36
  %40 = vset.pattern.permute.xlu0 0
  %41 = vperm.xlu0 %40, %v33
  %v42 = vpop.permute.xlu0 %41
  %44 = vmatprep.subr.mxu0 0.0
  %45 = vmatpush1.msra.mxu0 %v31
  %46 = vmatprep.subr.mxu0 0.0
  %47 = vmatpush1.msra.mxu0 %v30
  %48 = vmatprep.subr.mxu0 0.0
  %49 = vmatpush1.msra.mxu0 %v29
  %50 = vmatprep.subr.mxu0 0.0
  %51 = vmatpush1.msra.mxu0 %v28
  %52 = vmatprep.subr.mxu0 0.0
  %53 = vmatpush1.msra.mxu0 %v27
  %54 = vmatprep.subr.mxu0 0.0
  %55 = vmatpush1.msra.mxu0 %v26
  %56 = vmatprep.subr.mxu0 0.0
  %57 = vmatpush1.msra.mxu0 %v25
  %58 = vmatprep.subr.mxu0 0.0
  %59 = vmatpush1.msra.mxu0 %v24
  %60 = vmatprep.subr.mxu0 0.0
  %61 = vmatpush1.msra.mxu0 %v23
  %62 = vmatprep.subr.mxu0 0.0
  %63 = vmatpush1.msra.mxu0 %v22
  %64 = vmatprep.subr.mxu0 0.0
  %65 = vmatpush1.msra.mxu0 %v21
  %66 = vmatprep.subr.mxu0 0.0
  %67 = vmatpush1.msra.mxu0 %v20
  %68 = vmatprep.subr.mxu0 0.0
  %69 = vmatpush1.msra.mxu0 %v19
  %70 = vmatprep.subr.mxu0 0.0
  %71 = vmatpush1.msra.mxu0 %v18
  %72 = vmatprep.subr.mxu0 0.0
  %73 = vmatpush1.msra.mxu0 %v17
  %74 = vmatprep.subr.mxu0 0.0
  %75 = vmatpush1.msra.mxu0 %v16
  %76 = vmatprep.subr.mxu0 0.0
  %77 = vmatpush2.msra.mxu0 0.0
  %78 = vmatprep.subr.mxu0 0.0
  %79 = vmatpush2.msra.mxu0 0.0
  %80 = vmatprep.subr.mxu0 0.0
  %81 = vmatpush2.msra.mxu0 0.0
  %82 = vmatprep.subr.mxu0 0.0
  %83 = vmatpush2.msra.mxu0 0.0
  %84 = vmatprep.subr.mxu0 0.0
  %85 = vmatpush2.msra.mxu0 0.0
  %86 = vmatprep.subr.mxu0 0.0
  %87 = vmatpush2.msra.mxu0 0.0
  %88 = vmatprep.subr.mxu0 0.0
  %89 = vmatpush2.msra.mxu0 0.0
  %90 = vmatprep.subr.mxu0 0.0
  %91 = vmatpush2.msra.mxu0 0.0
  %92 = vmatprep.subr.mxu0 0.0
  %93 = vmatpush2.msra.mxu0 0.0
  %94 = vmatprep.subr.mxu0 0.0
  %95 = vmatpush2.msra.mxu0 0.0
  %96 = vmatprep.subr.mxu0 0.0
  %97 = vmatpush2.msra.mxu0 0.0
  %98 = vmatprep.subr.mxu0 0.0
  %99 = vmatpush2.msra.mxu0 0.0
  %100 = vmatprep.subr.mxu0 0.0
  %101 = vmatpush2.msra.mxu0 0.0
  %102 = vmatprep.subr.mxu0 0.0
  %103 = vmatpush2.msra.mxu0 0.0
  %104 = vmatprep.subr.mxu0 0.0
  %105 = vmatpush2.msra.mxu0 0.0
  %106 = vmatprep.subr.mxu0 0.0
  %107 = vmatpush2.msra.mxu0 0.0
  %108 = vmatprep.mubr.f32.mxu0 0.0
  %109 = vmatmul.mubr.f32.gmra.mxu0 %v14
  %v110 = vpop.f32.mrf.mxu0
  %v111 = vadd.f32 %v37, %v110
  %v112 = vpop.f32.mrf.mxu0
  %113 = vmatprep.mubr.f32.mxu0 0.0
  %114 = vmatmul.mubr.f32.gmra.mxu0 %v15
  %v115 = vpop.f32.mrf.mxu0
  %v116 = vadd.f32 %v42, %v115
  %v117 = vpop.f32.mrf.mxu0
  %118 = vdwg.mxu0
  %vm119 = vcmask 261120
  %120 = vst.msk [vmem:[%s3] sm:$0xff] %vm119, %v111
  %121 = vst.msk [vmem:[%s3 + $0x8] sm:$0xff] %vm119, %v116
  // Predicated region
  $region14: #{ffm_forward.15} parent=0 // pred_check
    _
  $region15: #{ffm_forward.15} parent=0 // pred_check_branch
    %123 = sbr.rel (0) target = $region17
  $region16: #{ffm_forward.15} parent=0 // pred_region
    _
  $region17: #{ffm_forward.15} parent=0 // pred_fallthru
    _
  // Predicated region
  $region18: #{ffm_forward.15} parent=0 // pred_check
    _
  $region19: #{ffm_forward.15} parent=0 // pred_check_branch
    %125 = sbr.rel (0) target = $region21
  $region20: #{ffm_forward.15} parent=0 // pred_region
    _
  $region21: #{ffm_forward.15} parent=0 // pred_fallthru
    _

// kernel: ffm_forward.16
$region0: #{ffm_forward.16}
  #allocation0 [shape = 'u32[]', space=smem, size = 0x4, offset = 0x4, fixed_abs, tag = 'smem constant byte address 0x4 - core index']
  #allocation1 [shape = 'u32[144,128]{1,0:T(1,128)}', space=vmem, size = 0x12000, scoped, tag = 'internal scratch']
  %s0 = inlined_call_operand.vmem [shape: f32[16,16], index: 0, kind: input, shape index: {}]
  %s1 = inlined_call_operand.vmem [shape: f32[16,24], index: 1, kind: input, shape index: {}]
  %s2 = inlined_call_operand.vmem [shape: f32[16,24], index: 2, kind: input, shape index: {}]
  %s3 = inlined_call_operand.vmem [shape: f32[16,1], index: 3, kind: input, shape index: {}]
  %s4 = inlined_call_operand.vmem [shape: f32[16,24], index: 4, kind: output, shape index: {0}]
  %s5 = inlined_call_operand.vmem [shape: f32[16,24], index: 5, kind: output, shape index: {1}]
  %6 = xla_tuple %s4, %s5
  %s7 = sld [smem:[#allocation0]]
  $region34: #{ffm_forward.16} parent=0
    _
  %s9 = ssub.s32 1, %s7
  %s10 = scalar_select 0, %s9, %s7
  // Predicated region
  $region2: #{ffm_forward.16} parent=0 // pred_check
    _
  $region3: #{ffm_forward.16} parent=0 // pred_check_branch
    %12 = sbr.rel (0) target = $region5
  $region4: #{ffm_forward.16} parent=0 // pred_region
    _
  $region5: #{ffm_forward.16} parent=0 // pred_fallthru
    _
  // Predicated region
  $region6: #{ffm_forward.16} parent=0 // pred_check
    _
  $region7: #{ffm_forward.16} parent=0 // pred_check_branch
    %14 = sbr.rel (0) target = $region9
  $region8: #{ffm_forward.16} parent=0 // pred_region
    _
  $region9: #{ffm_forward.16} parent=0 // pred_fallthru
    _
  // Predicated region
  $region10: #{ffm_forward.16} parent=0 // pred_check
    _
  $region11: #{ffm_forward.16} parent=0 // pred_check_branch
    %16 = sbr.rel (0) target = $region13
  $region12: #{ffm_forward.16} parent=0 // pred_region
    _
  $region13: #{ffm_forward.16} parent=0 // pred_fallthru
    _
  // Predicated region
  $region14: #{ffm_forward.16} parent=0 // pred_check
    _
  $region15: #{ffm_forward.16} parent=0 // pred_check_branch
    %18 = sbr.rel (0) target = $region17
  $region16: #{ffm_forward.16} parent=0 // pred_region
    _
  $region17: #{ffm_forward.16} parent=0 // pred_fallthru
    _
  %v19 = vld [vmem:[%s0] sm:$0xff]
  %v20 = vld [vmem:[%s0 + $0x8] sm:$0xff]
  %v21 = vld [vmem:[%s3] sm:$0xff]
  %v22 = vld [vmem:[%s3 + $0x8] sm:$0xff]
  %v23 = vld [vmem:[%s1] sm:$0xff]
  %v24 = vld [vmem:[%s1 + $0x8] sm:$0xff]
  %26 = vset.pattern.permute.xlu0 0
  %27 = vperm.xlu0 %26, %v21
  %v28 = vpop.permute.xlu0 %27
  %31 = vset.pattern.permute.xlu0 0
  %32 = vperm.xlu0 %31, %v22
  %v33 = vpop.permute.xlu0 %32
  %vm35 = vcmask 130048
  %v37 = vsel %vm35, %v19, 0
  %v40 = vsel %vm35, %v20, 0
  %42 = vmatprep.subr.mxu0 0.0
  %43 = vmatpush1.msra.mxu0 0.0
  %44 = vmatprep.subr.mxu0 0.0
  %45 = vmatpush1.msra.mxu0 0.0
  %46 = vmatprep.subr.mxu0 0.0
  %47 = vmatpush1.msra.mxu0 0.0
  %48 = vmatprep.subr.mxu0 0.0
  %49 = vmatpush1.msra.mxu0 0.0
  %50 = vmatprep.subr.mxu0 0.0
  %51 = vmatpush1.msra.mxu0 0.0
  %52 = vmatprep.subr.mxu0 0.0
  %53 = vmatpush1.msra.mxu0 0.0
  %54 = vmatprep.subr.mxu0 0.0
  %55 = vmatpush1.msra.mxu0 0.0
  %56 = vmatprep.subr.mxu0 0.0
  %57 = vmatpush1.msra.mxu0 0.0
  %58 = vmatprep.subr.mxu0 0.0
  %59 = vmatpush1.msra.mxu0 0.0
  %60 = vmatprep.subr.mxu0 0.0
  %61 = vmatpush1.msra.mxu0 0.0
  %62 = vmatprep.subr.mxu0 0.0
  %63 = vmatpush1.msra.mxu0 0.0
  %64 = vmatprep.subr.mxu0 0.0
  %65 = vmatpush1.msra.mxu0 0.0
  %66 = vmatprep.subr.mxu0 0.0
  %67 = vmatpush1.msra.mxu0 0.0
  %68 = vmatprep.subr.mxu0 0.0
  %69 = vmatpush1.msra.mxu0 0.0
  %70 = vmatprep.subr.mxu0 0.0
  %71 = vmatpush1.msra.mxu0 %v24
  %72 = vmatprep.subr.mxu0 0.0
  %73 = vmatpush1.msra.mxu0 %v23
  %74 = vmatprep.subr.mxu0 0.0
  %75 = vmatpush2.msra.mxu0 0.0
  %76 = vmatprep.subr.mxu0 0.0
  %77 = vmatpush2.msra.mxu0 0.0
  %78 = vmatprep.subr.mxu0 0.0
  %79 = vmatpush2.msra.mxu0 0.0
  %80 = vmatprep.subr.mxu0 0.0
  %81 = vmatpush2.msra.mxu0 0.0
  %82 = vmatprep.subr.mxu0 0.0
  %83 = vmatpush2.msra.mxu0 0.0
  %84 = vmatprep.subr.mxu0 0.0
  %85 = vmatpush2.msra.mxu0 0.0
  %86 = vmatprep.subr.mxu0 0.0
  %87 = vmatpush2.msra.mxu0 0.0
  %88 = vmatprep.subr.mxu0 0.0
  %89 = vmatpush2.msra.mxu0 0.0
  %90 = vmatprep.subr.mxu0 0.0
  %91 = vmatpush2.msra.mxu0 0.0
  %92 = vmatprep.subr.mxu0 0.0
  %93 = vmatpush2.msra.mxu0 0.0
  %94 = vmatprep.subr.mxu0 0.0
  %95 = vmatpush2.msra.mxu0 0.0
  %96 = vmatprep.subr.mxu0 0.0
  %97 = vmatpush2.msra.mxu0 0.0
  %98 = vmatprep.subr.mxu0 0.0
  %99 = vmatpush2.msra.mxu0 0.0
  %100 = vmatprep.subr.mxu0 0.0
  %101 = vmatpush2.msra.mxu0 0.0
  %102 = vmatprep.subr.mxu0 0.0
  %103 = vmatpush2.msra.mxu0 0.0
  %104 = vmatprep.subr.mxu0 0.0
  %105 = vmatpush2.msra.mxu0 0.0
  %106 = vmatprep.mubr.f32.mxu0 0.0
  %107 = vmatmul.mubr.f32.gmra.mxu0 %v37
  %v108 = vpop.f32.mrf.mxu0
  %v109 = vadd.f32 %v28, %v108
  %v110 = vpop.f32.mrf.mxu0
  %111 = vmatprep.mubr.f32.mxu0 0.0
  %112 = vmatmul.mubr.f32.gmra.mxu0 %v40
  %v113 = vpop.f32.mrf.mxu0
  %v114 = vadd.f32 %v33, %v113
  %v115 = vpop.f32.mrf.mxu0
  %116 = vdwg.mxu0
  %vm117 = vcmask 195584
  %118 = vst.msk [vmem:[%s4] sm:$0xff] %vm117, %v109
  %119 = vst.msk [vmem:[%s4 + $0x8] sm:$0xff] %vm117, %v114
  %v120 = vld [vmem:[%s2] sm:$0xff]
  %v121 = vld [vmem:[%s2 + $0x8] sm:$0xff]
  %122 = vmatprep.subr.mxu0 0.0
  %123 = vmatpush1.msra.mxu0 0.0
  %124 = vmatprep.subr.mxu0 0.0
  %125 = vmatpush1.msra.mxu0 0.0
  %126 = vmatprep.subr.mxu0 0.0
  %127 = vmatpush1.msra.mxu0 0.0
  %128 = vmatprep.subr.mxu0 0.0
  %129 = vmatpush1.msra.mxu0 0.0
  %130 = vmatprep.subr.mxu0 0.0
  %131 = vmatpush1.msra.mxu0 0.0
  %132 = vmatprep.subr.mxu0 0.0
  %133 = vmatpush1.msra.mxu0 0.0
  %134 = vmatprep.subr.mxu0 0.0
  %135 = vmatpush1.msra.mxu0 0.0
  %136 = vmatprep.subr.mxu0 0.0
  %137 = vmatpush1.msra.mxu0 0.0
  %138 = vmatprep.subr.mxu0 0.0
  %139 = vmatpush1.msra.mxu0 0.0
  %140 = vmatprep.subr.mxu0 0.0
  %141 = vmatpush1.msra.mxu0 0.0
  %142 = vmatprep.subr.mxu0 0.0
  %143 = vmatpush1.msra.mxu0 0.0
  %144 = vmatprep.subr.mxu0 0.0
  %145 = vmatpush1.msra.mxu0 0.0
  %146 = vmatprep.subr.mxu0 0.0
  %147 = vmatpush1.msra.mxu0 0.0
  %148 = vmatprep.subr.mxu0 0.0
  %149 = vmatpush1.msra.mxu0 0.0
  %150 = vmatprep.subr.mxu0 0.0
  %151 = vmatpush1.msra.mxu0 %v121
  %152 = vmatprep.subr.mxu0 0.0
  %153 = vmatpush1.msra.mxu0 %v120
  %154 = vmatprep.subr.mxu0 0.0
  %155 = vmatpush2.msra.mxu0 0.0
  %156 = vmatprep.subr.mxu0 0.0
  %157 = vmatpush2.msra.mxu0 0.0
  %158 = vmatprep.subr.mxu0 0.0
  %159 = vmatpush2.msra.mxu0 0.0
  %160 = vmatprep.subr.mxu0 0.0
  %161 = vmatpush2.msra.mxu0 0.0
  %162 = vmatprep.subr.mxu0 0.0
  %163 = vmatpush2.msra.mxu0 0.0
  %164 = vmatprep.subr.mxu0 0.0
  %165 = vmatpush2.msra.mxu0 0.0
  %166 = vmatprep.subr.mxu0 0.0
  %167 = vmatpush2.msra.mxu0 0.0
  %168 = vmatprep.subr.mxu0 0.0
  %169 = vmatpush2.msra.mxu0 0.0
  %170 = vmatprep.subr.mxu0 0.0
  %171 = vmatpush2.msra.mxu0 0.0
  %172 = vmatprep.subr.mxu0 0.0
  %173 = vmatpush2.msra.mxu0 0.0
  %174 = vmatprep.subr.mxu0 0.0
  %175 = vmatpush2.msra.mxu0 0.0
  %176 = vmatprep.subr.mxu0 0.0
  %177 = vmatpush2.msra.mxu0 0.0
  %178 = vmatprep.subr.mxu0 0.0
  %179 = vmatpush2.msra.mxu0 0.0
  %180 = vmatprep.subr.mxu0 0.0
  %181 = vmatpush2.msra.mxu0 0.0
  %182 = vmatprep.subr.mxu0 0.0
  %183 = vmatpush2.msra.mxu0 0.0
  %184 = vmatprep.subr.mxu0 0.0
  %185 = vmatpush2.msra.mxu0 0.0
  %186 = vmatprep.mubr.f32.mxu0 0.0
  %187 = vmatmul.mubr.f32.gmra.mxu0 %v37
  %v188 = vpop.f32.mrf.mxu0
  %v189 = vadd.f32 %v28, %v188
  %v190 = vpop.f32.mrf.mxu0
  %191 = vmatprep.mubr.f32.mxu0 0.0
  %192 = vmatmul.mubr.f32.gmra.mxu0 %v40
  %v193 = vpop.f32.mrf.mxu0
  %v194 = vadd.f32 %v33, %v193
  %v195 = vpop.f32.mrf.mxu0
  %196 = vdwg.mxu0
  %197 = vst.msk [vmem:[%s5] sm:$0xff] %vm117, %v189
  %198 = vst.msk [vmem:[%s5 + $0x8] sm:$0xff] %vm117, %v194
  // Predicated region
  $region18: #{ffm_forward.16} parent=0 // pred_check
    _
  $region19: #{ffm_forward.16} parent=0 // pred_check_branch
    %200 = sbr.rel (0) target = $region21
  $region20: #{ffm_forward.16} parent=0 // pred_region
    _
  $region21: #{ffm_forward.16} parent=0 // pred_fallthru
    _
  // Predicated region
  $region22: #{ffm_forward.16} parent=0 // pred_check
    _
  $region23: #{ffm_forward.16} parent=0 // pred_check_branch
    %202 = sbr.rel (0) target = $region25
  $region24: #{ffm_forward.16} parent=0 // pred_region
    _
  $region25: #{ffm_forward.16} parent=0 // pred_fallthru
    _
  // Predicated region
  $region26: #{ffm_forward.16} parent=0 // pred_check
    _
  $region27: #{ffm_forward.16} parent=0 // pred_check_branch
    %204 = sbr.rel (0) target = $region29
  $region28: #{ffm_forward.16} parent=0 // pred_region
    _
  $region29: #{ffm_forward.16} parent=0 // pred_fallthru
    _
  // Predicated region
  $region30: #{ffm_forward.16} parent=0 // pred_check
    _
  $region31: #{ffm_forward.16} parent=0 // pred_check_branch
    %206 = sbr.rel (0) target = $region33
  $region32: #{ffm_forward.16} parent=0 // pred_region
    _
  $region33: #{ffm_forward.16} parent=0 // pred_fallthru
    _

// kernel: ffm_forward.17
$region0: #{ffm_forward.17}
  #allocation0 [shape = 'u32[]', space=smem, size = 0x4, offset = 0x4, fixed_abs, tag = 'smem constant byte address 0x4 - core index']
  #allocation1 [shape = 'u32[144,128]{1,0:T(1,128)}', space=vmem, size = 0x12000, scoped, tag = 'internal scratch']
  %s0 = inlined_call_operand.vmem [shape: f32[32,16], index: 0, kind: input, shape index: {}]
  %s1 = inlined_call_operand.vmem [shape: f32[16,32], index: 1, kind: input, shape index: {}]
  %s2 = inlined_call_operand.vmem [shape: f32[32,1], index: 2, kind: input, shape index: {}]
  %s3 = inlined_call_operand.vmem [shape: f32[32,32], index: 3, kind: output, shape index: {}]
  %s4 = sld [smem:[#allocation0]]
  $region22: #{ffm_forward.17} parent=0
    _
  %s6 = ssub.s32 1, %s4
  %s7 = scalar_select 0, %s6, %s4
  // Predicated region
  $region2: #{ffm_forward.17} parent=0 // pred_check
    _
  $region3: #{ffm_forward.17} parent=0 // pred_check_branch
    %9 = sbr.rel (0) target = $region5
  $region4: #{ffm_forward.17} parent=0 // pred_region
    _
  $region5: #{ffm_forward.17} parent=0 // pred_fallthru
    _
  // Predicated region
  $region6: #{ffm_forward.17} parent=0 // pred_check
    _
  $region7: #{ffm_forward.17} parent=0 // pred_check_branch
    %11 = sbr.rel (0) target = $region9
  $region8: #{ffm_forward.17} parent=0 // pred_region
    _
  $region9: #{ffm_forward.17} parent=0 // pred_fallthru
    _
  // Predicated region
  $region10: #{ffm_forward.17} parent=0 // pred_check
    _
  $region11: #{ffm_forward.17} parent=0 // pred_check_branch
    %13 = sbr.rel (0) target = $region13
  $region12: #{ffm_forward.17} parent=0 // pred_region
    _
  $region13: #{ffm_forward.17} parent=0 // pred_fallthru
    _
  %v14 = vld [vmem:[%s0] sm:$0xff]
  %v15 = vld [vmem:[%s0 + $0x8] sm:$0xff]
  %v16 = vld [vmem:[%s0 + $0x10] sm:$0xff]
  %v17 = vld [vmem:[%s0 + $0x18] sm:$0xff]
  %v18 = vld [vmem:[%s1] sm:$0xff]
  %v19 = vld [vmem:[%s1 + $0x8] sm:$0xff]
  %v20 = vld [vmem:[%s2] sm:$0xff]
  %v21 = vld [vmem:[%s2 + $0x8] sm:$0xff]
  %v22 = vld [vmem:[%s2 + $0x10] sm:$0xff]
  %v23 = vld [vmem:[%s2 + $0x18] sm:$0xff]
  %25 = vset.pattern.permute.xlu0 0
  %26 = vperm.xlu0 %25, %v20
  %v27 = vpop.permute.xlu0 %26
  %30 = vset.pattern.permute.xlu0 0
  %31 = vperm.xlu0 %30, %v21
  %v32 = vpop.permute.xlu0 %31
  %35 = vset.pattern.permute.xlu0 0
  %36 = vperm.xlu0 %35, %v22
  %v37 = vpop.permute.xlu0 %36
  %40 = vset.pattern.permute.xlu0 0
  %41 = vperm.xlu0 %40, %v23
  %v42 = vpop.permute.xlu0 %41
  %vm44 = vcmask 130048
  %v46 = vsel %vm44, %v14, 0
  %v49 = vsel %vm44, %v15, 0
  %v52 = vsel %vm44, %v16, 0
  %v55 = vsel %vm44, %v17, 0
  %57 = vmatprep.subr.mxu0 0.0
  %58 = vmatpush1.msra.mxu0 0.0
  %59 = vmatprep.subr.mxu0 0.0
  %60 = vmatpush1.msra.mxu0 0.0
  %61 = vmatprep.subr.mxu0 0.0
  %62 = vmatpush1.msra.mxu0 0.0
  %63 = vmatprep.subr.mxu0 0.0
  %64 = vmatpush1.msra.mxu0 0.0
  %65 = vmatprep.subr.mxu0 0.0
  %66 = vmatpush1.msra.mxu0 0.0
  %67 = vmatprep.subr.mxu0 0.0
  %68 = vmatpush1.msra.mxu0 0.0
  %69 = vmatprep.subr.mxu0 0.0
  %70 = vmatpush1.msra.mxu0 0.0
  %71 = vmatprep.subr.mxu0 0.0
  %72 = vmatpush1.msra.mxu0 0.0
  %73 = vmatprep.subr.mxu0 0.0
  %74 = vmatpush1.msra.mxu0 0.0
  %75 = vmatprep.subr.mxu0 0.0
  %76 = vmatpush1.msra.mxu0 0.0
  %77 = vmatprep.subr.mxu0 0.0
  %78 = vmatpush1.msra.mxu0 0.0
  %79 = vmatprep.subr.mxu0 0.0
  %80 = vmatpush1.msra.mxu0 0.0
  %81 = vmatprep.subr.mxu0 0.0
  %82 = vmatpush1.msra.mxu0 0.0
  %83 = vmatprep.subr.mxu0 0.0
  %84 = vmatpush1.msra.mxu0 0.0
  %85 = vmatprep.subr.mxu0 0.0
  %86 = vmatpush1.msra.mxu0 %v19
  %87 = vmatprep.subr.mxu0 0.0
  %88 = vmatpush1.msra.mxu0 %v18
  %89 = vmatprep.subr.mxu0 0.0
  %90 = vmatpush2.msra.mxu0 0.0
  %91 = vmatprep.subr.mxu0 0.0
  %92 = vmatpush2.msra.mxu0 0.0
  %93 = vmatprep.subr.mxu0 0.0
  %94 = vmatpush2.msra.mxu0 0.0
  %95 = vmatprep.subr.mxu0 0.0
  %96 = vmatpush2.msra.mxu0 0.0
  %97 = vmatprep.subr.mxu0 0.0
  %98 = vmatpush2.msra.mxu0 0.0
  %99 = vmatprep.subr.mxu0 0.0
  %100 = vmatpush2.msra.mxu0 0.0
  %101 = vmatprep.subr.mxu0 0.0
  %102 = vmatpush2.msra.mxu0 0.0
  %103 = vmatprep.subr.mxu0 0.0
  %104 = vmatpush2.msra.mxu0 0.0
  %105 = vmatprep.subr.mxu0 0.0
  %106 = vmatpush2.msra.mxu0 0.0
  %107 = vmatprep.subr.mxu0 0.0
  %108 = vmatpush2.msra.mxu0 0.0
  %109 = vmatprep.subr.mxu0 0.0
  %110 = vmatpush2.msra.mxu0 0.0
  %111 = vmatprep.subr.mxu0 0.0
  %112 = vmatpush2.msra.mxu0 0.0
  %113 = vmatprep.subr.mxu0 0.0
  %114 = vmatpush2.msra.mxu0 0.0
  %115 = vmatprep.subr.mxu0 0.0
  %116 = vmatpush2.msra.mxu0 0.0
  %117 = vmatprep.subr.mxu0 0.0
  %118 = vmatpush2.msra.mxu0 0.0
  %119 = vmatprep.subr.mxu0 0.0
  %120 = vmatpush2.msra.mxu0 0.0
  %121 = vmatprep.mubr.f32.mxu0 0.0
  %122 = vmatmul.mubr.f32.gmra.mxu0 %v46
  %v123 = vpop.f32.mrf.mxu0
  %v124 = vadd.f32 %v27, %v123
  %v125 = vpop.f32.mrf.mxu0
  %126 = vmatprep.mubr.f32.mxu0 0.0
  %127 = vmatmul.mubr.f32.gmra.mxu0 %v49
  %v128 = vpop.f32.mrf.mxu0
  %v129 = vadd.f32 %v32, %v128
  %v130 = vpop.f32.mrf.mxu0
  %131 = vmatprep.mubr.f32.mxu0 0.0
  %132 = vmatmul.mubr.f32.gmra.mxu0 %v52
  %v133 = vpop.f32.mrf.mxu0
  %v134 = vadd.f32 %v37, %v133
  %v135 = vpop.f32.mrf.mxu0
  %136 = vmatprep.mubr.f32.mxu0 0.0
  %137 = vmatmul.mubr.f32.gmra.mxu0 %v55
  %v138 = vpop.f32.mrf.mxu0
  %v139 = vadd.f32 %v42, %v138
  %v140 = vpop.f32.mrf.mxu0
  %141 = vdwg.mxu0
  %vm142 = vcmask 261120
  %143 = vst.msk [vmem:[%s3] sm:$0xff] %vm142, %v124
  %144 = vst.msk [vmem:[%s3 + $0x8] sm:$0xff] %vm142, %v129
  %145 = vst.msk [vmem:[%s3 + $0x10] sm:$0xff] %vm142, %v134
  %146 = vst.msk [vmem:[%s3 + $0x18] sm:$0xff] %vm142, %v139
  // Predicated region
  $region14: #{ffm_forward.17} parent=0 // pred_check
    _
  $region15: #{ffm_forward.17} parent=0 // pred_check_branch
    %148 = sbr.rel (0) target = $region17
  $region16: #{ffm_forward.17} parent=0 // pred_region
    _
  $region17: #{ffm_forward.17} parent=0 // pred_fallthru
    _
  // Predicated region
  $region18: #{ffm_forward.17} parent=0 // pred_check
    _
  $region19: #{ffm_forward.17} parent=0 // pred_check_branch
    %150 = sbr.rel (0) target = $region21
  $region20: #{ffm_forward.17} parent=0 // pred_region
    _
  $region21: #{ffm_forward.17} parent=0 // pred_fallthru
    _

// kernel: ffm_forward.19
$region0: #{ffm_forward.19}
  #allocation0 [shape = 'u32[]', space=smem, size = 0x4, offset = 0x4, fixed_abs, tag = 'smem constant byte address 0x4 - core index']
  #allocation1 [shape = 'u32[144,128]{1,0:T(1,128)}', space=vmem, size = 0x12000, scoped, tag = 'internal scratch']
  %s0 = inlined_call_operand.vmem [shape: f32[16,8], index: 0, kind: input, shape index: {}]
  %s1 = inlined_call_operand.vmem [shape: f32[8,128], index: 1, kind: input, shape index: {}]
  %s2 = inlined_call_operand.vmem [shape: f32[16,1], index: 2, kind: input, shape index: {}]
  %s3 = inlined_call_operand.vmem [shape: f32[16,128], index: 3, kind: output, shape index: {}]
  %s4 = sld [smem:[#allocation0]]
  $region22: #{ffm_forward.19} parent=0
    _
  %s6 = ssub.s32 1, %s4
  %s7 = scalar_select 0, %s6, %s4
  // Predicated region
  $region2: #{ffm_forward.19} parent=0 // pred_check
    _
  $region3: #{ffm_forward.19} parent=0 // pred_check_branch
    %9 = sbr.rel (0) target = $region5
  $region4: #{ffm_forward.19} parent=0 // pred_region
    _
  $region5: #{ffm_forward.19} parent=0 // pred_fallthru
    _
  // Predicated region
  $region6: #{ffm_forward.19} parent=0 // pred_check
    _
  $region7: #{ffm_forward.19} parent=0 // pred_check_branch
    %11 = sbr.rel (0) target = $region9
  $region8: #{ffm_forward.19} parent=0 // pred_region
    _
  $region9: #{ffm_forward.19} parent=0 // pred_fallthru
    _
  // Predicated region
  $region10: #{ffm_forward.19} parent=0 // pred_check
    _
  $region11: #{ffm_forward.19} parent=0 // pred_check_branch
    %13 = sbr.rel (0) target = $region13
  $region12: #{ffm_forward.19} parent=0 // pred_region
    _
  $region13: #{ffm_forward.19} parent=0 // pred_fallthru
    _
  %v14 = vld [vmem:[%s0] sm:$0xff]
  %v15 = vld [vmem:[%s0 + $0x8] sm:$0xff]
  %v16 = vld [vmem:[%s1] sm:$0xff]
  %v17 = vld [vmem:[%s2] sm:$0xff]
  %v18 = vld [vmem:[%s2 + $0x8] sm:$0xff]
  %20 = vset.pattern.permute.xlu0 0
  %21 = vperm.xlu0 %20, %v17
  %v22 = vpop.permute.xlu0 %21
  %25 = vset.pattern.permute.xlu0 0
  %26 = vperm.xlu0 %25, %v18
  %v27 = vpop.permute.xlu0 %26
  %vm29 = vcmask 64512
  %v31 = vsel %vm29, %v14, 0
  %v34 = vsel %vm29, %v15, 0
  %36 = vmatprep.subr.mxu0 0.0
  %37 = vmatpush1.msra.mxu0 0.0
  %38 = vmatprep.subr.mxu0 0.0
  %39 = vmatpush1.msra.mxu0 0.0
  %40 = vmatprep.subr.mxu0 0.0
  %41 = vmatpush1.msra.mxu0 0.0
  %42 = vmatprep.subr.mxu0 0.0
  %43 = vmatpush1.msra.mxu0 0.0
  %44 = vmatprep.subr.mxu0 0.0
  %45 = vmatpush1.msra.mxu0 0.0
  %46 = vmatprep.subr.mxu0 0.0
  %47 = vmatpush1.msra.mxu0 0.0
  %48 = vmatprep.subr.mxu0 0.0
  %49 = vmatpush1.msra.mxu0 0.0
  %50 = vmatprep.subr.mxu0 0.0
  %51 = vmatpush1.msra.mxu0 0.0
  %52 = vmatprep.subr.mxu0 0.0
  %53 = vmatpush1.msra.mxu0 0.0
  %54 = vmatprep.subr.mxu0 0.0
  %55 = vmatpush1.msra.mxu0 0.0
  %56 = vmatprep.subr.mxu0 0.0
  %57 = vmatpush1.msra.mxu0 0.0
  %58 = vmatprep.subr.mxu0 0.0
  %59 = vmatpush1.msra.mxu0 0.0
  %60 = vmatprep.subr.mxu0 0.0
  %61 = vmatpush1.msra.mxu0 0.0
  %62 = vmatprep.subr.mxu0 0.0
  %63 = vmatpush1.msra.mxu0 0.0
  %64 = vmatprep.subr.mxu0 0.0
  %65 = vmatpush1.msra.mxu0 0.0
  %66 = vmatprep.subr.mxu0 0.0
  %67 = vmatpush1.msra.mxu0 %v16
  %68 = vmatprep.subr.mxu0 0.0
  %69 = vmatpush2.msra.mxu0 0.0
  %70 = vmatprep.subr.mxu0 0.0
  %71 = vmatpush2.msra.mxu0 0.0
  %72 = vmatprep.subr.mxu0 0.0
  %73 = vmatpush2.msra.mxu0 0.0
  %74 = vmatprep.subr.mxu0 0.0
  %75 = vmatpush2.msra.mxu0 0.0
  %76 = vmatprep.subr.mxu0 0.0
  %77 = vmatpush2.msra.mxu0 0.0
  %78 = vmatprep.subr.mxu0 0.0
  %79 = vmatpush2.msra.mxu0 0.0
  %80 = vmatprep.subr.mxu0 0.0
  %81 = vmatpush2.msra.mxu0 0.0
  %82 = vmatprep.subr.mxu0 0.0
  %83 = vmatpush2.msra.mxu0 0.0
  %84 = vmatprep.subr.mxu0 0.0
  %85 = vmatpush2.msra.mxu0 0.0
  %86 = vmatprep.subr.mxu0 0.0
  %87 = vmatpush2.msra.mxu0 0.0
  %88 = vmatprep.subr.mxu0 0.0
  %89 = vmatpush2.msra.mxu0 0.0
  %90 = vmatprep.subr.mxu0 0.0
  %91 = vmatpush2.msra.mxu0 0.0
  %92 = vmatprep.subr.mxu0 0.0
  %93 = vmatpush2.msra.mxu0 0.0
  %94 = vmatprep.subr.mxu0 0.0
  %95 = vmatpush2.msra.mxu0 0.0
  %96 = vmatprep.subr.mxu0 0.0
  %97 = vmatpush2.msra.mxu0 0.0
  %98 = vmatprep.subr.mxu0 0.0
  %99 = vmatpush2.msra.mxu0 0.0
  %100 = vmatprep.mubr.f32.mxu0 0.0
  %101 = vmatmul.mubr.f32.gmra.mxu0 %v31
  %v102 = vpop.f32.mrf.mxu0
  %v103 = vadd.f32 %v22, %v102
  %v104 = vpop.f32.mrf.mxu0
  %105 = vmatprep.mubr.f32.mxu0 0.0
  %106 = vmatmul.mubr.f32.gmra.mxu0 %v34
  %v107 = vpop.f32.mrf.mxu0
  %v108 = vadd.f32 %v27, %v107
  %v109 = vpop.f32.mrf.mxu0
  %110 = vdwg.mxu0
  %111 = vst [vmem:[%s3] sm:$0xff] %v103
  %112 = vst [vmem:[%s3 + $0x8] sm:$0xff] %v108
  // Predicated region
  $region14: #{ffm_forward.19} parent=0 // pred_check
    _
  $region15: #{ffm_forward.19} parent=0 // pred_check_branch
    %114 = sbr.rel (0) target = $region17
  $region16: #{ffm_forward.19} parent=0 // pred_region
    _
  $region17: #{ffm_forward.19} parent=0 // pred_fallthru
    _
  // Predicated region
  $region18: #{ffm_forward.19} parent=0 // pred_check
    _
  $region19: #{ffm_forward.19} parent=0 // pred_check_branch
    %116 = sbr.rel (0) target = $region21
  $region20: #{ffm_forward.19} parent=0 // pred_region
    _
  $region21: #{ffm_forward.19} parent=0 // pred_fallthru
    _

// kernel: ffm_forward.18
$region0: #{ffm_forward.18}
  #allocation0 [shape = 'u32[]', space=smem, size = 0x4, offset = 0x4, fixed_abs, tag = 'smem constant byte address 0x4 - core index']
  #allocation1 [shape = 'u32[144,128]{1,0:T(1,128)}', space=vmem, size = 0x12000, scoped, tag = 'internal scratch']
  %s0 = inlined_call_operand.vmem [shape: f32[8,8], index: 0, kind: input, shape index: {}]
  %s1 = inlined_call_operand.vmem [shape: f32[8,128], index: 1, kind: input, shape index: {}]
  %s2 = inlined_call_operand.vmem [shape: f32[8,8], index: 2, kind: input, shape index: {}]
  %s3 = inlined_call_operand.vmem [shape: f32[8,128], index: 3, kind: input, shape index: {}]
  %s4 = inlined_call_operand.vmem [shape: f32[8,1], index: 4, kind: input, shape index: {}]
  %s5 = inlined_call_operand.vmem [shape: f32[8,128], index: 5, kind: output, shape index: {}]
  %s6 = sld [smem:[#allocation0]]
  $region30: #{ffm_forward.18} parent=0
    _
  %s8 = ssub.s32 1, %s6
  %s9 = scalar_select 0, %s8, %s6
  // Predicated region
  $region2: #{ffm_forward.18} parent=0 // pred_check
    _
  $region3: #{ffm_forward.18} parent=0 // pred_check_branch
    %11 = sbr.rel (0) target = $region5
  $region4: #{ffm_forward.18} parent=0 // pred_region
    _
  $region5: #{ffm_forward.18} parent=0 // pred_fallthru
    _
  // Predicated region
  $region6: #{ffm_forward.18} parent=0 // pred_check
    _
  $region7: #{ffm_forward.18} parent=0 // pred_check_branch
    %13 = sbr.rel (0) target = $region9
  $region8: #{ffm_forward.18} parent=0 // pred_region
    _
  $region9: #{ffm_forward.18} parent=0 // pred_fallthru
    _
  // Predicated region
  $region10: #{ffm_forward.18} parent=0 // pred_check
    _
  $region11: #{ffm_forward.18} parent=0 // pred_check_branch
    %15 = sbr.rel (0) target = $region13
  $region12: #{ffm_forward.18} parent=0 // pred_region
    _
  $region13: #{ffm_forward.18} parent=0 // pred_fallthru
    _
  // Predicated region
  $region14: #{ffm_forward.18} parent=0 // pred_check
    _
  $region15: #{ffm_forward.18} parent=0 // pred_check_branch
    %17 = sbr.rel (0) target = $region17
  $region16: #{ffm_forward.18} parent=0 // pred_region
    _
  $region17: #{ffm_forward.18} parent=0 // pred_fallthru
    _
  // Predicated region
  $region18: #{ffm_forward.18} parent=0 // pred_check
    _
  $region19: #{ffm_forward.18} parent=0 // pred_check_branch
    %19 = sbr.rel (0) target = $region21
  $region20: #{ffm_forward.18} parent=0 // pred_region
    _
  $region21: #{ffm_forward.18} parent=0 // pred_fallthru
    _
  %v20 = vld [vmem:[%s0] sm:$0xff]
  %v21 = vld [vmem:[%s1] sm:$0xff]
  %v22 = vld [vmem:[%s2] sm:$0xff]
  %v23 = vld [vmem:[%s3] sm:$0xff]
  %vm24 = vcmask 64512
  %v26 = vsel %vm24, %v22, 0
  %28 = vmatprep.subr.mxu0 0.0
  %29 = vmatpush1.msra.mxu0 0.0
  %30 = vmatprep.subr.mxu0 0.0
  %31 = vmatpush1.msra.mxu0 0.0
  %32 = vmatprep.subr.mxu0 0.0
  %33 = vmatpush1.msra.mxu0 0.0
  %34 = vmatprep.subr.mxu0 0.0
  %35 = vmatpush1.msra.mxu0 0.0
  %36 = vmatprep.subr.mxu0 0.0
  %37 = vmatpush1.msra.mxu0 0.0
  %38 = vmatprep.subr.mxu0 0.0
  %39 = vmatpush1.msra.mxu0 0.0
  %40 = vmatprep.subr.mxu0 0.0
  %41 = vmatpush1.msra.mxu0 0.0
  %42 = vmatprep.subr.mxu0 0.0
  %43 = vmatpush1.msra.mxu0 0.0
  %44 = vmatprep.subr.mxu0 0.0
  %45 = vmatpush1.msra.mxu0 0.0
  %46 = vmatprep.subr.mxu0 0.0
  %47 = vmatpush1.msra.mxu0 0.0
  %48 = vmatprep.subr.mxu0 0.0
  %49 = vmatpush1.msra.mxu0 0.0
  %50 = vmatprep.subr.mxu0 0.0
  %51 = vmatpush1.msra.mxu0 0.0
  %52 = vmatprep.subr.mxu0 0.0
  %53 = vmatpush1.msra.mxu0 0.0
  %54 = vmatprep.subr.mxu0 0.0
  %55 = vmatpush1.msra.mxu0 0.0
  %56 = vmatprep.subr.mxu0 0.0
  %57 = vmatpush1.msra.mxu0 0.0
  %58 = vmatprep.subr.mxu0 0.0
  %59 = vmatpush1.msra.mxu0 %v23
  %60 = vmatprep.subr.mxu0 0.0
  %61 = vmatpush2.msra.mxu0 0.0
  %62 = vmatprep.subr.mxu0 0.0
  %63 = vmatpush2.msra.mxu0 0.0
  %64 = vmatprep.subr.mxu0 0.0
  %65 = vmatpush2.msra.mxu0 0.0
  %66 = vmatprep.subr.mxu0 0.0
  %67 = vmatpush2.msra.mxu0 0.0
  %68 = vmatprep.subr.mxu0 0.0
  %69 = vmatpush2.msra.mxu0 0.0
  %70 = vmatprep.subr.mxu0 0.0
  %71 = vmatpush2.msra.mxu0 0.0
  %72 = vmatprep.subr.mxu0 0.0
  %73 = vmatpush2.msra.mxu0 0.0
  %74 = vmatprep.subr.mxu0 0.0
  %75 = vmatpush2.msra.mxu0 0.0
  %76 = vmatprep.subr.mxu0 0.0
  %77 = vmatpush2.msra.mxu0 0.0
  %78 = vmatprep.subr.mxu0 0.0
  %79 = vmatpush2.msra.mxu0 0.0
  %80 = vmatprep.subr.mxu0 0.0
  %81 = vmatpush2.msra.mxu0 0.0
  %82 = vmatprep.subr.mxu0 0.0
  %83 = vmatpush2.msra.mxu0 0.0
  %84 = vmatprep.subr.mxu0 0.0
  %85 = vmatpush2.msra.mxu0 0.0
  %86 = vmatprep.subr.mxu0 0.0
  %87 = vmatpush2.msra.mxu0 0.0
  %88 = vmatprep.subr.mxu0 0.0
  %89 = vmatpush2.msra.mxu0 0.0
  %90 = vmatprep.subr.mxu0 0.0
  %91 = vmatpush2.msra.mxu0 0.0
  %92 = vmatprep.mubr.f32.mxu0 0.0
  %93 = vmatmul.mubr.f32.gmra.mxu0 %v26
  %v94 = vpop.f32.mrf.mxu0
  %v95 = vadd.f32 0.0, %v94
  %v96 = vpop.f32.mrf.mxu0
  %97 = vdwg.mxu0
  %v99 = vsel %vm24, %v20, 0
  %101 = vmatprep.subr.mxu0 0.0
  %102 = vmatpush1.msra.mxu0 0.0
  %103 = vmatprep.subr.mxu0 0.0
  %104 = vmatpush1.msra.mxu0 0.0
  %105 = vmatprep.subr.mxu0 0.0
  %106 = vmatpush1.msra.mxu0 0.0
  %107 = vmatprep.subr.mxu0 0.0
  %108 = vmatpush1.msra.mxu0 0.0
  %109 = vmatprep.subr.mxu0 0.0
  %110 = vmatpush1.msra.mxu0 0.0
  %111 = vmatprep.subr.mxu0 0.0
  %112 = vmatpush1.msra.mxu0 0.0
  %113 = vmatprep.subr.mxu0 0.0
  %114 = vmatpush1.msra.mxu0 0.0
  %115 = vmatprep.subr.mxu0 0.0
  %116 = vmatpush1.msra.mxu0 0.0
  %117 = vmatprep.subr.mxu0 0.0
  %118 = vmatpush1.msra.mxu0 0.0
  %119 = vmatprep.subr.mxu0 0.0
  %120 = vmatpush1.msra.mxu0 0.0
  %121 = vmatprep.subr.mxu0 0.0
  %122 = vmatpush1.msra.mxu0 0.0
  %123 = vmatprep.subr.mxu0 0.0
  %124 = vmatpush1.msra.mxu0 0.0
  %125 = vmatprep.subr.mxu0 0.0
  %126 = vmatpush1.msra.mxu0 0.0
  %127 = vmatprep.subr.mxu0 0.0
  %128 = vmatpush1.msra.mxu0 0.0
  %129 = vmatprep.subr.mxu0 0.0
  %130 = vmatpush1.msra.mxu0 0.0
  %131 = vmatprep.subr.mxu0 0.0
  %132 = vmatpush1.msra.mxu0 %v21
  %133 = vmatprep.subr.mxu0 0.0
  %134 = vmatpush2.msra.mxu0 0.0
  %135 = vmatprep.subr.mxu0 0.0
  %136 = vmatpush2.msra.mxu0 0.0
  %137 = vmatprep.subr.mxu0 0.0
  %138 = vmatpush2.msra.mxu0 0.0
  %139 = vmatprep.subr.mxu0 0.0
  %140 = vmatpush2.msra.mxu0 0.0
  %141 = vmatprep.subr.mxu0 0.0
  %142 = vmatpush2.msra.mxu0 0.0
  %143 = vmatprep.subr.mxu0 0.0
  %144 = vmatpush2.msra.mxu0 0.0
  %145 = vmatprep.subr.mxu0 0.0
  %146 = vmatpush2.msra.mxu0 0.0
  %147 = vmatprep.subr.mxu0 0.0
  %148 = vmatpush2.msra.mxu0 0.0
  %149 = vmatprep.subr.mxu0 0.0
  %150 = vmatpush2.msra.mxu0 0.0
  %151 = vmatprep.subr.mxu0 0.0
  %152 = vmatpush2.msra.mxu0 0.0
  %153 = vmatprep.subr.mxu0 0.0
  %154 = vmatpush2.msra.mxu0 0.0
  %155 = vmatprep.subr.mxu0 0.0
  %156 = vmatpush2.msra.mxu0 0.0
  %157 = vmatprep.subr.mxu0 0.0
  %158 = vmatpush2.msra.mxu0 0.0
  %159 = vmatprep.subr.mxu0 0.0
  %160 = vmatpush2.msra.mxu0 0.0
  %161 = vmatprep.subr.mxu0 0.0
  %162 = vmatpush2.msra.mxu0 0.0
  %163 = vmatprep.subr.mxu0 0.0
  %164 = vmatpush2.msra.mxu0 0.0
  %165 = vmatprep.mubr.f32.mxu0 0.0
  %166 = vmatmul.mubr.f32.gmra.mxu0 %v99
  %v167 = vpop.f32.mrf.mxu0
  %v168 = vadd.f32 %v95, %v167
  %v169 = vpop.f32.mrf.mxu0
  %170 = vdwg.mxu0
  %v171 = vld [vmem:[%s4] sm:$0xff]
  %173 = vset.pattern.permute.xlu0 0
  %174 = vperm.xlu0 %173, %v171
  %v175 = vpop.permute.xlu0 %174
  %v177 = vadd.f32 %v168, %v175
  %178 = vst [vmem:[%s5] sm:$0xff] %v177
  // Predicated region
  $region22: #{ffm_forward.18} parent=0 // pred_check
    _
  $region23: #{ffm_forward.18} parent=0 // pred_check_branch
    %180 = sbr.rel (0) target = $region25
  $region24: #{ffm_forward.18} parent=0 // pred_region
    _
  $region25: #{ffm_forward.18} parent=0 // pred_fallthru
    _
  // Predicated region
  $region26: #{ffm_forward.18} parent=0 // pred_check
    _
  $region27: #{ffm_forward.18} parent=0 // pred_check_branch
    %182 = sbr.rel (0) target = $region29
  $region28: #{ffm_forward.18} parent=0 // pred_region
    _
  $region29: #{ffm_forward.18} parent=0 // pred_fallthru
    _

// kernel: ffm_forward.20
$region0: #{ffm_forward.20}
  #allocation0 [shape = 'u32[]', space=smem, size = 0x4, offset = 0x4, fixed_abs, tag = 'smem constant byte address 0x4 - core index']
  #allocation1 [shape = 'u32[144,128]{1,0:T(1,128)}', space=vmem, size = 0x12000, scoped, tag = 'internal scratch']
  %s0 = inlined_call_operand.vmem [shape: f32[4,4], index: 0, kind: input, shape index: {}]
  %s1 = inlined_call_operand.vmem [shape: f32[4,512], index: 1, kind: input, shape index: {}]
  %s2 = inlined_call_operand.vmem [shape: f32[4,4], index: 2, kind: input, shape index: {}]
  %s3 = inlined_call_operand.vmem [shape: f32[4,512], index: 3, kind: input, shape index: {}]
  %s4 = inlined_call_operand.vmem [shape: f32[4,1], index: 4, kind: input, shape index: {}]
  %s5 = inlined_call_operand.vmem [shape: f32[4,512], index: 5, kind: output, shape index: {}]
  %s6 = sld [smem:[#allocation0]]
  $region53: #{ffm_forward.20} parent=0
    _
  %s8 = ssub.s32 1, %s6
  %s9 = scalar_select 0, %s8, %s6
  loop: start=0, step=1, limit=4
  $region2: #{ffm_forward.20} parent=0 // loop_pre_header
    _
  $region3: #{ffm_forward.20} parent=0 // loop_header
    %s11 = sphi 0, %s15
    %p12 = scmp.ge.s32.totalorder %s11, 4
    %s19 = sphi 0, %s19
    %s21 = sphi 0, %s19
    %s22 = sphi 0, %s21
    %s36 = sphi 0, %s22
    %s42 = sphi 0, %s44
    %s45 = sphi 0, %s42
    %s46 = sphi 0, %s45
    %s62 = sphi 0, %s46
    %s66 = sphi 0, %s66
    %s68 = sphi 0, %s66
    %s69 = sphi 0, %s68
    %s83 = sphi 0, %s69
    %s89 = sphi 0, %s91
    %s92 = sphi 0, %s89
    %s93 = sphi 0, %s92
    %s109 = sphi 0, %s93
    %s113 = sphi 0, %s113
    %s115 = sphi 0, %s113
    %s116 = sphi 0, %s115
    %s130 = sphi 0, %s116
    %s136 = sphi 0, %s138
    %s139 = sphi 0, %s136
    %s140 = sphi 0, %s139
    %s156 = sphi 0, %s140
  $region4: #{ffm_forward.20} parent=0 // loop_header_branch
    %14 = sbr.rel (%p12) target = $region8
  $region5: #{ffm_forward.20} parent=0 // loop_body
    %s16 = ssub.s32 %s11, 1
    %s17 = ssub.s32 %s11, 2
    %s18 = sadd.s32 %s11, 1
    %s20 = sadd.s32 %s19, 1
    %p23 = scmp.eq.s32.totalorder %s11, 1
    %p24 = scmp.ne.s32.totalorder %s19, %s21
    %p25 = scmp.eq.s32.totalorder %s11, 0
    %p26 = por %p24, %p25
    %p27 = scmp.ne.s32.totalorder %s19, %s21
    %p28 = scmp.eq.s32.totalorder %s16, 1
    %p29 = por %p27, %p28
    %p30 = scmp.ne.s32.totalorder %s21, %s22
    %p31 = scmp.eq.s32.totalorder %s16, 0
    %p32 = por %p30, %p31
    %p33 = scmp.ne.s32.totalorder %s21, %s22
    %p34 = scmp.eq.s32.totalorder %s17, 1
    %p35 = por %p33, %p34
    %p37 = scmp.ne.s32.totalorder %s22, %s36
    %p38 = scmp.eq.s32.totalorder %s17, 0
    %p39 = por %p37, %p38
    %s40 = ssub.s32 %s11, %s18
    %p41 = scmp.eq.s32.totalorder %s40, 0
    %s43 = sadd.s32 %s42, 1
    %s44 = scalar_select %p41, %s42, %s43
    %p47 = pneg %p41
    %p48 = scmp.eq.s32.totalorder %s11, 1
    %p49 = por %p47, %p48
    %p50 = scmp.ne.s32.totalorder %s42, %s45
    %p51 = scmp.eq.s32.totalorder %s11, 0
    %p52 = por %p50, %p51
    %p53 = scmp.ne.s32.totalorder %s42, %s45
    %p54 = scmp.eq.s32.totalorder %s16, 1
    %p55 = por %p53, %p54
    %p56 = scmp.ne.s32.totalorder %s45, %s46
    %p57 = scmp.eq.s32.totalorder %s16, 0
    %p58 = por %p56, %p57
    %p59 = scmp.ne.s32.totalorder %s45, %s46
    %p60 = scmp.eq.s32.totalorder %s17, 1
    %p61 = por %p59, %p60
    %p63 = scmp.ne.s32.totalorder %s46, %s62
    %p64 = scmp.eq.s32.totalorder %s17, 0
    %p65 = por %p63, %p64
    %s67 = sadd.s32 %s66, 1
    %p70 = scmp.eq.s32.totalorder %s11, 1
    %p71 = scmp.ne.s32.totalorder %s66, %s68
    %p72 = scmp.eq.s32.totalorder %s11, 0
    %p73 = por %p71, %p72
    %p74 = scmp.ne.s32.totalorder %s66, %s68
    %p75 = scmp.eq.s32.totalorder %s16, 1
    %p76 = por %p74, %p75
    %p77 = scmp.ne.s32.totalorder %s68, %s69
    %p78 = scmp.eq.s32.totalorder %s16, 0
    %p79 = por %p77, %p78
    %p80 = scmp.ne.s32.totalorder %s68, %s69
    %p81 = scmp.eq.s32.totalorder %s17, 1
    %p82 = por %p80, %p81
    %p84 = scmp.ne.s32.totalorder %s69, %s83
    %p85 = scmp.eq.s32.totalorder %s17, 0
    %p86 = por %p84, %p85
    %s87 = ssub.s32 %s11, %s18
    %p88 = scmp.eq.s32.totalorder %s87, 0
    %s90 = sadd.s32 %s89, 1
    %s91 = scalar_select %p88, %s89, %s90
    %p94 = pneg %p88
    %p95 = scmp.eq.s32.totalorder %s11, 1
    %p96 = por %p94, %p95
    %p97 = scmp.ne.s32.totalorder %s89, %s92
    %p98 = scmp.eq.s32.totalorder %s11, 0
    %p99 = por %p97, %p98
    %p100 = scmp.ne.s32.totalorder %s89, %s92
    %p101 = scmp.eq.s32.totalorder %s16, 1
    %p102 = por %p100, %p101
    %p103 = scmp.ne.s32.totalorder %s92, %s93
    %p104 = scmp.eq.s32.totalorder %s16, 0
    %p105 = por %p103, %p104
    %p106 = scmp.ne.s32.totalorder %s92, %s93
    %p107 = scmp.eq.s32.totalorder %s17, 1
    %p108 = por %p106, %p107
    %p110 = scmp.ne.s32.totalorder %s93, %s109
    %p111 = scmp.eq.s32.totalorder %s17, 0
    %p112 = por %p110, %p111
    %s114 = sadd.s32 %s113, 1
    %p117 = scmp.eq.s32.totalorder %s11, 1
    %p118 = scmp.ne.s32.totalorder %s113, %s115
    %p119 = scmp.eq.s32.totalorder %s11, 0
    %p120 = por %p118, %p119
    %p121 = scmp.ne.s32.totalorder %s113, %s115
    %p122 = scmp.eq.s32.totalorder %s16, 1
    %p123 = por %p121, %p122
    %p124 = scmp.ne.s32.totalorder %s115, %s116
    %p125 = scmp.eq.s32.totalorder %s16, 0
    %p126 = por %p124, %p125
    %p127 = scmp.ne.s32.totalorder %s115, %s116
    %p128 = scmp.eq.s32.totalorder %s17, 1
    %p129 = por %p127, %p128
    %p131 = scmp.ne.s32.totalorder %s116, %s130
    %p132 = scmp.eq.s32.totalorder %s17, 0
    %p133 = por %p131, %p132
    %s134 = ssub.s32 %s11, %s18
    %p135 = scmp.eq.s32.totalorder %s134, 0
    %s137 = sadd.s32 %s136, 1
    %s138 = scalar_select %p135, %s136, %s137
    %p141 = pneg %p135
    %p142 = scmp.eq.s32.totalorder %s11, 1
    %p143 = por %p141, %p142
    %p144 = scmp.ne.s32.totalorder %s136, %s139
    %p145 = scmp.eq.s32.totalorder %s11, 0
    %p146 = por %p144, %p145
    %p147 = scmp.ne.s32.totalorder %s136, %s139
    %p148 = scmp.eq.s32.totalorder %s16, 1
    %p149 = por %p147, %p148
    %p150 = scmp.ne.s32.totalorder %s139, %s140
    %p151 = scmp.eq.s32.totalorder %s16, 0
    %p152 = por %p150, %p151
    %p153 = scmp.ne.s32.totalorder %s139, %s140
    %p154 = scmp.eq.s32.totalorder %s17, 1
    %p155 = por %p153, %p154
    %p157 = scmp.ne.s32.totalorder %s140, %s156
    %p158 = scmp.eq.s32.totalorder %s17, 0
    %p159 = por %p157, %p158
    %p160 = scmp.le.s32.totalorder 1, %s11
    %p161 = scmp.lt.s32.totalorder %s11, 3
    %p162 = pnand %p160, %p161
    %p163 = pneg %p162
    // Predicated region
    $region9: #{ffm_forward.20} parent=5 // pred_check
      _
    $region10: #{ffm_forward.20} parent=5 // pred_check_branch
      %165 = sbr.rel (%p162) target = $region12
    $region11: #{ffm_forward.20} parent=5 // pred_region
      %s166 = ssub.s32 %s11, 1
      // Predicated region
      $region13: #{ffm_forward.20} parent=11 // pred_check
        %p167 = pneg %p32
      $region14: #{ffm_forward.20} parent=11 // pred_check_branch
        %169 = sbr.rel (%p167) target = $region16
      $region15: #{ffm_forward.20} parent=11 // pred_region
        _
      $region16: #{ffm_forward.20} parent=11 // pred_fallthru
        _
      // Predicated region
      $region17: #{ffm_forward.20} parent=11 // pred_check
        %p170 = pneg %p79
      $region18: #{ffm_forward.20} parent=11 // pred_check_branch
        %172 = sbr.rel (%p170) target = $region20
      $region19: #{ffm_forward.20} parent=11 // pred_region
        _
      $region20: #{ffm_forward.20} parent=11 // pred_fallthru
        _
      // Predicated region
      $region21: #{ffm_forward.20} parent=11 // pred_check
        %p173 = pneg %p126
      $region22: #{ffm_forward.20} parent=11 // pred_check_branch
        %175 = sbr.rel (%p173) target = $region24
      $region23: #{ffm_forward.20} parent=11 // pred_region
        _
      $region24: #{ffm_forward.20} parent=11 // pred_fallthru
        _
    $region12: #{ffm_forward.20} parent=5 // pred_fallthru
      _
    %p176 = scmp.lt.s32.totalorder %s11, 2
    // Predicated region
    $region25: #{ffm_forward.20} parent=5 // pred_check
      %p177 = pneg %p176
    $region26: #{ffm_forward.20} parent=5 // pred_check_branch
      %179 = sbr.rel (%p177) target = $region28
    $region27: #{ffm_forward.20} parent=5 // pred_region
      // Predicated region
      $region29: #{ffm_forward.20} parent=27 // pred_check
        %p180 = pneg %p52
      $region30: #{ffm_forward.20} parent=27 // pred_check_branch
        %182 = sbr.rel (%p180) target = $region32
      $region31: #{ffm_forward.20} parent=27 // pred_region
        %s183 = smul.u32 2, %s11
        %p184 = scmp.lt.s32.totalorder %s183, 3
        %s185 = scalar_select %p184, %s183, 3
        %s186 = smul.addr %s185, 4
        %s187 = scalar_lea.vmem %s1, %s186
        %s188 = smul.u32 2, %s11
      $region32: #{ffm_forward.20} parent=27 // pred_fallthru
        _
      // Predicated region
      $region33: #{ffm_forward.20} parent=27 // pred_check
        %p189 = pneg %p99
      $region34: #{ffm_forward.20} parent=27 // pred_check_branch
        %191 = sbr.rel (%p189) target = $region36
      $region35: #{ffm_forward.20} parent=27 // pred_region
        %s192 = smul.u32 2, %s11
        %p193 = scmp.lt.s32.totalorder %s192, 3
        %s194 = scalar_select %p193, %s192, 3
        %s195 = smul.addr %s194, 4
        %s196 = scalar_lea.vmem %s3, %s195
        %s197 = smul.u32 2, %s11
      $region36: #{ffm_forward.20} parent=27 // pred_fallthru
        _
    $region28: #{ffm_forward.20} parent=5 // pred_fallthru
      _
    %p198 = scmp.le.s32.totalorder 1, %s11
    %p199 = scmp.lt.s32.totalorder %s11, 3
    %p200 = pnand %p198, %p199
    %p201 = pneg %p200
    // Predicated region
    $region37: #{ffm_forward.20} parent=5 // pred_check
      _
    $region38: #{ffm_forward.20} parent=5 // pred_check_branch
      %203 = sbr.rel (%p200) target = $region40
    $region39: #{ffm_forward.20} parent=5 // pred_region
      %s204 = ssub.s32 %s11, 1
      %p205 = pneg %p32
      %p206 = pneg %p29
      %s207 = smul.u32 2, %s16
      %p208 = scmp.lt.s32.totalorder %s207, 3
      %s209 = scalar_select %p208, %s207, 3
      %s210 = smul.addr %s209, 4
      %s211 = scalar_lea.vmem %s1, %s210
      %p212 = pneg %p58
      %p213 = pneg %p55
      %p214 = pneg %p79
      %p215 = pneg %p76
      %s216 = smul.u32 2, %s16
      %p217 = scmp.lt.s32.totalorder %s216, 3
      %s218 = scalar_select %p217, %s216, 3
      %s219 = smul.addr %s218, 4
      %s220 = scalar_lea.vmem %s3, %s219
      %p221 = pneg %p105
      %p222 = pneg %p102
      %p223 = pneg %p126
      %p224 = pneg %p123
      %p225 = pneg %p152
      %p226 = pneg %p149
      %s227 = smul.u32 2, %s16
      %p228 = scmp.lt.s32.totalorder %s227, 3
      %s229 = scalar_select %p228, %s227, 3
      %s230 = smul.addr %s229, 4
      %s231 = scalar_lea.vmem %s5, %s230
      %s232 = smul.u32 2, %s16
      %p233 = scmp.lt.s32.totalorder %s232, 3
      %s234 = scalar_select %p233, %s232, 3
      %s235 = smul.addr %s234, 4
      %s236 = scalar_lea.vmem %s1, %s235
      %s237 = smul.u32 2, %s16
      %s238 = smul.u32 2, %s16
      %p239 = scmp.lt.s32.totalorder %s238, 3
      %s240 = scalar_select %p239, %s238, 3
      %s241 = smul.addr %s240, 4
      %s242 = scalar_lea.vmem %s3, %s241
      %s243 = smul.u32 2, %s16
      %s244 = smul.u32 2, %s16
      %p245 = scmp.lt.s32.totalorder %s244, 3
      %s246 = scalar_select %p245, %s244, 3
      %s247 = smul.addr %s246, 4
      %s248 = scalar_lea.vmem %s5, %s247
      %s249 = smul.u32 2, %s16
      %v250 = vld [vmem:[%s0] sm:$0xf]
      %v251 = vld [vmem:[%s236] sm:$0xff]
      %v252 = vld [vmem:[%s2] sm:$0xf]
      %v253 = vld [vmem:[%s242] sm:$0xff]
      %v255 = vcombine.high %v253, %v253
      %vm256 = vcmask 31744
      %v258 = vsel %vm256, %v252, 0
      %vm260 = vcmask 1043456
      %v261 = vsel %vm260, %v253, 0
      %v263 = vsel %vm260, %v255, 0
      %265 = vmatprep.subr.mxu0 0.0
      %266 = vmatpush1.msra.mxu0 0.0
      %267 = vmatprep.subr.mxu0 0.0
      %268 = vmatpush1.msra.mxu0 0.0
      %269 = vmatprep.subr.mxu0 0.0
      %270 = vmatpush1.msra.mxu0 0.0
      %271 = vmatprep.subr.mxu0 0.0
      %272 = vmatpush1.msra.mxu0 0.0
      %273 = vmatprep.subr.mxu0 0.0
      %274 = vmatpush1.msra.mxu0 0.0
      %275 = vmatprep.subr.mxu0 0.0
      %276 = vmatpush1.msra.mxu0 0.0
      %277 = vmatprep.subr.mxu0 0.0
      %278 = vmatpush1.msra.mxu0 0.0
      %279 = vmatprep.subr.mxu0 0.0
      %280 = vmatpush1.msra.mxu0 0.0
      %281 = vmatprep.subr.mxu0 0.0
      %282 = vmatpush1.msra.mxu0 0.0
      %283 = vmatprep.subr.mxu0 0.0
      %284 = vmatpush1.msra.mxu0 0.0
      %285 = vmatprep.subr.mxu0 0.0
      %286 = vmatpush1.msra.mxu0 0.0
      %287 = vmatprep.subr.mxu0 0.0
      %288 = vmatpush1.msra.mxu0 0.0
      %289 = vmatprep.subr.mxu0 0.0
      %290 = vmatpush1.msra.mxu0 0.0
      %291 = vmatprep.subr.mxu0 0.0
      %292 = vmatpush1.msra.mxu0 0.0
      %293 = vmatprep.subr.mxu0 0.0
      %294 = vmatpush1.msra.mxu0 0.0
      %295 = vmatprep.subr.mxu0 %v263
      %296 = vmatpush1.msra.mxu0 %v261
      %297 = vmatprep.subr.mxu0 0.0
      %298 = vmatpush2.msra.mxu0 0.0
      %299 = vmatprep.subr.mxu0 0.0
      %300 = vmatpush2.msra.mxu0 0.0
      %301 = vmatprep.subr.mxu0 0.0
      %302 = vmatpush2.msra.mxu0 0.0
      %303 = vmatprep.subr.mxu0 0.0
      %304 = vmatpush2.msra.mxu0 0.0
      %305 = vmatprep.subr.mxu0 0.0
      %306 = vmatpush2.msra.mxu0 0.0
      %307 = vmatprep.subr.mxu0 0.0
      %308 = vmatpush2.msra.mxu0 0.0
      %309 = vmatprep.subr.mxu0 0.0
      %310 = vmatpush2.msra.mxu0 0.0
      %311 = vmatprep.subr.mxu0 0.0
      %312 = vmatpush2.msra.mxu0 0.0
      %313 = vmatprep.subr.mxu0 0.0
      %314 = vmatpush2.msra.mxu0 0.0
      %315 = vmatprep.subr.mxu0 0.0
      %316 = vmatpush2.msra.mxu0 0.0
      %317 = vmatprep.subr.mxu0 0.0
      %318 = vmatpush2.msra.mxu0 0.0
      %319 = vmatprep.subr.mxu0 0.0
      %320 = vmatpush2.msra.mxu0 0.0
      %321 = vmatprep.subr.mxu0 0.0
      %322 = vmatpush2.msra.mxu0 0.0
      %323 = vmatprep.subr.mxu0 0.0
      %324 = vmatpush2.msra.mxu0 0.0
      %325 = vmatprep.subr.mxu0 0.0
      %326 = vmatpush2.msra.mxu0 0.0
      %327 = vmatprep.subr.mxu0 0.0
      %328 = vmatpush2.msra.mxu0 0.0
      %329 = vmatprep.mubr.f32.mxu0 0.0
      %330 = vmatmul.mubr.f32.gmra.mxu0 %v258
      %v331 = vpop.f32.mrf.mxu0
      %v332 = vadd.f32 0.0, %v331
      %v333 = vpop.f32.mrf.mxu0
      %v334 = vadd.f32 0.0, %v333
      %335 = vdwg.mxu0
      %v337 = vcombine.high %v251, %v251
      %v339 = vsel %vm256, %v250, 0
      %v341 = vsel %vm260, %v251, 0
      %v343 = vsel %vm260, %v337, 0
      %345 = vmatprep.subr.mxu0 0.0
      %346 = vmatpush1.msra.mxu0 0.0
      %347 = vmatprep.subr.mxu0 0.0
      %348 = vmatpush1.msra.mxu0 0.0
      %349 = vmatprep.subr.mxu0 0.0
      %350 = vmatpush1.msra.mxu0 0.0
      %351 = vmatprep.subr.mxu0 0.0
      %352 = vmatpush1.msra.mxu0 0.0
      %353 = vmatprep.subr.mxu0 0.0
      %354 = vmatpush1.msra.mxu0 0.0
      %355 = vmatprep.subr.mxu0 0.0
      %356 = vmatpush1.msra.mxu0 0.0
      %357 = vmatprep.subr.mxu0 0.0
      %358 = vmatpush1.msra.mxu0 0.0
      %359 = vmatprep.subr.mxu0 0.0
      %360 = vmatpush1.msra.mxu0 0.0
      %361 = vmatprep.subr.mxu0 0.0
      %362 = vmatpush1.msra.mxu0 0.0
      %363 = vmatprep.subr.mxu0 0.0
      %364 = vmatpush1.msra.mxu0 0.0
      %365 = vmatprep.subr.mxu0 0.0
      %366 = vmatpush1.msra.mxu0 0.0
      %367 = vmatprep.subr.mxu0 0.0
      %368 = vmatpush1.msra.mxu0 0.0
      %369 = vmatprep.subr.mxu0 0.0
      %370 = vmatpush1.msra.mxu0 0.0
      %371 = vmatprep.subr.mxu0 0.0
      %372 = vmatpush1.msra.mxu0 0.0
      %373 = vmatprep.subr.mxu0 0.0
      %374 = vmatpush1.msra.mxu0 0.0
      %375 = vmatprep.subr.mxu0 %v343
      %376 = vmatpush1.msra.mxu0 %v341
      %377 = vmatprep.subr.mxu0 0.0
      %378 = vmatpush2.msra.mxu0 0.0
      %379 = vmatprep.subr.mxu0 0.0
      %380 = vmatpush2.msra.mxu0 0.0
      %381 = vmatprep.subr.mxu0 0.0
      %382 = vmatpush2.msra.mxu0 0.0
      %383 = vmatprep.subr.mxu0 0.0
      %384 = vmatpush2.msra.mxu0 0.0
      %385 = vmatprep.subr.mxu0 0.0
      %386 = vmatpush2.msra.mxu0 0.0
      %387 = vmatprep.subr.mxu0 0.0
      %388 = vmatpush2.msra.mxu0 0.0
      %389 = vmatprep.subr.mxu0 0.0
      %390 = vmatpush2.msra.mxu0 0.0
      %391 = vmatprep.subr.mxu0 0.0
      %392 = vmatpush2.msra.mxu0 0.0
      %393 = vmatprep.subr.mxu0 0.0
      %394 = vmatpush2.msra.mxu0 0.0
      %395 = vmatprep.subr.mxu0 0.0
      %396 = vmatpush2.msra.mxu0 0.0
      %397 = vmatprep.subr.mxu0 0.0
      %398 = vmatpush2.msra.mxu0 0.0
      %399 = vmatprep.subr.mxu0 0.0
      %400 = vmatpush2.msra.mxu0 0.0
      %401 = vmatprep.subr.mxu0 0.0
      %402 = vmatpush2.msra.mxu0 0.0
      %403 = vmatprep.subr.mxu0 0.0
      %404 = vmatpush2.msra.mxu0 0.0
      %405 = vmatprep.subr.mxu0 0.0
      %406 = vmatpush2.msra.mxu0 0.0
      %407 = vmatprep.subr.mxu0 0.0
      %408 = vmatpush2.msra.mxu0 0.0
      %409 = vmatprep.mubr.f32.mxu0 0.0
      %410 = vmatmul.mubr.f32.gmra.mxu0 %v339
      %v411 = vpop.f32.mrf.mxu0
      %v412 = vadd.f32 %v332, %v411
      %v413 = vpop.f32.mrf.mxu0
      %v414 = vadd.f32 %v334, %v413
      %415 = vdwg.mxu0
      %v416 = vld [vmem:[%s4] sm:$0xf]
      %418 = vset.pattern.permute.xlu0 0
      %419 = vperm.xlu0 %418, %v416
      %v420 = vpop.permute.xlu0 %419
      %v422 = vadd.f32 %v412, %v420
      %v423 = vadd.f32 %v414, %v420
      %v426 = vcombine.low %v422, %v423
      %428 = vst [vmem:[%s248] sm:$0xff] %v426
      %s429 = smul.u32 2, %s16
      %p430 = scmp.lt.s32.totalorder %s429, 3
      %s431 = scalar_select %p430, %s429, 3
      %s432 = smul.addr %s431, 4
      %s433 = scalar_lea.vmem %s5, %s432
      // Predicated region
      $region41: #{ffm_forward.20} parent=39 // pred_check
        %p434 = pneg %p149
      $region42: #{ffm_forward.20} parent=39 // pred_check_branch
        %436 = sbr.rel (%p434) target = $region44
      $region43: #{ffm_forward.20} parent=39 // pred_region
        %s437 = smul.u32 2, %s16
      $region44: #{ffm_forward.20} parent=39 // pred_fallthru
        _
    $region40: #{ffm_forward.20} parent=5 // pred_fallthru
      _
    %p438 = scmp.le.s32.totalorder 2, %s11
    // Predicated region
    $region45: #{ffm_forward.20} parent=5 // pred_check
      %p439 = pneg %p438
    $region46: #{ffm_forward.20} parent=5 // pred_check_branch
      %441 = sbr.rel (%p439) target = $region48
    $region47: #{ffm_forward.20} parent=5 // pred_region
      %s442 = ssub.s32 %s11, 2
      // Predicated region
      $region49: #{ffm_forward.20} parent=47 // pred_check
        %p443 = pneg %p155
      $region50: #{ffm_forward.20} parent=47 // pred_check_branch
        %445 = sbr.rel (%p443) target = $region52
      $region51: #{ffm_forward.20} parent=47 // pred_region
        %s446 = smul.u32 2, %s17
        %p447 = scmp.lt.s32.totalorder %s446, 3
        %s448 = scalar_select %p447, %s446, 3
        %s449 = smul.addr %s448, 4
        %s450 = scalar_lea.vmem %s5, %s449
      $region52: #{ffm_forward.20} parent=47 // pred_fallthru
        _
    $region48: #{ffm_forward.20} parent=5 // pred_fallthru
      _
  $region6: #{ffm_forward.20} parent=0 // loop_footer
    %s15 = sadd.s32 1, %s11
  $region7: #{ffm_forward.20} parent=0 // loop_footer_branch
    %10 = sbr.rel target = $region3
  $region8: #{ffm_forward.20} parent=0 // loop_exit
    _

</llo_original>
